<compile_context>
chip_gen: v6e
topology: v6e:2x2x1
jax: 0.10.0
libtpu: 0.0.40
codegen_flags: <defaults>
</compile_context>

<pallas_src>
import jax
import jax.numpy as jnp
import numpy as np
from jax.experimental import pallas as pl
from jax.experimental.pallas import tpu as pltpu

_RELU, _LEAKY, _IDENT = 0, 1, 2
_LEAKY_SLOPE = 0.01          # PyTorch nn.LeakyReLU default negative_slope
_LANE = 128                  # all feature widths padded to a multiple of this
TARGET_TILE_N = 256          # max batch rows per grid step


def _round_up(x, m):
    return ((x + m - 1) // m) * m


def _choose_tile_n(n_rows, target=TARGET_TILE_N):
    """Rows per grid step: multiple of 8 (sublane), capped at `target`, and
    >= 2 grid steps when possible so v7x megacore can shard the batch."""
    if n_rows <= 8:
        return 8
    half = -(-n_rows // 2)                       # ceil(n/2)
    return max(8, min(target, _round_up(half, 8)))


# ----------------------------- Pallas kernel -------------------------------------

def _make_chain_kernel(num_layers, acts, compute_dtype):
    """kernel(x_ref, w_ref, b_ref, out_ref): fully fused matmul chain."""

    def kernel(x_ref, w_ref, b_ref, out_ref):
        h = x_ref[...]                                        # (tile, W) compute_dtype
        for l in range(num_layers):                           # statically unrolled
            z = jnp.dot(h, w_ref[l], preferred_element_type=jnp.float32)
            z = z + b_ref[l].astype(jnp.float32)              # (1, W) broadcast, f32
            act = acts[l]
            if act == _RELU:
                z = jnp.maximum(z, 0.0)
            elif act == _LEAKY:
                z = jnp.maximum(z, _LEAKY_SLOPE * z)          # activation math in f32
            # _IDENT: no activation
            h = z if l == num_layers - 1 else z.astype(compute_dtype)
        out_ref[...] = h.astype(out_ref.dtype)

    return kernel


def ann_cnn10_forward(x_nchw, wstack, bstack, acts, out_dim,
                      compute_dtype=jnp.float32):
    """x_nchw: (N, idim, S, S) float32.  wstack: (L, W, W), bstack: (L, 1, W).
    Returns (N, out_dim) float32 == torch forward (eval mode)."""
    N, C, S, _ = x_nchw.shape
    L, W, _ = wstack.shape
    x_flat = x_nchw.reshape(N, C * S * S).astype(compute_dtype)
    k0 = x_flat.shape[1]
    assert k0 <= W

    tile_n = _choose_tile_n(N)
    n_pad = _round_up(N, tile_n)
    x_flat = jnp.pad(x_flat, ((0, n_pad - N), (0, W - k0)))   # lane-dense input

    out = pl.pallas_call(
        _make_chain_kernel(L, tuple(int(a) for a in acts), compute_dtype),
        out_shape=jax.ShapeDtypeStruct((n_pad, W), jnp.float32),
        grid_spec=pltpu.PrefetchScalarGridSpec(
            num_scalar_prefetch=0,
            grid=(n_pad // tile_n,),
            in_specs=[
                pl.BlockSpec((tile_n, W), lambda i: (i, 0)),     # batch row tile
                pl.BlockSpec((L, W, W), lambda i: (0, 0, 0)),    # all weights, resident
                pl.BlockSpec((L, 1, W), lambda i: (0, 0, 0)),    # all biases, resident
            ],
            out_specs=pl.BlockSpec((tile_n, W), lambda i: (i, 0)),
        ),
        compiler_params=pltpu.CompilerParams(
            dimension_semantics=("parallel",)),
    )(x_flat, wstack, bstack)
    return out[:N, :out_dim]


# --------------------------- parameter preparation --------------------------------

def _expand_valid_conv(w_oihw, b, s_in):
    """Exact im2col-on-weights expansion of a stride-1, padding-0 conv applied to
    an (s_in, s_in) input.  Returns W_big (Cin*S*S, Cout*Ho*Wo), b_big, Ho."""
    w = np.asarray(w_oihw, np.float32)
    cout, cin, kh, kw = w.shape
    ho, wo = s_in - kh + 1, s_in - kw + 1
    big = np.zeros((cin * s_in * s_in, cout * ho * wo), np.float32)
    for co in range(cout):
        for ci in range(cin):
            for ph in range(ho):
                for pw in range(wo):
                    for dh in range(kh):
                        for dw in range(kw):
                            big[ci * s_in * s_in + (ph + dh) * s_in + (pw + dw),
                                co * ho * wo + ph * wo + pw] = w[co, ci, dh, dw]
    b_big = np.repeat(np.asarray(b, np.float32), ho * wo)
    return big, b_big, ho


def build_stacked_layers(params, stencil, compute_dtype=jnp.float32):
    """Fold convs + linears into one stacked, lane-dense (L, W, W)/(L, 1, W) chain."""
    fac = int(np.floor(0.5 * stencil))
    raw = []
    s = stencil
    if fac in (1, 3):                         # one conv (3x3 for fac=1, stencil for fac=3)
        wb, bb, s = _expand_valid_conv(params["conv1_w"], params["conv1_b"], s)
        raw.append((wb, bb, _RELU))
    elif fac == 2:                            # two 3x3 convs
        wb, bb, s = _expand_valid_conv(params["conv1_w"], params["conv1_b"], s)
        raw.append((wb, bb, _RELU))
        wb, bb, s = _expand_valid_conv(params["conv2_w"], params["conv2_b"], s)
        raw.append((wb, bb, _RELU))
    assert s == 1, "input spatial must be stencil x stencil so squeeze() -> (N, idim)"

    names = [f"layer{i}" for i in range(1, 11)] + ["output"]
    for n in names:
        w = np.asarray(params[n + "_w"], np.float32).T        # torch (out,in) -> (in,out)
        b = np.asarray(params[n + "_b"], np.float32).reshape(-1)
        raw.append((w, b, _IDENT if n == "output" else _LEAKY))

    widths = [w.shape[0] for w, _, _ in raw] + [w.shape[1] for w, _, _ in raw]
    W = max(_round_up(d, _LANE) for d in widths)              # common lane-dense width
    L = len(raw)
    wstack = np.zeros((L, W, W), np.float32)
    bstack = np.zeros((L, 1, W), np.float32)
    for l, (w, b, _) in enumerate(raw):
        wstack[l, :w.shape[0], :w.shape[1]] = w
        bstack[l, 0, :b.shape[0]] = b
    acts = tuple(int(a) for _, _, a in raw)
    out_dim = raw[-1][0].shape[1]
    return (jnp.asarray(wstack, compute_dtype),               # weights in compute dtype
            jnp.asarray(bstack, jnp.float32),                 # bias added in f32
            acts, out_dim)


# ------------------------------ pure-JAX reference ---------------------------------

def reference_forward(x, params, stencil):
    fac = int(np.floor(0.5 * stencil))
    hi = jax.lax.Precision.HIGHEST

    def conv_relu(h, w, b):
        y = jax.lax.conv_general_dilated(
            h, w, window_strides=(1, 1), padding="VALID",
            dimension_numbers=("NCHW", "OIHW", "NCHW"), precision=hi)
        return jnp.maximum(y + b[None, :, None, None], 0.0)

    h = x
    if fac in (1, 3):
        h = conv_relu(h, params["conv1_w"], params["conv1_b"])
    elif fac == 2:
        h = conv_relu(h, params["conv1_w"], params["conv1_b"])
        h = conv_relu(h, params["conv2_w"], params["conv2_b"])
    h = h.reshape(h.shape[0], -1)             # torch.squeeze on (N, idim, 1, 1)

    def leaky(z):
        return jnp.maximum(z, _LEAKY_SLOPE * z)

    for i in range(1, 11):
        w, b = params[f"layer{i}_w"], params[f"layer{i}_b"]
        h = leaky(jnp.dot(h, w.T, precision=hi) + b)
    w, b = params["output_w"], params["output_b"]
    return jnp.dot(h, w.T, precision=hi) + b


# ------------------------------------- demo ----------------------------------------

if __name__ == "__main__":
    key = jax.random.PRNGKey(0)
    # stencil=5 -> fac=2 path: two 3x3 padding=0 convs, then 10 Linear+LeakyReLU, output.
    N, idim, odim, hdim, stencil = 256, 4, 8, 128, 5
    S = stencil

    kit = iter(jax.random.split(key, 32))

    def rnd(shape, scale):
        return scale * jax.random.normal(next(kit), shape, jnp.float32)

    x = jax.random.normal(next(kit), (N, idim, S, S), jnp.float32)

    params = {
        "conv1_w": rnd((idim, idim, 3, 3), 0.3), "conv1_b": rnd((idim,), 0.1),
        "conv2_w": rnd((idim, idim, 3, 3), 0.3), "conv2_b": rnd((idim,), 0.1),
    }
    lin_dims = ([("layer1", idim, hdim)]
                + [(f"layer{i}", hdim, hdim) for i in range(2, 10)]
                + [("layer10", hdim, 2 * odim), ("output", 2 * odim, odim)])
    for name, din, dout in lin_dims:
        params[name + "_w"] = rnd((dout, din), 1.0 / np.sqrt(din))
        params[name + "_b"] = rnd((dout,), 0.1)

    ref = jax.block_until_ready(reference_forward(x, params, stencil))

    # f32 weights/activations (exact path; tolerance covers default MXU precision
    # in-kernel vs. Precision.HIGHEST in the reference, per review note).
    w32, b32, acts, out_dim = build_stacked_layers(params, stencil, jnp.float32)
    out32 = jax.block_until_ready(
        ann_cnn10_forward(x, w32, b32, acts, out_dim, jnp.float32))
    assert out32.shape == (N, odim)
    np.testing.assert_allclose(np.asarray(out32), np.asarray(ref),
                               rtol=2e-2, atol=2e-2)

    # bf16 weights/activations (v6e/v7x recommendation): f32 accumulation and f32
    # activation math keep it v5e-safe; looser tolerance by construction.
    wbf, bbf, acts_bf, _ = build_stacked_layers(params, stencil, jnp.bfloat16)
    outbf = jax.block_until_ready(
        ann_cnn10_forward(x, wbf, bbf, acts_bf, out_dim, jnp.bfloat16))
    np.testing.assert_allclose(np.asarray(outbf), np.asarray(ref),
                               rtol=1e-1, atol=5e-2)

    print("KERNEL_OK")
</pallas_src>

<mosaic_0001>
module attributes {stable_mosaic.version = 11 : i64} {
  func.func @kernel(%arg0: i32, %arg1: memref<128x128xf32, #tpu.memory_space<vmem>>, %arg2: memref<13x128x128xf32, #tpu.memory_space<vmem>>, %arg3: memref<13x1x128xf32, #tpu.memory_space<vmem>>, %arg4: memref<128x128xf32, #tpu.memory_space<vmem>>) attributes {dimension_semantics = [#tpu.dimension_semantics<parallel>], iteration_bounds = array<i64: 2>, scalar_prefetch = 0 : i64, scratch_operands = 0 : i64, tpu.core_type = #tpu.core_type<tc>, window_params = [{transform_indices = @transform_0, window_bounds = array<i64: 128, 128>}, {pipeline_mode = #tpu.pipeline_mode<synchronous>, transform_indices = @transform_1, window_bounds = array<i64: 13, 128, 128>}, {pipeline_mode = #tpu.pipeline_mode<synchronous>, transform_indices = @transform_2, window_bounds = array<i64: 13, 1, 128>}, {transform_indices = @transform_3, window_bounds = array<i64: 128, 128>}]} {
    %c0 = arith.constant 0 : index
    %c0_0 = arith.constant 0 : index
    %0 = vector.load %arg1[%c0, %c0_0] : memref<128x128xf32, #tpu.memory_space<vmem>>, vector<128x128xf32>
    %c0_1 = arith.constant 0 : index
    %c0_2 = arith.constant 0 : index
    %c0_3 = arith.constant 0 : index
    %1 = vector.load %arg2[%c0_1, %c0_2, %c0_3] : memref<13x128x128xf32, #tpu.memory_space<vmem>>, vector<1x128x128xf32>
    %2 = vector.shape_cast %1 : vector<1x128x128xf32> to vector<128x128xf32>
    %cst = arith.constant dense<0.000000e+00> : vector<128x128xf32>
    %3 = tpu.matmul %0, %2, %cst {dimension_numbers = #tpu.dot_dimension_numbers<[1], [0], [0], [1], [0, 0, 1, 1], [], []>} : vector<128x128xf32>, vector<128x128xf32>, vector<128x128xf32> -> vector<128x128xf32>
    %c0_4 = arith.constant 0 : index
    %c0_5 = arith.constant 0 : index
    %c0_6 = arith.constant 0 : index
    %4 = vector.load %arg3[%c0_4, %c0_5, %c0_6] : memref<13x1x128xf32, #tpu.memory_space<vmem>>, vector<1x1x128xf32>
    %5 = vector.shape_cast %4 : vector<1x1x128xf32> to vector<1x128xf32>
    %6 = vector.broadcast %5 : vector<1x128xf32> to vector<128x128xf32>
    %7 = arith.addf %3, %6 : vector<128x128xf32>
    %cst_7 = arith.constant 0.000000e+00 : f32
    %8 = vector.broadcast %cst_7 : f32 to vector<128x128xf32>
    %9 = arith.maximumf %7, %8 : vector<128x128xf32>
    %c1 = arith.constant 1 : index
    %c0_8 = arith.constant 0 : index
    %c0_9 = arith.constant 0 : index
    %10 = vector.load %arg2[%c1, %c0_8, %c0_9] : memref<13x128x128xf32, #tpu.memory_space<vmem>>, vector<1x128x128xf32>
    %11 = vector.shape_cast %10 : vector<1x128x128xf32> to vector<128x128xf32>
    %cst_10 = arith.constant dense<0.000000e+00> : vector<128x128xf32>
    %12 = tpu.matmul %9, %11, %cst_10 {dimension_numbers = #tpu.dot_dimension_numbers<[1], [0], [0], [1], [0, 0, 1, 1], [], []>} : vector<128x128xf32>, vector<128x128xf32>, vector<128x128xf32> -> vector<128x128xf32>
    %c1_11 = arith.constant 1 : index
    %c0_12 = arith.constant 0 : index
    %c0_13 = arith.constant 0 : index
    %13 = vector.load %arg3[%c1_11, %c0_12, %c0_13] : memref<13x1x128xf32, #tpu.memory_space<vmem>>, vector<1x1x128xf32>
    %14 = vector.shape_cast %13 : vector<1x1x128xf32> to vector<1x128xf32>
    %15 = vector.broadcast %14 : vector<1x128xf32> to vector<128x128xf32>
    %16 = arith.addf %12, %15 : vector<128x128xf32>
    %cst_14 = arith.constant 0.000000e+00 : f32
    %17 = vector.broadcast %cst_14 : f32 to vector<128x128xf32>
    %18 = arith.maximumf %16, %17 : vector<128x128xf32>
    %c2 = arith.constant 2 : index
    %c0_15 = arith.constant 0 : index
    %c0_16 = arith.constant 0 : index
    %19 = vector.load %arg2[%c2, %c0_15, %c0_16] : memref<13x128x128xf32, #tpu.memory_space<vmem>>, vector<1x128x128xf32>
    %20 = vector.shape_cast %19 : vector<1x128x128xf32> to vector<128x128xf32>
    %cst_17 = arith.constant dense<0.000000e+00> : vector<128x128xf32>
    %21 = tpu.matmul %18, %20, %cst_17 {dimension_numbers = #tpu.dot_dimension_numbers<[1], [0], [0], [1], [0, 0, 1, 1], [], []>} : vector<128x128xf32>, vector<128x128xf32>, vector<128x128xf32> -> vector<128x128xf32>
    %c2_18 = arith.constant 2 : index
    %c0_19 = arith.constant 0 : index
    %c0_20 = arith.constant 0 : index
    %22 = vector.load %arg3[%c2_18, %c0_19, %c0_20] : memref<13x1x128xf32, #tpu.memory_space<vmem>>, vector<1x1x128xf32>
    %23 = vector.shape_cast %22 : vector<1x1x128xf32> to vector<1x128xf32>
    %24 = vector.broadcast %23 : vector<1x128xf32> to vector<128x128xf32>
    %25 = arith.addf %21, %24 : vector<128x128xf32>
    %cst_21 = arith.constant 0.00999999977 : f32
    %26 = vector.broadcast %cst_21 : f32 to vector<128x128xf32>
    %27 = arith.mulf %26, %25 : vector<128x128xf32>
    %28 = arith.maximumf %25, %27 : vector<128x128xf32>
    %c3 = arith.constant 3 : index
    %c0_22 = arith.constant 0 : index
    %c0_23 = arith.constant 0 : index
    %29 = vector.load %arg2[%c3, %c0_22, %c0_23] : memref<13x128x128xf32, #tpu.memory_space<vmem>>, vector<1x128x128xf32>
    %30 = vector.shape_cast %29 : vector<1x128x128xf32> to vector<128x128xf32>
    %cst_24 = arith.constant dense<0.000000e+00> : vector<128x128xf32>
    %31 = tpu.matmul %28, %30, %cst_24 {dimension_numbers = #tpu.dot_dimension_numbers<[1], [0], [0], [1], [0, 0, 1, 1], [], []>} : vector<128x128xf32>, vector<128x128xf32>, vector<128x128xf32> -> vector<128x128xf32>
    %c3_25 = arith.constant 3 : index
    %c0_26 = arith.constant 0 : index
    %c0_27 = arith.constant 0 : index
    %32 = vector.load %arg3[%c3_25, %c0_26, %c0_27] : memref<13x1x128xf32, #tpu.memory_space<vmem>>, vector<1x1x128xf32>
    %33 = vector.shape_cast %32 : vector<1x1x128xf32> to vector<1x128xf32>
    %34 = vector.broadcast %33 : vector<1x128xf32> to vector<128x128xf32>
    %35 = arith.addf %31, %34 : vector<128x128xf32>
    %cst_28 = arith.constant 0.00999999977 : f32
    %36 = vector.broadcast %cst_28 : f32 to vector<128x128xf32>
    %37 = arith.mulf %36, %35 : vector<128x128xf32>
    %38 = arith.maximumf %35, %37 : vector<128x128xf32>
    %c4 = arith.constant 4 : index
    %c0_29 = arith.constant 0 : index
    %c0_30 = arith.constant 0 : index
    %39 = vector.load %arg2[%c4, %c0_29, %c0_30] : memref<13x128x128xf32, #tpu.memory_space<vmem>>, vector<1x128x128xf32>
    %40 = vector.shape_cast %39 : vector<1x128x128xf32> to vector<128x128xf32>
    %cst_31 = arith.constant dense<0.000000e+00> : vector<128x128xf32>
    %41 = tpu.matmul %38, %40, %cst_31 {dimension_numbers = #tpu.dot_dimension_numbers<[1], [0], [0], [1], [0, 0, 1, 1], [], []>} : vector<128x128xf32>, vector<128x128xf32>, vector<128x128xf32> -> vector<128x128xf32>
    %c4_32 = arith.constant 4 : index
    %c0_33 = arith.constant 0 : index
    %c0_34 = arith.constant 0 : index
    %42 = vector.load %arg3[%c4_32, %c0_33, %c0_34] : memref<13x1x128xf32, #tpu.memory_space<vmem>>, vector<1x1x128xf32>
    %43 = vector.shape_cast %42 : vector<1x1x128xf32> to vector<1x128xf32>
    %44 = vector.broadcast %43 : vector<1x128xf32> to vector<128x128xf32>
    %45 = arith.addf %41, %44 : vector<128x128xf32>
    %cst_35 = arith.constant 0.00999999977 : f32
    %46 = vector.broadcast %cst_35 : f32 to vector<128x128xf32>
    %47 = arith.mulf %46, %45 : vector<128x128xf32>
    %48 = arith.maximumf %45, %47 : vector<128x128xf32>
    %c5 = arith.constant 5 : index
    %c0_36 = arith.constant 0 : index
    %c0_37 = arith.constant 0 : index
    %49 = vector.load %arg2[%c5, %c0_36, %c0_37] : memref<13x128x128xf32, #tpu.memory_space<vmem>>, vector<1x128x128xf32>
    %50 = vector.shape_cast %49 : vector<1x128x128xf32> to vector<128x128xf32>
    %cst_38 = arith.constant dense<0.000000e+00> : vector<128x128xf32>
    %51 = tpu.matmul %48, %50, %cst_38 {dimension_numbers = #tpu.dot_dimension_numbers<[1], [0], [0], [1], [0, 0, 1, 1], [], []>} : vector<128x128xf32>, vector<128x128xf32>, vector<128x128xf32> -> vector<128x128xf32>
    %c5_39 = arith.constant 5 : index
    %c0_40 = arith.constant 0 : index
    %c0_41 = arith.constant 0 : index
    %52 = vector.load %arg3[%c5_39, %c0_40, %c0_41] : memref<13x1x128xf32, #tpu.memory_space<vmem>>, vector<1x1x128xf32>
    %53 = vector.shape_cast %52 : vector<1x1x128xf32> to vector<1x128xf32>
    %54 = vector.broadcast %53 : vector<1x128xf32> to vector<128x128xf32>
    %55 = arith.addf %51, %54 : vector<128x128xf32>
    %cst_42 = arith.constant 0.00999999977 : f32
    %56 = vector.broadcast %cst_42 : f32 to vector<128x128xf32>
    %57 = arith.mulf %56, %55 : vector<128x128xf32>
    %58 = arith.maximumf %55, %57 : vector<128x128xf32>
    %c6 = arith.constant 6 : index
    %c0_43 = arith.constant 0 : index
    %c0_44 = arith.constant 0 : index
    %59 = vector.load %arg2[%c6, %c0_43, %c0_44] : memref<13x128x128xf32, #tpu.memory_space<vmem>>, vector<1x128x128xf32>
    %60 = vector.shape_cast %59 : vector<1x128x128xf32> to vector<128x128xf32>
    %cst_45 = arith.constant dense<0.000000e+00> : vector<128x128xf32>
    %61 = tpu.matmul %58, %60, %cst_45 {dimension_numbers = #tpu.dot_dimension_numbers<[1], [0], [0], [1], [0, 0, 1, 1], [], []>} : vector<128x128xf32>, vector<128x128xf32>, vector<128x128xf32> -> vector<128x128xf32>
    %c6_46 = arith.constant 6 : index
    %c0_47 = arith.constant 0 : index
    %c0_48 = arith.constant 0 : index
    %62 = vector.load %arg3[%c6_46, %c0_47, %c0_48] : memref<13x1x128xf32, #tpu.memory_space<vmem>>, vector<1x1x128xf32>
    %63 = vector.shape_cast %62 : vector<1x1x128xf32> to vector<1x128xf32>
    %64 = vector.broadcast %63 : vector<1x128xf32> to vector<128x128xf32>
    %65 = arith.addf %61, %64 : vector<128x128xf32>
    %cst_49 = arith.constant 0.00999999977 : f32
    %66 = vector.broadcast %cst_49 : f32 to vector<128x128xf32>
    %67 = arith.mulf %66, %65 : vector<128x128xf32>
    %68 = arith.maximumf %65, %67 : vector<128x128xf32>
    %c7 = arith.constant 7 : index
    %c0_50 = arith.constant 0 : index
    %c0_51 = arith.constant 0 : index
    %69 = vector.load %arg2[%c7, %c0_50, %c0_51] : memref<13x128x128xf32, #tpu.memory_space<vmem>>, vector<1x128x128xf32>
    %70 = vector.shape_cast %69 : vector<1x128x128xf32> to vector<128x128xf32>
    %cst_52 = arith.constant dense<0.000000e+00> : vector<128x128xf32>
    %71 = tpu.matmul %68, %70, %cst_52 {dimension_numbers = #tpu.dot_dimension_numbers<[1], [0], [0], [1], [0, 0, 1, 1], [], []>} : vector<128x128xf32>, vector<128x128xf32>, vector<128x128xf32> -> vector<128x128xf32>
    %c7_53 = arith.constant 7 : index
    %c0_54 = arith.constant 0 : index
    %c0_55 = arith.constant 0 : index
    %72 = vector.load %arg3[%c7_53, %c0_54, %c0_55] : memref<13x1x128xf32, #tpu.memory_space<vmem>>, vector<1x1x128xf32>
    %73 = vector.shape_cast %72 : vector<1x1x128xf32> to vector<1x128xf32>
    %74 = vector.broadcast %73 : vector<1x128xf32> to vector<128x128xf32>
    %75 = arith.addf %71, %74 : vector<128x128xf32>
    %cst_56 = arith.constant 0.00999999977 : f32
    %76 = vector.broadcast %cst_56 : f32 to vector<128x128xf32>
    %77 = arith.mulf %76, %75 : vector<128x128xf32>
    %78 = arith.maximumf %75, %77 : vector<128x128xf32>
    %c8 = arith.constant 8 : index
    %c0_57 = arith.constant 0 : index
    %c0_58 = arith.constant 0 : index
    %79 = vector.load %arg2[%c8, %c0_57, %c0_58] : memref<13x128x128xf32, #tpu.memory_space<vmem>>, vector<1x128x128xf32>
    %80 = vector.shape_cast %79 : vector<1x128x128xf32> to vector<128x128xf32>
    %cst_59 = arith.constant dense<0.000000e+00> : vector<128x128xf32>
    %81 = tpu.matmul %78, %80, %cst_59 {dimension_numbers = #tpu.dot_dimension_numbers<[1], [0], [0], [1], [0, 0, 1, 1], [], []>} : vector<128x128xf32>, vector<128x128xf32>, vector<128x128xf32> -> vector<128x128xf32>
    %c8_60 = arith.constant 8 : index
    %c0_61 = arith.constant 0 : index
    %c0_62 = arith.constant 0 : index
    %82 = vector.load %arg3[%c8_60, %c0_61, %c0_62] : memref<13x1x128xf32, #tpu.memory_space<vmem>>, vector<1x1x128xf32>
    %83 = vector.shape_cast %82 : vector<1x1x128xf32> to vector<1x128xf32>
    %84 = vector.broadcast %83 : vector<1x128xf32> to vector<128x128xf32>
    %85 = arith.addf %81, %84 : vector<128x128xf32>
    %cst_63 = arith.constant 0.00999999977 : f32
    %86 = vector.broadcast %cst_63 : f32 to vector<128x128xf32>
    %87 = arith.mulf %86, %85 : vector<128x128xf32>
    %88 = arith.maximumf %85, %87 : vector<128x128xf32>
    %c9 = arith.constant 9 : index
    %c0_64 = arith.constant 0 : index
    %c0_65 = arith.constant 0 : index
    %89 = vector.load %arg2[%c9, %c0_64, %c0_65] : memref<13x128x128xf32, #tpu.memory_space<vmem>>, vector<1x128x128xf32>
    %90 = vector.shape_cast %89 : vector<1x128x128xf32> to vector<128x128xf32>
    %cst_66 = arith.constant dense<0.000000e+00> : vector<128x128xf32>
    %91 = tpu.matmul %88, %90, %cst_66 {dimension_numbers = #tpu.dot_dimension_numbers<[1], [0], [0], [1], [0, 0, 1, 1], [], []>} : vector<128x128xf32>, vector<128x128xf32>, vector<128x128xf32> -> vector<128x128xf32>
    %c9_67 = arith.constant 9 : index
    %c0_68 = arith.constant 0 : index
    %c0_69 = arith.constant 0 : index
    %92 = vector.load %arg3[%c9_67, %c0_68, %c0_69] : memref<13x1x128xf32, #tpu.memory_space<vmem>>, vector<1x1x128xf32>
    %93 = vector.shape_cast %92 : vector<1x1x128xf32> to vector<1x128xf32>
    %94 = vector.broadcast %93 : vector<1x128xf32> to vector<128x128xf32>
    %95 = arith.addf %91, %94 : vector<128x128xf32>
    %cst_70 = arith.constant 0.00999999977 : f32
    %96 = vector.broadcast %cst_70 : f32 to vector<128x128xf32>
    %97 = arith.mulf %96, %95 : vector<128x128xf32>
    %98 = arith.maximumf %95, %97 : vector<128x128xf32>
    %c10 = arith.constant 10 : index
    %c0_71 = arith.constant 0 : index
    %c0_72 = arith.constant 0 : index
    %99 = vector.load %arg2[%c10, %c0_71, %c0_72] : memref<13x128x128xf32, #tpu.memory_space<vmem>>, vector<1x128x128xf32>
    %100 = vector.shape_cast %99 : vector<1x128x128xf32> to vector<128x128xf32>
    %cst_73 = arith.constant dense<0.000000e+00> : vector<128x128xf32>
    %101 = tpu.matmul %98, %100, %cst_73 {dimension_numbers = #tpu.dot_dimension_numbers<[1], [0], [0], [1], [0, 0, 1, 1], [], []>} : vector<128x128xf32>, vector<128x128xf32>, vector<128x128xf32> -> vector<128x128xf32>
    %c10_74 = arith.constant 10 : index
    %c0_75 = arith.constant 0 : index
    %c0_76 = arith.constant 0 : index
    %102 = vector.load %arg3[%c10_74, %c0_75, %c0_76] : memref<13x1x128xf32, #tpu.memory_space<vmem>>, vector<1x1x128xf32>
    %103 = vector.shape_cast %102 : vector<1x1x128xf32> to vector<1x128xf32>
    %104 = vector.broadcast %103 : vector<1x128xf32> to vector<128x128xf32>
    %105 = arith.addf %101, %104 : vector<128x128xf32>
    %cst_77 = arith.constant 0.00999999977 : f32
    %106 = vector.broadcast %cst_77 : f32 to vector<128x128xf32>
    %107 = arith.mulf %106, %105 : vector<128x128xf32>
    %108 = arith.maximumf %105, %107 : vector<128x128xf32>
    %c11 = arith.constant 11 : index
    %c0_78 = arith.constant 0 : index
    %c0_79 = arith.constant 0 : index
    %109 = vector.load %arg2[%c11, %c0_78, %c0_79] : memref<13x128x128xf32, #tpu.memory_space<vmem>>, vector<1x128x128xf32>
    %110 = vector.shape_cast %109 : vector<1x128x128xf32> to vector<128x128xf32>
    %cst_80 = arith.constant dense<0.000000e+00> : vector<128x128xf32>
    %111 = tpu.matmul %108, %110, %cst_80 {dimension_numbers = #tpu.dot_dimension_numbers<[1], [0], [0], [1], [0, 0, 1, 1], [], []>} : vector<128x128xf32>, vector<128x128xf32>, vector<128x128xf32> -> vector<128x128xf32>
    %c11_81 = arith.constant 11 : index
    %c0_82 = arith.constant 0 : index
    %c0_83 = arith.constant 0 : index
    %112 = vector.load %arg3[%c11_81, %c0_82, %c0_83] : memref<13x1x128xf32, #tpu.memory_space<vmem>>, vector<1x1x128xf32>
    %113 = vector.shape_cast %112 : vector<1x1x128xf32> to vector<1x128xf32>
    %114 = vector.broadcast %113 : vector<1x128xf32> to vector<128x128xf32>
    %115 = arith.addf %111, %114 : vector<128x128xf32>
    %cst_84 = arith.constant 0.00999999977 : f32
    %116 = vector.broadcast %cst_84 : f32 to vector<128x128xf32>
    %117 = arith.mulf %116, %115 : vector<128x128xf32>
    %118 = arith.maximumf %115, %117 : vector<128x128xf32>
    %c12 = arith.constant 12 : index
    %c0_85 = arith.constant 0 : index
    %c0_86 = arith.constant 0 : index
    %119 = vector.load %arg2[%c12, %c0_85, %c0_86] : memref<13x128x128xf32, #tpu.memory_space<vmem>>, vector<1x128x128xf32>
    %120 = vector.shape_cast %119 : vector<1x128x128xf32> to vector<128x128xf32>
    %cst_87 = arith.constant dense<0.000000e+00> : vector<128x128xf32>
    %121 = tpu.matmul %118, %120, %cst_87 {dimension_numbers = #tpu.dot_dimension_numbers<[1], [0], [0], [1], [0, 0, 1, 1], [], []>} : vector<128x128xf32>, vector<128x128xf32>, vector<128x128xf32> -> vector<128x128xf32>
    %c12_88 = arith.constant 12 : index
    %c0_89 = arith.constant 0 : index
    %c0_90 = arith.constant 0 : index
    %122 = vector.load %arg3[%c12_88, %c0_89, %c0_90] : memref<13x1x128xf32, #tpu.memory_space<vmem>>, vector<1x1x128xf32>
    %123 = vector.shape_cast %122 : vector<1x1x128xf32> to vector<1x128xf32>
    %124 = vector.broadcast %123 : vector<1x128xf32> to vector<128x128xf32>
    %125 = arith.addf %121, %124 : vector<128x128xf32>
    %c0_91 = arith.constant 0 : index
    %c0_92 = arith.constant 0 : index
    %126 = vector.load %arg4[%c0_91, %c0_92] : memref<128x128xf32, #tpu.memory_space<vmem>>, vector<128x128xf32>
    tpu.vector_store %arg4[%c0_91, %c0_92], %125 {strides = array<i32>} : memref<128x128xf32, #tpu.memory_space<vmem>>, vector<128x128xf32>,
    return
  }
  func.func @transform_0(%arg0: i32) -> (i32, i32) {
    %c0_i32 = arith.constant 0 : i32
    %c0_i32_0 = arith.constant 0 : i32
    return %arg0, %c0_i32 : i32, i32
  }
  func.func @transform_1(%arg0: i32) -> (i32, i32, i32) {
    %c0_i32 = arith.constant 0 : i32
    %c0_i32_0 = arith.constant 0 : i32
    %c0_i32_1 = arith.constant 0 : i32
    %c0_i32_2 = arith.constant 0 : i32
    return %c0_i32, %c0_i32_0, %c0_i32_1 : i32, i32, i32
  }
  func.func @transform_2(%arg0: i32) -> (i32, i32, i32) {
    %c0_i32 = arith.constant 0 : i32
    %c0_i32_0 = arith.constant 0 : i32
    %c0_i32_1 = arith.constant 0 : i32
    %c0_i32_2 = arith.constant 0 : i32
    return %c0_i32, %c0_i32_0, %c0_i32_1 : i32, i32, i32
  }
  func.func @transform_3(%arg0: i32) -> (i32, i32) {
    %c0_i32 = arith.constant 0 : i32
    %c0_i32_0 = arith.constant 0 : i32
    return %arg0, %c0_i32 : i32, i32
  }
}

</mosaic_0001>

<llo_original>
// kernel: tpu_custom_call.1
$region0: #{tpu_custom_call.1}
  #allocation0 [shape = 'u32[]', space=smem, size = 0x4, offset = 0x4, fixed_abs, tag = 'smem constant byte address 0x4 - core index']
  #allocation1 [shape = 'u32[144,128]{1,0:T(1,128)}', space=vmem, size = 0x12000, scoped, tag = 'internal scratch']
  %s0 = inlined_call_operand.hbm [shape: f32[256,128], index: 0, kind: input, shape index: {}]
  %s1 = inlined_call_operand.hbm [shape: f32[13,128,128], index: 1, kind: input, shape index: {}]
  %s2 = inlined_call_operand.hbm [shape: f32[13,1,128], index: 2, kind: input, shape index: {}]
  %s3 = inlined_call_operand.hbm [shape: f32[256,128], index: 3, kind: output, shape index: {}]
  %s4 = sld [smem:[#allocation0]]
  $region57: #{tpu_custom_call.1} parent=0
    _
  %s6 = ssub.s32 1, %s4
  %s7 = scalar_select 0, %s6, %s4
  $region1: #{tpu_custom_call.1} parent=0
    #allocation2 [shape = 'u8[131072]{0}', space=vmem, size = 0x20000, scoped, tag = 'input window, operand 0']
    #allocation3 [shape = 's32[2]{0}', space=sflag, size = 0x8, scoped, tag = 'scoped memory for tpu_custom_call.1']
    #allocation4 [shape = 's32[2]{0}', space=sflag, size = 0x8, scoped, tag = 'scoped memory for tpu_custom_call.1']
    #allocation5 [shape = 'u8[851968]{0}', space=vmem, size = 0xd0000, scoped, tag = 'input window, operand 1, single buffered']
    #allocation6 [shape = 's32[1]{0}', space=sflag, size = 0x4, scoped, tag = 'scoped memory for tpu_custom_call.1']
    #allocation7 [shape = 'u8[6656]{0}', space=vmem, size = 0x1c00, scoped, tag = 'input window, operand 2, single buffered']
    #allocation8 [shape = 'u8[131072]{0}', space=vmem, size = 0x20000, scoped, tag = 'output window, operand 0']
    %8 = vsyncpa [#allocation3], 0
    %s9 = scalar_lea.sflag [#allocation3], 1
    %10 = vsyncpa %s9, 0
    %11 = vsyncpa [#allocation6], 0
    %12 = vsyncpa [#allocation4], 0
    %s13 = scalar_lea.sflag [#allocation4], 1
    %14 = vsyncpa %s13, 0
    loop: start=0, step=1, limit=4
    $region2: #{tpu_custom_call.1} parent=1 // loop_pre_header
      _
    $region3: #{tpu_custom_call.1} parent=1 // loop_header
      %s16 = sphi 0, %s20
      %p17 = scmp.ge.s32.totalorder %s16, 4
      %s26 = sphi 0, %s28
      %s29 = sphi 0, %s26
      %s30 = sphi 0, %s29
      %s46 = sphi 0, %s30
      %s50 = sphi 0, %s50
      %s52 = sphi 0, %s50
      %s53 = sphi 0, %s52
      %s67 = sphi 0, %s53
      %s71 = sphi 0, %s71
      %s73 = sphi 0, %s71
      %s74 = sphi 0, %s73
      %s88 = sphi 0, %s74
      %s94 = sphi 0, %s96
      %s97 = sphi 0, %s94
      %s98 = sphi 0, %s97
      %s114 = sphi 0, %s98
    $region4: #{tpu_custom_call.1} parent=1 // loop_header_branch
      %19 = sbr.rel (%p17) target = $region8
    $region5: #{tpu_custom_call.1} parent=1 // loop_body
      %s21 = ssub.s32 %s16, 1
      %s22 = ssub.s32 %s16, 2
      %s23 = sadd.s32 %s16, 1
      %s24 = ssub.s32 %s16, %s23
      %p25 = scmp.eq.s32.totalorder %s24, 0
      %s27 = sadd.s32 %s26, 1
      %s28 = scalar_select %p25, %s26, %s27
      %p31 = pneg %p25
      %p32 = scmp.eq.s32.totalorder %s16, 1
      %p33 = por %p31, %p32
      %p34 = scmp.ne.s32.totalorder %s26, %s29
      %p35 = scmp.eq.s32.totalorder %s16, 0
      %p36 = por %p34, %p35
      %p37 = scmp.ne.s32.totalorder %s26, %s29
      %p38 = scmp.eq.s32.totalorder %s21, 1
      %p39 = por %p37, %p38
      %p40 = scmp.ne.s32.totalorder %s29, %s30
      %p41 = scmp.eq.s32.totalorder %s21, 0
      %p42 = por %p40, %p41
      %p43 = scmp.ne.s32.totalorder %s29, %s30
      %p44 = scmp.eq.s32.totalorder %s22, 1
      %p45 = por %p43, %p44
      %p47 = scmp.ne.s32.totalorder %s30, %s46
      %p48 = scmp.eq.s32.totalorder %s22, 0
      %p49 = por %p47, %p48
      %s51 = sadd.s32 %s50, 1
      %p54 = scmp.eq.s32.totalorder %s16, 1
      %p55 = scmp.ne.s32.totalorder %s50, %s52
      %p56 = scmp.eq.s32.totalorder %s16, 0
      %p57 = por %p55, %p56
      %p58 = scmp.ne.s32.totalorder %s50, %s52
      %p59 = scmp.eq.s32.totalorder %s21, 1
      %p60 = por %p58, %p59
      %p61 = scmp.ne.s32.totalorder %s52, %s53
      %p62 = scmp.eq.s32.totalorder %s21, 0
      %p63 = por %p61, %p62
      %p64 = scmp.ne.s32.totalorder %s52, %s53
      %p65 = scmp.eq.s32.totalorder %s22, 1
      %p66 = por %p64, %p65
      %p68 = scmp.ne.s32.totalorder %s53, %s67
      %p69 = scmp.eq.s32.totalorder %s22, 0
      %p70 = por %p68, %p69
      %s72 = sadd.s32 %s71, 1
      %p75 = scmp.eq.s32.totalorder %s16, 1
      %p76 = scmp.ne.s32.totalorder %s71, %s73
      %p77 = scmp.eq.s32.totalorder %s16, 0
      %p78 = por %p76, %p77
      %p79 = scmp.ne.s32.totalorder %s71, %s73
      %p80 = scmp.eq.s32.totalorder %s21, 1
      %p81 = por %p79, %p80
      %p82 = scmp.ne.s32.totalorder %s73, %s74
      %p83 = scmp.eq.s32.totalorder %s21, 0
      %p84 = por %p82, %p83
      %p85 = scmp.ne.s32.totalorder %s73, %s74
      %p86 = scmp.eq.s32.totalorder %s22, 1
      %p87 = por %p85, %p86
      %p89 = scmp.ne.s32.totalorder %s74, %s88
      %p90 = scmp.eq.s32.totalorder %s22, 0
      %p91 = por %p89, %p90
      %s92 = ssub.s32 %s16, %s23
      %p93 = scmp.eq.s32.totalorder %s92, 0
      %s95 = sadd.s32 %s94, 1
      %s96 = scalar_select %p93, %s94, %s95
      %p99 = pneg %p93
      %p100 = scmp.eq.s32.totalorder %s16, 1
      %p101 = por %p99, %p100
      %p102 = scmp.ne.s32.totalorder %s94, %s97
      %p103 = scmp.eq.s32.totalorder %s16, 0
      %p104 = por %p102, %p103
      %p105 = scmp.ne.s32.totalorder %s94, %s97
      %p106 = scmp.eq.s32.totalorder %s21, 1
      %p107 = por %p105, %p106
      %p108 = scmp.ne.s32.totalorder %s97, %s98
      %p109 = scmp.eq.s32.totalorder %s21, 0
      %p110 = por %p108, %p109
      %p111 = scmp.ne.s32.totalorder %s97, %s98
      %p112 = scmp.eq.s32.totalorder %s22, 1
      %p113 = por %p111, %p112
      %p115 = scmp.ne.s32.totalorder %s98, %s114
      %p116 = scmp.eq.s32.totalorder %s22, 0
      %p117 = por %p115, %p116
      %p118 = scmp.le.s32.totalorder 1, %s16
      %p119 = scmp.lt.s32.totalorder %s16, 3
      %p120 = pnand %p118, %p119
      %p121 = pneg %p120
      // Predicated region
      $region9: #{tpu_custom_call.1} parent=5 // pred_check
        _
      $region10: #{tpu_custom_call.1} parent=5 // pred_check_branch
        %123 = sbr.rel (%p120) target = $region12
      $region11: #{tpu_custom_call.1} parent=5 // pred_region
        %s124 = ssub.s32 %s16, 1
        // Predicated region
        $region13: #{tpu_custom_call.1} parent=11 // pred_check
          %p125 = pneg %p63
        $region14: #{tpu_custom_call.1} parent=11 // pred_check_branch
          %127 = sbr.rel (%p125) target = $region16
        $region15: #{tpu_custom_call.1} parent=11 // pred_region
          %s129 = ssub.s32 26624, 26624
          %130 = vsyncadd [#allocation6], %s129
          %s131 = sshll.u32 [#allocation5], 4
          %s132 = int_to_ptr.vmem [resolvable:$true] %s131
          %137 = dma.hbm_to_vmem [thread:$0]  %s1, 26624, %s132, [#allocation6], 128, 128, 8
        $region16: #{tpu_custom_call.1} parent=11 // pred_fallthru
          _
        // Predicated region
        $region17: #{tpu_custom_call.1} parent=11 // pred_check
          %p138 = pneg %p84
        $region18: #{tpu_custom_call.1} parent=11 // pred_check_branch
          %140 = sbr.rel (%p138) target = $region20
        $region19: #{tpu_custom_call.1} parent=11 // pred_region
          %s142 = ssub.s32 208, 208
          %143 = vsyncadd [#allocation6], %s142
          %s144 = sshll.u32 [#allocation7], 4
          %s145 = int_to_ptr.vmem [resolvable:$true] %s144
          %150 = dma.hbm_to_vmem [thread:$0]  %s2, 208, %s145, [#allocation6], 16, 16, 1
        $region20: #{tpu_custom_call.1} parent=11 // pred_fallthru
          _
      $region12: #{tpu_custom_call.1} parent=5 // pred_fallthru
        _
      %p151 = scmp.lt.s32.totalorder %s16, 2
      // Predicated region
      $region21: #{tpu_custom_call.1} parent=5 // pred_check
        %p152 = pneg %p151
      $region22: #{tpu_custom_call.1} parent=5 // pred_check_branch
        %154 = sbr.rel (%p152) target = $region24
      $region23: #{tpu_custom_call.1} parent=5 // pred_region
        // Predicated region
        $region25: #{tpu_custom_call.1} parent=23 // pred_check
          %p155 = pneg %p36
        $region26: #{tpu_custom_call.1} parent=23 // pred_check_branch
          %157 = sbr.rel (%p155) target = $region28
        $region27: #{tpu_custom_call.1} parent=23 // pred_region
          %s158 = sand.u32 %s26, 1
          %s159 = scalar_lea.sflag [#allocation3], %s158
          %s160 = sand.u32 %s26, 1
          %s161 = smul.addr %s160, 128
          %s162 = scalar_lea.vmem [#allocation2], %s161
          %s163 = smul.u32 16, %s16
          %s165 = ssub.s32 2048, 2048
          %166 = vsyncadd %s159, %s165
          %s167 = smul.addr %s163, 128
          %s168 = scalar_lea.hbm %s0, %s167
          %s169 = sshll.u32 %s162, 4
          %s170 = int_to_ptr.vmem [resolvable:$true] %s169
          %175 = dma.hbm_to_vmem [thread:$0]  %s168, 2048, %s170, %s159, 128, 128, 8
        $region28: #{tpu_custom_call.1} parent=23 // pred_fallthru
          _
      $region24: #{tpu_custom_call.1} parent=5 // pred_fallthru
        _
      %p176 = scmp.le.s32.totalorder 1, %s16
      %p177 = scmp.lt.s32.totalorder %s16, 3
      %p178 = pnand %p176, %p177
      %p179 = pneg %p178
      // Predicated region
      $region29: #{tpu_custom_call.1} parent=5 // pred_check
        _
      $region30: #{tpu_custom_call.1} parent=5 // pred_check_branch
        %181 = sbr.rel (%p178) target = $region32
      $region31: #{tpu_custom_call.1} parent=5 // pred_region
        %s182 = ssub.s32 %s16, 1
        %s183 = sand.u32 %s29, 1
        %s184 = scalar_lea.sflag [#allocation3], %s183
        %s185 = sand.u32 %s29, 1
        %s186 = smul.addr %s185, 128
        %s187 = scalar_lea.vmem [#allocation2], %s186
        // Predicated region
        $region33: #{tpu_custom_call.1} parent=31 // pred_check
          %p188 = pneg %p42
        $region34: #{tpu_custom_call.1} parent=31 // pred_check_branch
          %190 = sbr.rel (%p188) target = $region36
        $region35: #{tpu_custom_call.1} parent=31 // pred_region
          %191 = dma.done %s184, 2048
        $region36: #{tpu_custom_call.1} parent=31 // pred_fallthru
          _
        // Predicated region
        $region37: #{tpu_custom_call.1} parent=31 // pred_check
          %p192 = pneg %p63
        $region38: #{tpu_custom_call.1} parent=31 // pred_check_branch
          %194 = sbr.rel (%p192) target = $region40
        $region39: #{tpu_custom_call.1} parent=31 // pred_region
          %195 = dma.done [#allocation6], 26624
        $region40: #{tpu_custom_call.1} parent=31 // pred_fallthru
          _
        // Predicated region
        $region41: #{tpu_custom_call.1} parent=31 // pred_check
          %p196 = pneg %p84
        $region42: #{tpu_custom_call.1} parent=31 // pred_check_branch
          %198 = sbr.rel (%p196) target = $region44
        $region43: #{tpu_custom_call.1} parent=31 // pred_region
          %199 = dma.done [#allocation6], 208
        $region44: #{tpu_custom_call.1} parent=31 // pred_fallthru
          _
        %s200 = sand.u32 %s29, 1
        %s201 = scalar_lea.sflag [#allocation3], %s200
        %s202 = sand.u32 %s29, 1
        %s203 = smul.addr %s202, 128
        %s204 = scalar_lea.vmem [#allocation2], %s203
        %p205 = pneg %p42
        %p206 = pneg %p39
        %p207 = pneg %p63
        %p208 = pneg %p60
        %p209 = pneg %p84
        %p210 = pneg %p81
        %p211 = pneg %p110
        %p212 = pneg %p107
        %s213 = sand.u32 %s97, 1
        %s214 = scalar_lea.sflag [#allocation4], %s213
        %s215 = sand.u32 %s97, 1
        %s216 = smul.addr %s215, 128
        %s217 = scalar_lea.vmem [#allocation8], %s216
        %s218 = smul.u32 16, %s21
        %s219 = smul.u32 16, %s21
        %v220 = vld [vmem:[%s187] sm:$0xff]
        %v221 = vld [vmem:[%s187 + $0x8] sm:$0xff]
        %v222 = vld [vmem:[%s187 + $0x10] sm:$0xff]
        %v223 = vld [vmem:[%s187 + $0x18] sm:$0xff]
        %v224 = vld [vmem:[%s187 + $0x20] sm:$0xff]
        %v225 = vld [vmem:[%s187 + $0x28] sm:$0xff]
        %v226 = vld [vmem:[%s187 + $0x30] sm:$0xff]
        %v227 = vld [vmem:[%s187 + $0x38] sm:$0xff]
        %v228 = vld [vmem:[%s187 + $0x40] sm:$0xff]
        %v229 = vld [vmem:[%s187 + $0x48] sm:$0xff]
        %v230 = vld [vmem:[%s187 + $0x50] sm:$0xff]
        %v231 = vld [vmem:[%s187 + $0x58] sm:$0xff]
        %v232 = vld [vmem:[%s187 + $0x60] sm:$0xff]
        %v233 = vld [vmem:[%s187 + $0x68] sm:$0xff]
        %v234 = vld [vmem:[%s187 + $0x70] sm:$0xff]
        %v235 = vld [vmem:[%s187 + $0x78] sm:$0xff]
        %v236 = vld [vmem:[#allocation5] sm:$0xff]
        %v237 = vld [vmem:[#allocation5 + $0x8] sm:$0xff]
        %v238 = vld [vmem:[#allocation5 + $0x10] sm:$0xff]
        %v239 = vld [vmem:[#allocation5 + $0x18] sm:$0xff]
        %v240 = vld [vmem:[#allocation5 + $0x20] sm:$0xff]
        %v241 = vld [vmem:[#allocation5 + $0x28] sm:$0xff]
        %v242 = vld [vmem:[#allocation5 + $0x30] sm:$0xff]
        %v243 = vld [vmem:[#allocation5 + $0x38] sm:$0xff]
        %v244 = vld [vmem:[#allocation5 + $0x40] sm:$0xff]
        %v245 = vld [vmem:[#allocation5 + $0x48] sm:$0xff]
        %v246 = vld [vmem:[#allocation5 + $0x50] sm:$0xff]
        %v247 = vld [vmem:[#allocation5 + $0x58] sm:$0xff]
        %v248 = vld [vmem:[#allocation5 + $0x60] sm:$0xff]
        %v249 = vld [vmem:[#allocation5 + $0x68] sm:$0xff]
        %v250 = vld [vmem:[#allocation5 + $0x70] sm:$0xff]
        %v251 = vld [vmem:[#allocation5 + $0x78] sm:$0xff]
        %v252 = vld [vmem:[#allocation7] sm:$0x1]
        %v254 = vlaneseq
        %v255 = vshrl.u32 %v254, 7
        %v256 = vsub.s32 0, %v255
        %v257 = vrot.slane %v252, %v256
        %259 = vmatprep.subr.mxu0 0.0
        %260 = vmatpush1.msra.mxu0 %v251
        %261 = vmatprep.subr.mxu0 0.0
        %262 = vmatpush1.msra.mxu0 %v250
        %263 = vmatprep.subr.mxu0 0.0
        %264 = vmatpush1.msra.mxu0 %v249
        %265 = vmatprep.subr.mxu0 0.0
        %266 = vmatpush1.msra.mxu0 %v248
        %267 = vmatprep.subr.mxu0 0.0
        %268 = vmatpush1.msra.mxu0 %v247
        %269 = vmatprep.subr.mxu0 0.0
        %270 = vmatpush1.msra.mxu0 %v246
        %271 = vmatprep.subr.mxu0 0.0
        %272 = vmatpush1.msra.mxu0 %v245
        %273 = vmatprep.subr.mxu0 0.0
        %274 = vmatpush1.msra.mxu0 %v244
        %275 = vmatprep.subr.mxu0 0.0
        %276 = vmatpush1.msra.mxu0 %v243
        %277 = vmatprep.subr.mxu0 0.0
        %278 = vmatpush1.msra.mxu0 %v242
        %279 = vmatprep.subr.mxu0 0.0
        %280 = vmatpush1.msra.mxu0 %v241
        %281 = vmatprep.subr.mxu0 0.0
        %282 = vmatpush1.msra.mxu0 %v240
        %283 = vmatprep.subr.mxu0 0.0
        %284 = vmatpush1.msra.mxu0 %v239
        %285 = vmatprep.subr.mxu0 0.0
        %286 = vmatpush1.msra.mxu0 %v238
        %287 = vmatprep.subr.mxu0 0.0
        %288 = vmatpush1.msra.mxu0 %v237
        %289 = vmatprep.subr.mxu0 0.0
        %290 = vmatpush1.msra.mxu0 %v236
        %291 = vmatprep.subr.mxu0 0.0
        %292 = vmatpush2.msra.mxu0 0.0
        %293 = vmatprep.subr.mxu0 0.0
        %294 = vmatpush2.msra.mxu0 0.0
        %295 = vmatprep.subr.mxu0 0.0
        %296 = vmatpush2.msra.mxu0 0.0
        %297 = vmatprep.subr.mxu0 0.0
        %298 = vmatpush2.msra.mxu0 0.0
        %299 = vmatprep.subr.mxu0 0.0
        %300 = vmatpush2.msra.mxu0 0.0
        %301 = vmatprep.subr.mxu0 0.0
        %302 = vmatpush2.msra.mxu0 0.0
        %303 = vmatprep.subr.mxu0 0.0
        %304 = vmatpush2.msra.mxu0 0.0
        %305 = vmatprep.subr.mxu0 0.0
        %306 = vmatpush2.msra.mxu0 0.0
        %307 = vmatprep.subr.mxu0 0.0
        %308 = vmatpush2.msra.mxu0 0.0
        %309 = vmatprep.subr.mxu0 0.0
        %310 = vmatpush2.msra.mxu0 0.0
        %311 = vmatprep.subr.mxu0 0.0
        %312 = vmatpush2.msra.mxu0 0.0
        %313 = vmatprep.subr.mxu0 0.0
        %314 = vmatpush2.msra.mxu0 0.0
        %315 = vmatprep.subr.mxu0 0.0
        %316 = vmatpush2.msra.mxu0 0.0
        %317 = vmatprep.subr.mxu0 0.0
        %318 = vmatpush2.msra.mxu0 0.0
        %319 = vmatprep.subr.mxu0 0.0
        %320 = vmatpush2.msra.mxu0 0.0
        %321 = vmatprep.subr.mxu0 0.0
        %322 = vmatpush2.msra.mxu0 0.0
        %323 = vmatprep.mubr.f32.mxu0 0.0
        %324 = vmatmul.mubr.f32.gmra.mxu0 %v220
        %v325 = vpop.f32.mrf.mxu0
        %v326 = vadd.f32 %v257, %v325
        %v327 = vpop.f32.mrf.mxu0
        %328 = vmatprep.mubr.f32.mxu0 0.0
        %329 = vmatmul.mubr.f32.gmra.mxu0 %v221
        %v330 = vpop.f32.mrf.mxu0
        %v331 = vadd.f32 %v257, %v330
        %v332 = vpop.f32.mrf.mxu0
        %333 = vmatprep.mubr.f32.mxu0 0.0
        %334 = vmatmul.mubr.f32.gmra.mxu0 %v222
        %v335 = vpop.f32.mrf.mxu0
        %v336 = vadd.f32 %v257, %v335
        %v337 = vpop.f32.mrf.mxu0
        %338 = vmatprep.mubr.f32.mxu0 0.0
        %339 = vmatmul.mubr.f32.gmra.mxu0 %v223
        %v340 = vpop.f32.mrf.mxu0
        %v341 = vadd.f32 %v257, %v340
        %v342 = vpop.f32.mrf.mxu0
        %343 = vmatprep.mubr.f32.mxu0 0.0
        %344 = vmatmul.mubr.f32.gmra.mxu0 %v224
        %v345 = vpop.f32.mrf.mxu0
        %v346 = vadd.f32 %v257, %v345
        %v347 = vpop.f32.mrf.mxu0
        %348 = vmatprep.mubr.f32.mxu0 0.0
        %349 = vmatmul.mubr.f32.gmra.mxu0 %v225
        %v350 = vpop.f32.mrf.mxu0
        %v351 = vadd.f32 %v257, %v350
        %v352 = vpop.f32.mrf.mxu0
        %353 = vmatprep.mubr.f32.mxu0 0.0
        %354 = vmatmul.mubr.f32.gmra.mxu0 %v226
        %v355 = vpop.f32.mrf.mxu0
        %v356 = vadd.f32 %v257, %v355
        %v357 = vpop.f32.mrf.mxu0
        %358 = vmatprep.mubr.f32.mxu0 0.0
        %359 = vmatmul.mubr.f32.gmra.mxu0 %v227
        %v360 = vpop.f32.mrf.mxu0
        %v361 = vadd.f32 %v257, %v360
        %v362 = vpop.f32.mrf.mxu0
        %363 = vmatprep.mubr.f32.mxu0 0.0
        %364 = vmatmul.mubr.f32.gmra.mxu0 %v228
        %v365 = vpop.f32.mrf.mxu0
        %v366 = vadd.f32 %v257, %v365
        %v367 = vpop.f32.mrf.mxu0
        %368 = vmatprep.mubr.f32.mxu0 0.0
        %369 = vmatmul.mubr.f32.gmra.mxu0 %v229
        %v370 = vpop.f32.mrf.mxu0
        %v371 = vadd.f32 %v257, %v370
        %v372 = vpop.f32.mrf.mxu0
        %373 = vmatprep.mubr.f32.mxu0 0.0
        %374 = vmatmul.mubr.f32.gmra.mxu0 %v230
        %v375 = vpop.f32.mrf.mxu0
        %v376 = vadd.f32 %v257, %v375
        %v377 = vpop.f32.mrf.mxu0
        %378 = vmatprep.mubr.f32.mxu0 0.0
        %379 = vmatmul.mubr.f32.gmra.mxu0 %v231
        %v380 = vpop.f32.mrf.mxu0
        %v381 = vadd.f32 %v257, %v380
        %v382 = vpop.f32.mrf.mxu0
        %383 = vmatprep.mubr.f32.mxu0 0.0
        %384 = vmatmul.mubr.f32.gmra.mxu0 %v232
        %v385 = vpop.f32.mrf.mxu0
        %v386 = vadd.f32 %v257, %v385
        %v387 = vpop.f32.mrf.mxu0
        %388 = vmatprep.mubr.f32.mxu0 0.0
        %389 = vmatmul.mubr.f32.gmra.mxu0 %v233
        %v390 = vpop.f32.mrf.mxu0
        %v391 = vadd.f32 %v257, %v390
        %v392 = vpop.f32.mrf.mxu0
        %393 = vmatprep.mubr.f32.mxu0 0.0
        %394 = vmatmul.mubr.f32.gmra.mxu0 %v234
        %v395 = vpop.f32.mrf.mxu0
        %v396 = vadd.f32 %v257, %v395
        %v397 = vpop.f32.mrf.mxu0
        %398 = vmatprep.mubr.f32.mxu0 0.0
        %399 = vmatmul.mubr.f32.gmra.mxu0 %v235
        %v400 = vpop.f32.mrf.mxu0
        %v401 = vadd.f32 %v257, %v400
        %v402 = vpop.f32.mrf.mxu0
        %403 = vdwg.mxu0
        %v404 = vmax.f32 %v326, 0.0
        %v405 = vmax.f32 %v331, 0.0
        %v406 = vmax.f32 %v336, 0.0
        %v407 = vmax.f32 %v341, 0.0
        %v408 = vmax.f32 %v346, 0.0
        %v409 = vmax.f32 %v351, 0.0
        %v410 = vmax.f32 %v356, 0.0
        %v411 = vmax.f32 %v361, 0.0
        %v412 = vmax.f32 %v366, 0.0
        %v413 = vmax.f32 %v371, 0.0
        %v414 = vmax.f32 %v376, 0.0
        %v415 = vmax.f32 %v381, 0.0
        %v416 = vmax.f32 %v386, 0.0
        %v417 = vmax.f32 %v391, 0.0
        %v418 = vmax.f32 %v396, 0.0
        %v419 = vmax.f32 %v401, 0.0
        %s420 = scalar_lea.vmem [#allocation5], 128
        %v421 = vld [vmem:[%s420] sm:$0xff]
        %v422 = vld [vmem:[%s420 + $0x8] sm:$0xff]
        %v423 = vld [vmem:[%s420 + $0x10] sm:$0xff]
        %v424 = vld [vmem:[%s420 + $0x18] sm:$0xff]
        %v425 = vld [vmem:[%s420 + $0x20] sm:$0xff]
        %v426 = vld [vmem:[%s420 + $0x28] sm:$0xff]
        %v427 = vld [vmem:[%s420 + $0x30] sm:$0xff]
        %v428 = vld [vmem:[%s420 + $0x38] sm:$0xff]
        %v429 = vld [vmem:[%s420 + $0x40] sm:$0xff]
        %v430 = vld [vmem:[%s420 + $0x48] sm:$0xff]
        %v431 = vld [vmem:[%s420 + $0x50] sm:$0xff]
        %v432 = vld [vmem:[%s420 + $0x58] sm:$0xff]
        %v433 = vld [vmem:[%s420 + $0x60] sm:$0xff]
        %v434 = vld [vmem:[%s420 + $0x68] sm:$0xff]
        %v435 = vld [vmem:[%s420 + $0x70] sm:$0xff]
        %v436 = vld [vmem:[%s420 + $0x78] sm:$0xff]
        %s437 = scalar_lea.vmem [#allocation7], 1
        %v438 = vld [vmem:[%s437] sm:$0x1]
        %v440 = vlaneseq
        %v441 = vshrl.u32 %v440, 7
        %v442 = vsub.s32 0, %v441
        %v443 = vrot.slane %v438, %v442
        %445 = vmatprep.subr.mxu0 0.0
        %446 = vmatpush1.msra.mxu0 %v436
        %447 = vmatprep.subr.mxu0 0.0
        %448 = vmatpush1.msra.mxu0 %v435
        %449 = vmatprep.subr.mxu0 0.0
        %450 = vmatpush1.msra.mxu0 %v434
        %451 = vmatprep.subr.mxu0 0.0
        %452 = vmatpush1.msra.mxu0 %v433
        %453 = vmatprep.subr.mxu0 0.0
        %454 = vmatpush1.msra.mxu0 %v432
        %455 = vmatprep.subr.mxu0 0.0
        %456 = vmatpush1.msra.mxu0 %v431
        %457 = vmatprep.subr.mxu0 0.0
        %458 = vmatpush1.msra.mxu0 %v430
        %459 = vmatprep.subr.mxu0 0.0
        %460 = vmatpush1.msra.mxu0 %v429
        %461 = vmatprep.subr.mxu0 0.0
        %462 = vmatpush1.msra.mxu0 %v428
        %463 = vmatprep.subr.mxu0 0.0
        %464 = vmatpush1.msra.mxu0 %v427
        %465 = vmatprep.subr.mxu0 0.0
        %466 = vmatpush1.msra.mxu0 %v426
        %467 = vmatprep.subr.mxu0 0.0
        %468 = vmatpush1.msra.mxu0 %v425
        %469 = vmatprep.subr.mxu0 0.0
        %470 = vmatpush1.msra.mxu0 %v424
        %471 = vmatprep.subr.mxu0 0.0
        %472 = vmatpush1.msra.mxu0 %v423
        %473 = vmatprep.subr.mxu0 0.0
        %474 = vmatpush1.msra.mxu0 %v422
        %475 = vmatprep.subr.mxu0 0.0
        %476 = vmatpush1.msra.mxu0 %v421
        %477 = vmatprep.subr.mxu0 0.0
        %478 = vmatpush2.msra.mxu0 0.0
        %479 = vmatprep.subr.mxu0 0.0
        %480 = vmatpush2.msra.mxu0 0.0
        %481 = vmatprep.subr.mxu0 0.0
        %482 = vmatpush2.msra.mxu0 0.0
        %483 = vmatprep.subr.mxu0 0.0
        %484 = vmatpush2.msra.mxu0 0.0
        %485 = vmatprep.subr.mxu0 0.0
        %486 = vmatpush2.msra.mxu0 0.0
        %487 = vmatprep.subr.mxu0 0.0
        %488 = vmatpush2.msra.mxu0 0.0
        %489 = vmatprep.subr.mxu0 0.0
        %490 = vmatpush2.msra.mxu0 0.0
        %491 = vmatprep.subr.mxu0 0.0
        %492 = vmatpush2.msra.mxu0 0.0
        %493 = vmatprep.subr.mxu0 0.0
        %494 = vmatpush2.msra.mxu0 0.0
        %495 = vmatprep.subr.mxu0 0.0
        %496 = vmatpush2.msra.mxu0 0.0
        %497 = vmatprep.subr.mxu0 0.0
        %498 = vmatpush2.msra.mxu0 0.0
        %499 = vmatprep.subr.mxu0 0.0
        %500 = vmatpush2.msra.mxu0 0.0
        %501 = vmatprep.subr.mxu0 0.0
        %502 = vmatpush2.msra.mxu0 0.0
        %503 = vmatprep.subr.mxu0 0.0
        %504 = vmatpush2.msra.mxu0 0.0
        %505 = vmatprep.subr.mxu0 0.0
        %506 = vmatpush2.msra.mxu0 0.0
        %507 = vmatprep.subr.mxu0 0.0
        %508 = vmatpush2.msra.mxu0 0.0
        %509 = vmatprep.mubr.f32.mxu0 0.0
        %510 = vmatmul.mubr.f32.gmra.mxu0 %v404
        %v511 = vpop.f32.mrf.mxu0
        %v512 = vadd.f32 %v443, %v511
        %v513 = vpop.f32.mrf.mxu0
        %514 = vmatprep.mubr.f32.mxu0 0.0
        %515 = vmatmul.mubr.f32.gmra.mxu0 %v405
        %v516 = vpop.f32.mrf.mxu0
        %v517 = vadd.f32 %v443, %v516
        %v518 = vpop.f32.mrf.mxu0
        %519 = vmatprep.mubr.f32.mxu0 0.0
        %520 = vmatmul.mubr.f32.gmra.mxu0 %v406
        %v521 = vpop.f32.mrf.mxu0
        %v522 = vadd.f32 %v443, %v521
        %v523 = vpop.f32.mrf.mxu0
        %524 = vmatprep.mubr.f32.mxu0 0.0
        %525 = vmatmul.mubr.f32.gmra.mxu0 %v407
        %v526 = vpop.f32.mrf.mxu0
        %v527 = vadd.f32 %v443, %v526
        %v528 = vpop.f32.mrf.mxu0
        %529 = vmatprep.mubr.f32.mxu0 0.0
        %530 = vmatmul.mubr.f32.gmra.mxu0 %v408
        %v531 = vpop.f32.mrf.mxu0
        %v532 = vadd.f32 %v443, %v531
        %v533 = vpop.f32.mrf.mxu0
        %534 = vmatprep.mubr.f32.mxu0 0.0
        %535 = vmatmul.mubr.f32.gmra.mxu0 %v409
        %v536 = vpop.f32.mrf.mxu0
        %v537 = vadd.f32 %v443, %v536
        %v538 = vpop.f32.mrf.mxu0
        %539 = vmatprep.mubr.f32.mxu0 0.0
        %540 = vmatmul.mubr.f32.gmra.mxu0 %v410
        %v541 = vpop.f32.mrf.mxu0
        %v542 = vadd.f32 %v443, %v541
        %v543 = vpop.f32.mrf.mxu0
        %544 = vmatprep.mubr.f32.mxu0 0.0
        %545 = vmatmul.mubr.f32.gmra.mxu0 %v411
        %v546 = vpop.f32.mrf.mxu0
        %v547 = vadd.f32 %v443, %v546
        %v548 = vpop.f32.mrf.mxu0
        %549 = vmatprep.mubr.f32.mxu0 0.0
        %550 = vmatmul.mubr.f32.gmra.mxu0 %v412
        %v551 = vpop.f32.mrf.mxu0
        %v552 = vadd.f32 %v443, %v551
        %v553 = vpop.f32.mrf.mxu0
        %554 = vmatprep.mubr.f32.mxu0 0.0
        %555 = vmatmul.mubr.f32.gmra.mxu0 %v413
        %v556 = vpop.f32.mrf.mxu0
        %v557 = vadd.f32 %v443, %v556
        %v558 = vpop.f32.mrf.mxu0
        %559 = vmatprep.mubr.f32.mxu0 0.0
        %560 = vmatmul.mubr.f32.gmra.mxu0 %v414
        %v561 = vpop.f32.mrf.mxu0
        %v562 = vadd.f32 %v443, %v561
        %v563 = vpop.f32.mrf.mxu0
        %564 = vmatprep.mubr.f32.mxu0 0.0
        %565 = vmatmul.mubr.f32.gmra.mxu0 %v415
        %v566 = vpop.f32.mrf.mxu0
        %v567 = vadd.f32 %v443, %v566
        %v568 = vpop.f32.mrf.mxu0
        %569 = vmatprep.mubr.f32.mxu0 0.0
        %570 = vmatmul.mubr.f32.gmra.mxu0 %v416
        %v571 = vpop.f32.mrf.mxu0
        %v572 = vadd.f32 %v443, %v571
        %v573 = vpop.f32.mrf.mxu0
        %574 = vmatprep.mubr.f32.mxu0 0.0
        %575 = vmatmul.mubr.f32.gmra.mxu0 %v417
        %v576 = vpop.f32.mrf.mxu0
        %v577 = vadd.f32 %v443, %v576
        %v578 = vpop.f32.mrf.mxu0
        %579 = vmatprep.mubr.f32.mxu0 0.0
        %580 = vmatmul.mubr.f32.gmra.mxu0 %v418
        %v581 = vpop.f32.mrf.mxu0
        %v582 = vadd.f32 %v443, %v581
        %v583 = vpop.f32.mrf.mxu0
        %584 = vmatprep.mubr.f32.mxu0 0.0
        %585 = vmatmul.mubr.f32.gmra.mxu0 %v419
        %v586 = vpop.f32.mrf.mxu0
        %v587 = vadd.f32 %v443, %v586
        %v588 = vpop.f32.mrf.mxu0
        %589 = vdwg.mxu0
        %v590 = vmax.f32 %v512, 0.0
        %v591 = vmax.f32 %v517, 0.0
        %v592 = vmax.f32 %v522, 0.0
        %v593 = vmax.f32 %v527, 0.0
        %v594 = vmax.f32 %v532, 0.0
        %v595 = vmax.f32 %v537, 0.0
        %v596 = vmax.f32 %v542, 0.0
        %v597 = vmax.f32 %v547, 0.0
        %v598 = vmax.f32 %v552, 0.0
        %v599 = vmax.f32 %v557, 0.0
        %v600 = vmax.f32 %v562, 0.0
        %v601 = vmax.f32 %v567, 0.0
        %v602 = vmax.f32 %v572, 0.0
        %v603 = vmax.f32 %v577, 0.0
        %v604 = vmax.f32 %v582, 0.0
        %v605 = vmax.f32 %v587, 0.0
        %s606 = scalar_lea.vmem [#allocation5], 256
        %v607 = vld [vmem:[%s606] sm:$0xff]
        %v608 = vld [vmem:[%s606 + $0x8] sm:$0xff]
        %v609 = vld [vmem:[%s606 + $0x10] sm:$0xff]
        %v610 = vld [vmem:[%s606 + $0x18] sm:$0xff]
        %v611 = vld [vmem:[%s606 + $0x20] sm:$0xff]
        %v612 = vld [vmem:[%s606 + $0x28] sm:$0xff]
        %v613 = vld [vmem:[%s606 + $0x30] sm:$0xff]
        %v614 = vld [vmem:[%s606 + $0x38] sm:$0xff]
        %v615 = vld [vmem:[%s606 + $0x40] sm:$0xff]
        %v616 = vld [vmem:[%s606 + $0x48] sm:$0xff]
        %v617 = vld [vmem:[%s606 + $0x50] sm:$0xff]
        %v618 = vld [vmem:[%s606 + $0x58] sm:$0xff]
        %v619 = vld [vmem:[%s606 + $0x60] sm:$0xff]
        %v620 = vld [vmem:[%s606 + $0x68] sm:$0xff]
        %v621 = vld [vmem:[%s606 + $0x70] sm:$0xff]
        %v622 = vld [vmem:[%s606 + $0x78] sm:$0xff]
        %s623 = scalar_lea.vmem [#allocation7], 2
        %v624 = vld [vmem:[%s623] sm:$0x1]
        %v626 = vlaneseq
        %v627 = vshrl.u32 %v626, 7
        %v628 = vsub.s32 0, %v627
        %v629 = vrot.slane %v624, %v628
        %631 = vmatprep.subr.mxu0 0.0
        %632 = vmatpush1.msra.mxu0 %v622
        %633 = vmatprep.subr.mxu0 0.0
        %634 = vmatpush1.msra.mxu0 %v621
        %635 = vmatprep.subr.mxu0 0.0
        %636 = vmatpush1.msra.mxu0 %v620
        %637 = vmatprep.subr.mxu0 0.0
        %638 = vmatpush1.msra.mxu0 %v619
        %639 = vmatprep.subr.mxu0 0.0
        %640 = vmatpush1.msra.mxu0 %v618
        %641 = vmatprep.subr.mxu0 0.0
        %642 = vmatpush1.msra.mxu0 %v617
        %643 = vmatprep.subr.mxu0 0.0
        %644 = vmatpush1.msra.mxu0 %v616
        %645 = vmatprep.subr.mxu0 0.0
        %646 = vmatpush1.msra.mxu0 %v615
        %647 = vmatprep.subr.mxu0 0.0
        %648 = vmatpush1.msra.mxu0 %v614
        %649 = vmatprep.subr.mxu0 0.0
        %650 = vmatpush1.msra.mxu0 %v613
        %651 = vmatprep.subr.mxu0 0.0
        %652 = vmatpush1.msra.mxu0 %v612
        %653 = vmatprep.subr.mxu0 0.0
        %654 = vmatpush1.msra.mxu0 %v611
        %655 = vmatprep.subr.mxu0 0.0
        %656 = vmatpush1.msra.mxu0 %v610
        %657 = vmatprep.subr.mxu0 0.0
        %658 = vmatpush1.msra.mxu0 %v609
        %659 = vmatprep.subr.mxu0 0.0
        %660 = vmatpush1.msra.mxu0 %v608
        %661 = vmatprep.subr.mxu0 0.0
        %662 = vmatpush1.msra.mxu0 %v607
        %663 = vmatprep.subr.mxu0 0.0
        %664 = vmatpush2.msra.mxu0 0.0
        %665 = vmatprep.subr.mxu0 0.0
        %666 = vmatpush2.msra.mxu0 0.0
        %667 = vmatprep.subr.mxu0 0.0
        %668 = vmatpush2.msra.mxu0 0.0
        %669 = vmatprep.subr.mxu0 0.0
        %670 = vmatpush2.msra.mxu0 0.0
        %671 = vmatprep.subr.mxu0 0.0
        %672 = vmatpush2.msra.mxu0 0.0
        %673 = vmatprep.subr.mxu0 0.0
        %674 = vmatpush2.msra.mxu0 0.0
        %675 = vmatprep.subr.mxu0 0.0
        %676 = vmatpush2.msra.mxu0 0.0
        %677 = vmatprep.subr.mxu0 0.0
        %678 = vmatpush2.msra.mxu0 0.0
        %679 = vmatprep.subr.mxu0 0.0
        %680 = vmatpush2.msra.mxu0 0.0
        %681 = vmatprep.subr.mxu0 0.0
        %682 = vmatpush2.msra.mxu0 0.0
        %683 = vmatprep.subr.mxu0 0.0
        %684 = vmatpush2.msra.mxu0 0.0
        %685 = vmatprep.subr.mxu0 0.0
        %686 = vmatpush2.msra.mxu0 0.0
        %687 = vmatprep.subr.mxu0 0.0
        %688 = vmatpush2.msra.mxu0 0.0
        %689 = vmatprep.subr.mxu0 0.0
        %690 = vmatpush2.msra.mxu0 0.0
        %691 = vmatprep.subr.mxu0 0.0
        %692 = vmatpush2.msra.mxu0 0.0
        %693 = vmatprep.subr.mxu0 0.0
        %694 = vmatpush2.msra.mxu0 0.0
        %695 = vmatprep.mubr.f32.mxu0 0.0
        %696 = vmatmul.mubr.f32.gmra.mxu0 %v590
        %v697 = vpop.f32.mrf.mxu0
        %v698 = vadd.f32 %v629, %v697
        %v699 = vpop.f32.mrf.mxu0
        %700 = vmatprep.mubr.f32.mxu0 0.0
        %701 = vmatmul.mubr.f32.gmra.mxu0 %v591
        %v702 = vpop.f32.mrf.mxu0
        %v703 = vadd.f32 %v629, %v702
        %v704 = vpop.f32.mrf.mxu0
        %705 = vmatprep.mubr.f32.mxu0 0.0
        %706 = vmatmul.mubr.f32.gmra.mxu0 %v592
        %v707 = vpop.f32.mrf.mxu0
        %v708 = vadd.f32 %v629, %v707
        %v709 = vpop.f32.mrf.mxu0
        %710 = vmatprep.mubr.f32.mxu0 0.0
        %711 = vmatmul.mubr.f32.gmra.mxu0 %v593
        %v712 = vpop.f32.mrf.mxu0
        %v713 = vadd.f32 %v629, %v712
        %v714 = vpop.f32.mrf.mxu0
        %715 = vmatprep.mubr.f32.mxu0 0.0
        %716 = vmatmul.mubr.f32.gmra.mxu0 %v594
        %v717 = vpop.f32.mrf.mxu0
        %v718 = vadd.f32 %v629, %v717
        %v719 = vpop.f32.mrf.mxu0
        %720 = vmatprep.mubr.f32.mxu0 0.0
        %721 = vmatmul.mubr.f32.gmra.mxu0 %v595
        %v722 = vpop.f32.mrf.mxu0
        %v723 = vadd.f32 %v629, %v722
        %v724 = vpop.f32.mrf.mxu0
        %725 = vmatprep.mubr.f32.mxu0 0.0
        %726 = vmatmul.mubr.f32.gmra.mxu0 %v596
        %v727 = vpop.f32.mrf.mxu0
        %v728 = vadd.f32 %v629, %v727
        %v729 = vpop.f32.mrf.mxu0
        %730 = vmatprep.mubr.f32.mxu0 0.0
        %731 = vmatmul.mubr.f32.gmra.mxu0 %v597
        %v732 = vpop.f32.mrf.mxu0
        %v733 = vadd.f32 %v629, %v732
        %v734 = vpop.f32.mrf.mxu0
        %735 = vmatprep.mubr.f32.mxu0 0.0
        %736 = vmatmul.mubr.f32.gmra.mxu0 %v598
        %v737 = vpop.f32.mrf.mxu0
        %v738 = vadd.f32 %v629, %v737
        %v739 = vpop.f32.mrf.mxu0
        %740 = vmatprep.mubr.f32.mxu0 0.0
        %741 = vmatmul.mubr.f32.gmra.mxu0 %v599
        %v742 = vpop.f32.mrf.mxu0
        %v743 = vadd.f32 %v629, %v742
        %v744 = vpop.f32.mrf.mxu0
        %745 = vmatprep.mubr.f32.mxu0 0.0
        %746 = vmatmul.mubr.f32.gmra.mxu0 %v600
        %v747 = vpop.f32.mrf.mxu0
        %v748 = vadd.f32 %v629, %v747
        %v749 = vpop.f32.mrf.mxu0
        %750 = vmatprep.mubr.f32.mxu0 0.0
        %751 = vmatmul.mubr.f32.gmra.mxu0 %v601
        %v752 = vpop.f32.mrf.mxu0
        %v753 = vadd.f32 %v629, %v752
        %v754 = vpop.f32.mrf.mxu0
        %755 = vmatprep.mubr.f32.mxu0 0.0
        %756 = vmatmul.mubr.f32.gmra.mxu0 %v602
        %v757 = vpop.f32.mrf.mxu0
        %v758 = vadd.f32 %v629, %v757
        %v759 = vpop.f32.mrf.mxu0
        %760 = vmatprep.mubr.f32.mxu0 0.0
        %761 = vmatmul.mubr.f32.gmra.mxu0 %v603
        %v762 = vpop.f32.mrf.mxu0
        %v763 = vadd.f32 %v629, %v762
        %v764 = vpop.f32.mrf.mxu0
        %765 = vmatprep.mubr.f32.mxu0 0.0
        %766 = vmatmul.mubr.f32.gmra.mxu0 %v604
        %v767 = vpop.f32.mrf.mxu0
        %v768 = vadd.f32 %v629, %v767
        %v769 = vpop.f32.mrf.mxu0
        %770 = vmatprep.mubr.f32.mxu0 0.0
        %771 = vmatmul.mubr.f32.gmra.mxu0 %v605
        %v772 = vpop.f32.mrf.mxu0
        %v773 = vadd.f32 %v629, %v772
        %v774 = vpop.f32.mrf.mxu0
        %775 = vdwg.mxu0
        %v776 = vmul.f32 %v698, 0.01
        %v777 = vmul.f32 %v703, 0.01
        %v778 = vmul.f32 %v708, 0.01
        %v779 = vmul.f32 %v713, 0.01
        %v780 = vmul.f32 %v718, 0.01
        %v781 = vmul.f32 %v723, 0.01
        %v782 = vmul.f32 %v728, 0.01
        %v783 = vmul.f32 %v733, 0.01
        %v784 = vmul.f32 %v738, 0.01
        %v785 = vmul.f32 %v743, 0.01
        %v786 = vmul.f32 %v748, 0.01
        %v787 = vmul.f32 %v753, 0.01
        %v788 = vmul.f32 %v758, 0.01
        %v789 = vmul.f32 %v763, 0.01
        %v790 = vmul.f32 %v768, 0.01
        %v791 = vmul.f32 %v773, 0.01
        %v792 = vmax.f32 %v698, %v776
        %v793 = vmax.f32 %v703, %v777
        %v794 = vmax.f32 %v708, %v778
        %v795 = vmax.f32 %v713, %v779
        %v796 = vmax.f32 %v718, %v780
        %v797 = vmax.f32 %v723, %v781
        %v798 = vmax.f32 %v728, %v782
        %v799 = vmax.f32 %v733, %v783
        %v800 = vmax.f32 %v738, %v784
        %v801 = vmax.f32 %v743, %v785
        %v802 = vmax.f32 %v748, %v786
        %v803 = vmax.f32 %v753, %v787
        %v804 = vmax.f32 %v758, %v788
        %v805 = vmax.f32 %v763, %v789
        %v806 = vmax.f32 %v768, %v790
        %v807 = vmax.f32 %v773, %v791
        %s808 = scalar_lea.vmem [#allocation5], 384
        %v809 = vld [vmem:[%s808] sm:$0xff]
        %v810 = vld [vmem:[%s808 + $0x8] sm:$0xff]
        %v811 = vld [vmem:[%s808 + $0x10] sm:$0xff]
        %v812 = vld [vmem:[%s808 + $0x18] sm:$0xff]
        %v813 = vld [vmem:[%s808 + $0x20] sm:$0xff]
        %v814 = vld [vmem:[%s808 + $0x28] sm:$0xff]
        %v815 = vld [vmem:[%s808 + $0x30] sm:$0xff]
        %v816 = vld [vmem:[%s808 + $0x38] sm:$0xff]
        %v817 = vld [vmem:[%s808 + $0x40] sm:$0xff]
        %v818 = vld [vmem:[%s808 + $0x48] sm:$0xff]
        %v819 = vld [vmem:[%s808 + $0x50] sm:$0xff]
        %v820 = vld [vmem:[%s808 + $0x58] sm:$0xff]
        %v821 = vld [vmem:[%s808 + $0x60] sm:$0xff]
        %v822 = vld [vmem:[%s808 + $0x68] sm:$0xff]
        %v823 = vld [vmem:[%s808 + $0x70] sm:$0xff]
        %v824 = vld [vmem:[%s808 + $0x78] sm:$0xff]
        %s825 = scalar_lea.vmem [#allocation7], 3
        %v826 = vld [vmem:[%s825] sm:$0x1]
        %v828 = vlaneseq
        %v829 = vshrl.u32 %v828, 7
        %v830 = vsub.s32 0, %v829
        %v831 = vrot.slane %v826, %v830
        %833 = vmatprep.subr.mxu0 0.0
        %834 = vmatpush1.msra.mxu0 %v824
        %835 = vmatprep.subr.mxu0 0.0
        %836 = vmatpush1.msra.mxu0 %v823
        %837 = vmatprep.subr.mxu0 0.0
        %838 = vmatpush1.msra.mxu0 %v822
        %839 = vmatprep.subr.mxu0 0.0
        %840 = vmatpush1.msra.mxu0 %v821
        %841 = vmatprep.subr.mxu0 0.0
        %842 = vmatpush1.msra.mxu0 %v820
        %843 = vmatprep.subr.mxu0 0.0
        %844 = vmatpush1.msra.mxu0 %v819
        %845 = vmatprep.subr.mxu0 0.0
        %846 = vmatpush1.msra.mxu0 %v818
        %847 = vmatprep.subr.mxu0 0.0
        %848 = vmatpush1.msra.mxu0 %v817
        %849 = vmatprep.subr.mxu0 0.0
        %850 = vmatpush1.msra.mxu0 %v816
        %851 = vmatprep.subr.mxu0 0.0
        %852 = vmatpush1.msra.mxu0 %v815
        %853 = vmatprep.subr.mxu0 0.0
        %854 = vmatpush1.msra.mxu0 %v814
        %855 = vmatprep.subr.mxu0 0.0
        %856 = vmatpush1.msra.mxu0 %v813
        %857 = vmatprep.subr.mxu0 0.0
        %858 = vmatpush1.msra.mxu0 %v812
        %859 = vmatprep.subr.mxu0 0.0
        %860 = vmatpush1.msra.mxu0 %v811
        %861 = vmatprep.subr.mxu0 0.0
        %862 = vmatpush1.msra.mxu0 %v810
        %863 = vmatprep.subr.mxu0 0.0
        %864 = vmatpush1.msra.mxu0 %v809
        %865 = vmatprep.subr.mxu0 0.0
        %866 = vmatpush2.msra.mxu0 0.0
        %867 = vmatprep.subr.mxu0 0.0
        %868 = vmatpush2.msra.mxu0 0.0
        %869 = vmatprep.subr.mxu0 0.0
        %870 = vmatpush2.msra.mxu0 0.0
        %871 = vmatprep.subr.mxu0 0.0
        %872 = vmatpush2.msra.mxu0 0.0
        %873 = vmatprep.subr.mxu0 0.0
        %874 = vmatpush2.msra.mxu0 0.0
        %875 = vmatprep.subr.mxu0 0.0
        %876 = vmatpush2.msra.mxu0 0.0
        %877 = vmatprep.subr.mxu0 0.0
        %878 = vmatpush2.msra.mxu0 0.0
        %879 = vmatprep.subr.mxu0 0.0
        %880 = vmatpush2.msra.mxu0 0.0
        %881 = vmatprep.subr.mxu0 0.0
        %882 = vmatpush2.msra.mxu0 0.0
        %883 = vmatprep.subr.mxu0 0.0
        %884 = vmatpush2.msra.mxu0 0.0
        %885 = vmatprep.subr.mxu0 0.0
        %886 = vmatpush2.msra.mxu0 0.0
        %887 = vmatprep.subr.mxu0 0.0
        %888 = vmatpush2.msra.mxu0 0.0
        %889 = vmatprep.subr.mxu0 0.0
        %890 = vmatpush2.msra.mxu0 0.0
        %891 = vmatprep.subr.mxu0 0.0
        %892 = vmatpush2.msra.mxu0 0.0
        %893 = vmatprep.subr.mxu0 0.0
        %894 = vmatpush2.msra.mxu0 0.0
        %895 = vmatprep.subr.mxu0 0.0
        %896 = vmatpush2.msra.mxu0 0.0
        %897 = vmatprep.mubr.f32.mxu0 0.0
        %898 = vmatmul.mubr.f32.gmra.mxu0 %v792
        %v899 = vpop.f32.mrf.mxu0
        %v900 = vadd.f32 %v831, %v899
        %v901 = vpop.f32.mrf.mxu0
        %902 = vmatprep.mubr.f32.mxu0 0.0
        %903 = vmatmul.mubr.f32.gmra.mxu0 %v793
        %v904 = vpop.f32.mrf.mxu0
        %v905 = vadd.f32 %v831, %v904
        %v906 = vpop.f32.mrf.mxu0
        %907 = vmatprep.mubr.f32.mxu0 0.0
        %908 = vmatmul.mubr.f32.gmra.mxu0 %v794
        %v909 = vpop.f32.mrf.mxu0
        %v910 = vadd.f32 %v831, %v909
        %v911 = vpop.f32.mrf.mxu0
        %912 = vmatprep.mubr.f32.mxu0 0.0
        %913 = vmatmul.mubr.f32.gmra.mxu0 %v795
        %v914 = vpop.f32.mrf.mxu0
        %v915 = vadd.f32 %v831, %v914
        %v916 = vpop.f32.mrf.mxu0
        %917 = vmatprep.mubr.f32.mxu0 0.0
        %918 = vmatmul.mubr.f32.gmra.mxu0 %v796
        %v919 = vpop.f32.mrf.mxu0
        %v920 = vadd.f32 %v831, %v919
        %v921 = vpop.f32.mrf.mxu0
        %922 = vmatprep.mubr.f32.mxu0 0.0
        %923 = vmatmul.mubr.f32.gmra.mxu0 %v797
        %v924 = vpop.f32.mrf.mxu0
        %v925 = vadd.f32 %v831, %v924
        %v926 = vpop.f32.mrf.mxu0
        %927 = vmatprep.mubr.f32.mxu0 0.0
        %928 = vmatmul.mubr.f32.gmra.mxu0 %v798
        %v929 = vpop.f32.mrf.mxu0
        %v930 = vadd.f32 %v831, %v929
        %v931 = vpop.f32.mrf.mxu0
        %932 = vmatprep.mubr.f32.mxu0 0.0
        %933 = vmatmul.mubr.f32.gmra.mxu0 %v799
        %v934 = vpop.f32.mrf.mxu0
        %v935 = vadd.f32 %v831, %v934
        %v936 = vpop.f32.mrf.mxu0
        %937 = vmatprep.mubr.f32.mxu0 0.0
        %938 = vmatmul.mubr.f32.gmra.mxu0 %v800
        %v939 = vpop.f32.mrf.mxu0
        %v940 = vadd.f32 %v831, %v939
        %v941 = vpop.f32.mrf.mxu0
        %942 = vmatprep.mubr.f32.mxu0 0.0
        %943 = vmatmul.mubr.f32.gmra.mxu0 %v801
        %v944 = vpop.f32.mrf.mxu0
        %v945 = vadd.f32 %v831, %v944
        %v946 = vpop.f32.mrf.mxu0
        %947 = vmatprep.mubr.f32.mxu0 0.0
        %948 = vmatmul.mubr.f32.gmra.mxu0 %v802
        %v949 = vpop.f32.mrf.mxu0
        %v950 = vadd.f32 %v831, %v949
        %v951 = vpop.f32.mrf.mxu0
        %952 = vmatprep.mubr.f32.mxu0 0.0
        %953 = vmatmul.mubr.f32.gmra.mxu0 %v803
        %v954 = vpop.f32.mrf.mxu0
        %v955 = vadd.f32 %v831, %v954
        %v956 = vpop.f32.mrf.mxu0
        %957 = vmatprep.mubr.f32.mxu0 0.0
        %958 = vmatmul.mubr.f32.gmra.mxu0 %v804
        %v959 = vpop.f32.mrf.mxu0
        %v960 = vadd.f32 %v831, %v959
        %v961 = vpop.f32.mrf.mxu0
        %962 = vmatprep.mubr.f32.mxu0 0.0
        %963 = vmatmul.mubr.f32.gmra.mxu0 %v805
        %v964 = vpop.f32.mrf.mxu0
        %v965 = vadd.f32 %v831, %v964
        %v966 = vpop.f32.mrf.mxu0
        %967 = vmatprep.mubr.f32.mxu0 0.0
        %968 = vmatmul.mubr.f32.gmra.mxu0 %v806
        %v969 = vpop.f32.mrf.mxu0
        %v970 = vadd.f32 %v831, %v969
        %v971 = vpop.f32.mrf.mxu0
        %972 = vmatprep.mubr.f32.mxu0 0.0
        %973 = vmatmul.mubr.f32.gmra.mxu0 %v807
        %v974 = vpop.f32.mrf.mxu0
        %v975 = vadd.f32 %v831, %v974
        %v976 = vpop.f32.mrf.mxu0
        %977 = vdwg.mxu0
        %v978 = vmul.f32 %v900, 0.01
        %v979 = vmul.f32 %v905, 0.01
        %v980 = vmul.f32 %v910, 0.01
        %v981 = vmul.f32 %v915, 0.01
        %v982 = vmul.f32 %v920, 0.01
        %v983 = vmul.f32 %v925, 0.01
        %v984 = vmul.f32 %v930, 0.01
        %v985 = vmul.f32 %v935, 0.01
        %v986 = vmul.f32 %v940, 0.01
        %v987 = vmul.f32 %v945, 0.01
        %v988 = vmul.f32 %v950, 0.01
        %v989 = vmul.f32 %v955, 0.01
        %v990 = vmul.f32 %v960, 0.01
        %v991 = vmul.f32 %v965, 0.01
        %v992 = vmul.f32 %v970, 0.01
        %v993 = vmul.f32 %v975, 0.01
        %v994 = vmax.f32 %v900, %v978
        %v995 = vmax.f32 %v905, %v979
        %v996 = vmax.f32 %v910, %v980
        %v997 = vmax.f32 %v915, %v981
        %v998 = vmax.f32 %v920, %v982
        %v999 = vmax.f32 %v925, %v983
        %v1000 = vmax.f32 %v930, %v984
        %v1001 = vmax.f32 %v935, %v985
        %v1002 = vmax.f32 %v940, %v986
        %v1003 = vmax.f32 %v945, %v987
        %v1004 = vmax.f32 %v950, %v988
        %v1005 = vmax.f32 %v955, %v989
        %v1006 = vmax.f32 %v960, %v990
        %v1007 = vmax.f32 %v965, %v991
        %v1008 = vmax.f32 %v970, %v992
        %v1009 = vmax.f32 %v975, %v993
        %s1010 = scalar_lea.vmem [#allocation5], 512
        %v1011 = vld [vmem:[%s1010] sm:$0xff]
        %v1012 = vld [vmem:[%s1010 + $0x8] sm:$0xff]
        %v1013 = vld [vmem:[%s1010 + $0x10] sm:$0xff]
        %v1014 = vld [vmem:[%s1010 + $0x18] sm:$0xff]
        %v1015 = vld [vmem:[%s1010 + $0x20] sm:$0xff]
        %v1016 = vld [vmem:[%s1010 + $0x28] sm:$0xff]
        %v1017 = vld [vmem:[%s1010 + $0x30] sm:$0xff]
        %v1018 = vld [vmem:[%s1010 + $0x38] sm:$0xff]
        %v1019 = vld [vmem:[%s1010 + $0x40] sm:$0xff]
        %v1020 = vld [vmem:[%s1010 + $0x48] sm:$0xff]
        %v1021 = vld [vmem:[%s1010 + $0x50] sm:$0xff]
        %v1022 = vld [vmem:[%s1010 + $0x58] sm:$0xff]
        %v1023 = vld [vmem:[%s1010 + $0x60] sm:$0xff]
        %v1024 = vld [vmem:[%s1010 + $0x68] sm:$0xff]
        %v1025 = vld [vmem:[%s1010 + $0x70] sm:$0xff]
        %v1026 = vld [vmem:[%s1010 + $0x78] sm:$0xff]
        %s1027 = scalar_lea.vmem [#allocation7], 4
        %v1028 = vld [vmem:[%s1027] sm:$0x1]
        %v1030 = vlaneseq
        %v1031 = vshrl.u32 %v1030, 7
        %v1032 = vsub.s32 0, %v1031
        %v1033 = vrot.slane %v1028, %v1032
        %1035 = vmatprep.subr.mxu0 0.0
        %1036 = vmatpush1.msra.mxu0 %v1026
        %1037 = vmatprep.subr.mxu0 0.0
        %1038 = vmatpush1.msra.mxu0 %v1025
        %1039 = vmatprep.subr.mxu0 0.0
        %1040 = vmatpush1.msra.mxu0 %v1024
        %1041 = vmatprep.subr.mxu0 0.0
        %1042 = vmatpush1.msra.mxu0 %v1023
        %1043 = vmatprep.subr.mxu0 0.0
        %1044 = vmatpush1.msra.mxu0 %v1022
        %1045 = vmatprep.subr.mxu0 0.0
        %1046 = vmatpush1.msra.mxu0 %v1021
        %1047 = vmatprep.subr.mxu0 0.0
        %1048 = vmatpush1.msra.mxu0 %v1020
        %1049 = vmatprep.subr.mxu0 0.0
        %1050 = vmatpush1.msra.mxu0 %v1019
        %1051 = vmatprep.subr.mxu0 0.0
        %1052 = vmatpush1.msra.mxu0 %v1018
        %1053 = vmatprep.subr.mxu0 0.0
        %1054 = vmatpush1.msra.mxu0 %v1017
        %1055 = vmatprep.subr.mxu0 0.0
        %1056 = vmatpush1.msra.mxu0 %v1016
        %1057 = vmatprep.subr.mxu0 0.0
        %1058 = vmatpush1.msra.mxu0 %v1015
        %1059 = vmatprep.subr.mxu0 0.0
        %1060 = vmatpush1.msra.mxu0 %v1014
        %1061 = vmatprep.subr.mxu0 0.0
        %1062 = vmatpush1.msra.mxu0 %v1013
        %1063 = vmatprep.subr.mxu0 0.0
        %1064 = vmatpush1.msra.mxu0 %v1012
        %1065 = vmatprep.subr.mxu0 0.0
        %1066 = vmatpush1.msra.mxu0 %v1011
        %1067 = vmatprep.subr.mxu0 0.0
        %1068 = vmatpush2.msra.mxu0 0.0
        %1069 = vmatprep.subr.mxu0 0.0
        %1070 = vmatpush2.msra.mxu0 0.0
        %1071 = vmatprep.subr.mxu0 0.0
        %1072 = vmatpush2.msra.mxu0 0.0
        %1073 = vmatprep.subr.mxu0 0.0
        %1074 = vmatpush2.msra.mxu0 0.0
        %1075 = vmatprep.subr.mxu0 0.0
        %1076 = vmatpush2.msra.mxu0 0.0
        %1077 = vmatprep.subr.mxu0 0.0
        %1078 = vmatpush2.msra.mxu0 0.0
        %1079 = vmatprep.subr.mxu0 0.0
        %1080 = vmatpush2.msra.mxu0 0.0
        %1081 = vmatprep.subr.mxu0 0.0
        %1082 = vmatpush2.msra.mxu0 0.0
        %1083 = vmatprep.subr.mxu0 0.0
        %1084 = vmatpush2.msra.mxu0 0.0
        %1085 = vmatprep.subr.mxu0 0.0
        %1086 = vmatpush2.msra.mxu0 0.0
        %1087 = vmatprep.subr.mxu0 0.0
        %1088 = vmatpush2.msra.mxu0 0.0
        %1089 = vmatprep.subr.mxu0 0.0
        %1090 = vmatpush2.msra.mxu0 0.0
        %1091 = vmatprep.subr.mxu0 0.0
        %1092 = vmatpush2.msra.mxu0 0.0
        %1093 = vmatprep.subr.mxu0 0.0
        %1094 = vmatpush2.msra.mxu0 0.0
        %1095 = vmatprep.subr.mxu0 0.0
        %1096 = vmatpush2.msra.mxu0 0.0
        %1097 = vmatprep.subr.mxu0 0.0
        %1098 = vmatpush2.msra.mxu0 0.0
        %1099 = vmatprep.mubr.f32.mxu0 0.0
        %1100 = vmatmul.mubr.f32.gmra.mxu0 %v994
        %v1101 = vpop.f32.mrf.mxu0
        %v1102 = vadd.f32 %v1033, %v1101
        %v1103 = vpop.f32.mrf.mxu0
        %1104 = vmatprep.mubr.f32.mxu0 0.0
        %1105 = vmatmul.mubr.f32.gmra.mxu0 %v995
        %v1106 = vpop.f32.mrf.mxu0
        %v1107 = vadd.f32 %v1033, %v1106
        %v1108 = vpop.f32.mrf.mxu0
        %1109 = vmatprep.mubr.f32.mxu0 0.0
        %1110 = vmatmul.mubr.f32.gmra.mxu0 %v996
        %v1111 = vpop.f32.mrf.mxu0
        %v1112 = vadd.f32 %v1033, %v1111
        %v1113 = vpop.f32.mrf.mxu0
        %1114 = vmatprep.mubr.f32.mxu0 0.0
        %1115 = vmatmul.mubr.f32.gmra.mxu0 %v997
        %v1116 = vpop.f32.mrf.mxu0
        %v1117 = vadd.f32 %v1033, %v1116
        %v1118 = vpop.f32.mrf.mxu0
        %1119 = vmatprep.mubr.f32.mxu0 0.0
        %1120 = vmatmul.mubr.f32.gmra.mxu0 %v998
        %v1121 = vpop.f32.mrf.mxu0
        %v1122 = vadd.f32 %v1033, %v1121
        %v1123 = vpop.f32.mrf.mxu0
        %1124 = vmatprep.mubr.f32.mxu0 0.0
        %1125 = vmatmul.mubr.f32.gmra.mxu0 %v999
        %v1126 = vpop.f32.mrf.mxu0
        %v1127 = vadd.f32 %v1033, %v1126
        %v1128 = vpop.f32.mrf.mxu0
        %1129 = vmatprep.mubr.f32.mxu0 0.0
        %1130 = vmatmul.mubr.f32.gmra.mxu0 %v1000
        %v1131 = vpop.f32.mrf.mxu0
        %v1132 = vadd.f32 %v1033, %v1131
        %v1133 = vpop.f32.mrf.mxu0
        %1134 = vmatprep.mubr.f32.mxu0 0.0
        %1135 = vmatmul.mubr.f32.gmra.mxu0 %v1001
        %v1136 = vpop.f32.mrf.mxu0
        %v1137 = vadd.f32 %v1033, %v1136
        %v1138 = vpop.f32.mrf.mxu0
        %1139 = vmatprep.mubr.f32.mxu0 0.0
        %1140 = vmatmul.mubr.f32.gmra.mxu0 %v1002
        %v1141 = vpop.f32.mrf.mxu0
        %v1142 = vadd.f32 %v1033, %v1141
        %v1143 = vpop.f32.mrf.mxu0
        %1144 = vmatprep.mubr.f32.mxu0 0.0
        %1145 = vmatmul.mubr.f32.gmra.mxu0 %v1003
        %v1146 = vpop.f32.mrf.mxu0
        %v1147 = vadd.f32 %v1033, %v1146
        %v1148 = vpop.f32.mrf.mxu0
        %1149 = vmatprep.mubr.f32.mxu0 0.0
        %1150 = vmatmul.mubr.f32.gmra.mxu0 %v1004
        %v1151 = vpop.f32.mrf.mxu0
        %v1152 = vadd.f32 %v1033, %v1151
        %v1153 = vpop.f32.mrf.mxu0
        %1154 = vmatprep.mubr.f32.mxu0 0.0
        %1155 = vmatmul.mubr.f32.gmra.mxu0 %v1005
        %v1156 = vpop.f32.mrf.mxu0
        %v1157 = vadd.f32 %v1033, %v1156
        %v1158 = vpop.f32.mrf.mxu0
        %1159 = vmatprep.mubr.f32.mxu0 0.0
        %1160 = vmatmul.mubr.f32.gmra.mxu0 %v1006
        %v1161 = vpop.f32.mrf.mxu0
        %v1162 = vadd.f32 %v1033, %v1161
        %v1163 = vpop.f32.mrf.mxu0
        %1164 = vmatprep.mubr.f32.mxu0 0.0
        %1165 = vmatmul.mubr.f32.gmra.mxu0 %v1007
        %v1166 = vpop.f32.mrf.mxu0
        %v1167 = vadd.f32 %v1033, %v1166
        %v1168 = vpop.f32.mrf.mxu0
        %1169 = vmatprep.mubr.f32.mxu0 0.0
        %1170 = vmatmul.mubr.f32.gmra.mxu0 %v1008
        %v1171 = vpop.f32.mrf.mxu0
        %v1172 = vadd.f32 %v1033, %v1171
        %v1173 = vpop.f32.mrf.mxu0
        %1174 = vmatprep.mubr.f32.mxu0 0.0
        %1175 = vmatmul.mubr.f32.gmra.mxu0 %v1009
        %v1176 = vpop.f32.mrf.mxu0
        %v1177 = vadd.f32 %v1033, %v1176
        %v1178 = vpop.f32.mrf.mxu0
        %1179 = vdwg.mxu0
        %v1180 = vmul.f32 %v1102, 0.01
        %v1181 = vmul.f32 %v1107, 0.01
        %v1182 = vmul.f32 %v1112, 0.01
        %v1183 = vmul.f32 %v1117, 0.01
        %v1184 = vmul.f32 %v1122, 0.01
        %v1185 = vmul.f32 %v1127, 0.01
        %v1186 = vmul.f32 %v1132, 0.01
        %v1187 = vmul.f32 %v1137, 0.01
        %v1188 = vmul.f32 %v1142, 0.01
        %v1189 = vmul.f32 %v1147, 0.01
        %v1190 = vmul.f32 %v1152, 0.01
        %v1191 = vmul.f32 %v1157, 0.01
        %v1192 = vmul.f32 %v1162, 0.01
        %v1193 = vmul.f32 %v1167, 0.01
        %v1194 = vmul.f32 %v1172, 0.01
        %v1195 = vmul.f32 %v1177, 0.01
        %v1196 = vmax.f32 %v1102, %v1180
        %v1197 = vmax.f32 %v1107, %v1181
        %v1198 = vmax.f32 %v1112, %v1182
        %v1199 = vmax.f32 %v1117, %v1183
        %v1200 = vmax.f32 %v1122, %v1184
        %v1201 = vmax.f32 %v1127, %v1185
        %v1202 = vmax.f32 %v1132, %v1186
        %v1203 = vmax.f32 %v1137, %v1187
        %v1204 = vmax.f32 %v1142, %v1188
        %v1205 = vmax.f32 %v1147, %v1189
        %v1206 = vmax.f32 %v1152, %v1190
        %v1207 = vmax.f32 %v1157, %v1191
        %v1208 = vmax.f32 %v1162, %v1192
        %v1209 = vmax.f32 %v1167, %v1193
        %v1210 = vmax.f32 %v1172, %v1194
        %v1211 = vmax.f32 %v1177, %v1195
        %s1212 = scalar_lea.vmem [#allocation5], 640
        %v1213 = vld [vmem:[%s1212] sm:$0xff]
        %v1214 = vld [vmem:[%s1212 + $0x8] sm:$0xff]
        %v1215 = vld [vmem:[%s1212 + $0x10] sm:$0xff]
        %v1216 = vld [vmem:[%s1212 + $0x18] sm:$0xff]
        %v1217 = vld [vmem:[%s1212 + $0x20] sm:$0xff]
        %v1218 = vld [vmem:[%s1212 + $0x28] sm:$0xff]
        %v1219 = vld [vmem:[%s1212 + $0x30] sm:$0xff]
        %v1220 = vld [vmem:[%s1212 + $0x38] sm:$0xff]
        %v1221 = vld [vmem:[%s1212 + $0x40] sm:$0xff]
        %v1222 = vld [vmem:[%s1212 + $0x48] sm:$0xff]
        %v1223 = vld [vmem:[%s1212 + $0x50] sm:$0xff]
        %v1224 = vld [vmem:[%s1212 + $0x58] sm:$0xff]
        %v1225 = vld [vmem:[%s1212 + $0x60] sm:$0xff]
        %v1226 = vld [vmem:[%s1212 + $0x68] sm:$0xff]
        %v1227 = vld [vmem:[%s1212 + $0x70] sm:$0xff]
        %v1228 = vld [vmem:[%s1212 + $0x78] sm:$0xff]
        %s1229 = scalar_lea.vmem [#allocation7], 5
        %v1230 = vld [vmem:[%s1229] sm:$0x1]
        %v1232 = vlaneseq
        %v1233 = vshrl.u32 %v1232, 7
        %v1234 = vsub.s32 0, %v1233
        %v1235 = vrot.slane %v1230, %v1234
        %1237 = vmatprep.subr.mxu0 0.0
        %1238 = vmatpush1.msra.mxu0 %v1228
        %1239 = vmatprep.subr.mxu0 0.0
        %1240 = vmatpush1.msra.mxu0 %v1227
        %1241 = vmatprep.subr.mxu0 0.0
        %1242 = vmatpush1.msra.mxu0 %v1226
        %1243 = vmatprep.subr.mxu0 0.0
        %1244 = vmatpush1.msra.mxu0 %v1225
        %1245 = vmatprep.subr.mxu0 0.0
        %1246 = vmatpush1.msra.mxu0 %v1224
        %1247 = vmatprep.subr.mxu0 0.0
        %1248 = vmatpush1.msra.mxu0 %v1223
        %1249 = vmatprep.subr.mxu0 0.0
        %1250 = vmatpush1.msra.mxu0 %v1222
        %1251 = vmatprep.subr.mxu0 0.0
        %1252 = vmatpush1.msra.mxu0 %v1221
        %1253 = vmatprep.subr.mxu0 0.0
        %1254 = vmatpush1.msra.mxu0 %v1220
        %1255 = vmatprep.subr.mxu0 0.0
        %1256 = vmatpush1.msra.mxu0 %v1219
        %1257 = vmatprep.subr.mxu0 0.0
        %1258 = vmatpush1.msra.mxu0 %v1218
        %1259 = vmatprep.subr.mxu0 0.0
        %1260 = vmatpush1.msra.mxu0 %v1217
        %1261 = vmatprep.subr.mxu0 0.0
        %1262 = vmatpush1.msra.mxu0 %v1216
        %1263 = vmatprep.subr.mxu0 0.0
        %1264 = vmatpush1.msra.mxu0 %v1215
        %1265 = vmatprep.subr.mxu0 0.0
        %1266 = vmatpush1.msra.mxu0 %v1214
        %1267 = vmatprep.subr.mxu0 0.0
        %1268 = vmatpush1.msra.mxu0 %v1213
        %1269 = vmatprep.subr.mxu0 0.0
        %1270 = vmatpush2.msra.mxu0 0.0
        %1271 = vmatprep.subr.mxu0 0.0
        %1272 = vmatpush2.msra.mxu0 0.0
        %1273 = vmatprep.subr.mxu0 0.0
        %1274 = vmatpush2.msra.mxu0 0.0
        %1275 = vmatprep.subr.mxu0 0.0
        %1276 = vmatpush2.msra.mxu0 0.0
        %1277 = vmatprep.subr.mxu0 0.0
        %1278 = vmatpush2.msra.mxu0 0.0
        %1279 = vmatprep.subr.mxu0 0.0
        %1280 = vmatpush2.msra.mxu0 0.0
        %1281 = vmatprep.subr.mxu0 0.0
        %1282 = vmatpush2.msra.mxu0 0.0
        %1283 = vmatprep.subr.mxu0 0.0
        %1284 = vmatpush2.msra.mxu0 0.0
        %1285 = vmatprep.subr.mxu0 0.0
        %1286 = vmatpush2.msra.mxu0 0.0
        %1287 = vmatprep.subr.mxu0 0.0
        %1288 = vmatpush2.msra.mxu0 0.0
        %1289 = vmatprep.subr.mxu0 0.0
        %1290 = vmatpush2.msra.mxu0 0.0
        %1291 = vmatprep.subr.mxu0 0.0
        %1292 = vmatpush2.msra.mxu0 0.0
        %1293 = vmatprep.subr.mxu0 0.0
        %1294 = vmatpush2.msra.mxu0 0.0
        %1295 = vmatprep.subr.mxu0 0.0
        %1296 = vmatpush2.msra.mxu0 0.0
        %1297 = vmatprep.subr.mxu0 0.0
        %1298 = vmatpush2.msra.mxu0 0.0
        %1299 = vmatprep.subr.mxu0 0.0
        %1300 = vmatpush2.msra.mxu0 0.0
        %1301 = vmatprep.mubr.f32.mxu0 0.0
        %1302 = vmatmul.mubr.f32.gmra.mxu0 %v1196
        %v1303 = vpop.f32.mrf.mxu0
        %v1304 = vadd.f32 %v1235, %v1303
        %v1305 = vpop.f32.mrf.mxu0
        %1306 = vmatprep.mubr.f32.mxu0 0.0
        %1307 = vmatmul.mubr.f32.gmra.mxu0 %v1197
        %v1308 = vpop.f32.mrf.mxu0
        %v1309 = vadd.f32 %v1235, %v1308
        %v1310 = vpop.f32.mrf.mxu0
        %1311 = vmatprep.mubr.f32.mxu0 0.0
        %1312 = vmatmul.mubr.f32.gmra.mxu0 %v1198
        %v1313 = vpop.f32.mrf.mxu0
        %v1314 = vadd.f32 %v1235, %v1313
        %v1315 = vpop.f32.mrf.mxu0
        %1316 = vmatprep.mubr.f32.mxu0 0.0
        %1317 = vmatmul.mubr.f32.gmra.mxu0 %v1199
        %v1318 = vpop.f32.mrf.mxu0
        %v1319 = vadd.f32 %v1235, %v1318
        %v1320 = vpop.f32.mrf.mxu0
        %1321 = vmatprep.mubr.f32.mxu0 0.0
        %1322 = vmatmul.mubr.f32.gmra.mxu0 %v1200
        %v1323 = vpop.f32.mrf.mxu0
        %v1324 = vadd.f32 %v1235, %v1323
        %v1325 = vpop.f32.mrf.mxu0
        %1326 = vmatprep.mubr.f32.mxu0 0.0
        %1327 = vmatmul.mubr.f32.gmra.mxu0 %v1201
        %v1328 = vpop.f32.mrf.mxu0
        %v1329 = vadd.f32 %v1235, %v1328
        %v1330 = vpop.f32.mrf.mxu0
        %1331 = vmatprep.mubr.f32.mxu0 0.0
        %1332 = vmatmul.mubr.f32.gmra.mxu0 %v1202
        %v1333 = vpop.f32.mrf.mxu0
        %v1334 = vadd.f32 %v1235, %v1333
        %v1335 = vpop.f32.mrf.mxu0
        %1336 = vmatprep.mubr.f32.mxu0 0.0
        %1337 = vmatmul.mubr.f32.gmra.mxu0 %v1203
        %v1338 = vpop.f32.mrf.mxu0
        %v1339 = vadd.f32 %v1235, %v1338
        %v1340 = vpop.f32.mrf.mxu0
        %1341 = vmatprep.mubr.f32.mxu0 0.0
        %1342 = vmatmul.mubr.f32.gmra.mxu0 %v1204
        %v1343 = vpop.f32.mrf.mxu0
        %v1344 = vadd.f32 %v1235, %v1343
        %v1345 = vpop.f32.mrf.mxu0
        %1346 = vmatprep.mubr.f32.mxu0 0.0
        %1347 = vmatmul.mubr.f32.gmra.mxu0 %v1205
        %v1348 = vpop.f32.mrf.mxu0
        %v1349 = vadd.f32 %v1235, %v1348
        %v1350 = vpop.f32.mrf.mxu0
        %1351 = vmatprep.mubr.f32.mxu0 0.0
        %1352 = vmatmul.mubr.f32.gmra.mxu0 %v1206
        %v1353 = vpop.f32.mrf.mxu0
        %v1354 = vadd.f32 %v1235, %v1353
        %v1355 = vpop.f32.mrf.mxu0
        %1356 = vmatprep.mubr.f32.mxu0 0.0
        %1357 = vmatmul.mubr.f32.gmra.mxu0 %v1207
        %v1358 = vpop.f32.mrf.mxu0
        %v1359 = vadd.f32 %v1235, %v1358
        %v1360 = vpop.f32.mrf.mxu0
        %1361 = vmatprep.mubr.f32.mxu0 0.0
        %1362 = vmatmul.mubr.f32.gmra.mxu0 %v1208
        %v1363 = vpop.f32.mrf.mxu0
        %v1364 = vadd.f32 %v1235, %v1363
        %v1365 = vpop.f32.mrf.mxu0
        %1366 = vmatprep.mubr.f32.mxu0 0.0
        %1367 = vmatmul.mubr.f32.gmra.mxu0 %v1209
        %v1368 = vpop.f32.mrf.mxu0
        %v1369 = vadd.f32 %v1235, %v1368
        %v1370 = vpop.f32.mrf.mxu0
        %1371 = vmatprep.mubr.f32.mxu0 0.0
        %1372 = vmatmul.mubr.f32.gmra.mxu0 %v1210
        %v1373 = vpop.f32.mrf.mxu0
        %v1374 = vadd.f32 %v1235, %v1373
        %v1375 = vpop.f32.mrf.mxu0
        %1376 = vmatprep.mubr.f32.mxu0 0.0
        %1377 = vmatmul.mubr.f32.gmra.mxu0 %v1211
        %v1378 = vpop.f32.mrf.mxu0
        %v1379 = vadd.f32 %v1235, %v1378
        %v1380 = vpop.f32.mrf.mxu0
        %1381 = vdwg.mxu0
        %v1382 = vmul.f32 %v1304, 0.01
        %v1383 = vmul.f32 %v1309, 0.01
        %v1384 = vmul.f32 %v1314, 0.01
        %v1385 = vmul.f32 %v1319, 0.01
        %v1386 = vmul.f32 %v1324, 0.01
        %v1387 = vmul.f32 %v1329, 0.01
        %v1388 = vmul.f32 %v1334, 0.01
        %v1389 = vmul.f32 %v1339, 0.01
        %v1390 = vmul.f32 %v1344, 0.01
        %v1391 = vmul.f32 %v1349, 0.01
        %v1392 = vmul.f32 %v1354, 0.01
        %v1393 = vmul.f32 %v1359, 0.01
        %v1394 = vmul.f32 %v1364, 0.01
        %v1395 = vmul.f32 %v1369, 0.01
        %v1396 = vmul.f32 %v1374, 0.01
        %v1397 = vmul.f32 %v1379, 0.01
        %v1398 = vmax.f32 %v1304, %v1382
        %v1399 = vmax.f32 %v1309, %v1383
        %v1400 = vmax.f32 %v1314, %v1384
        %v1401 = vmax.f32 %v1319, %v1385
        %v1402 = vmax.f32 %v1324, %v1386
        %v1403 = vmax.f32 %v1329, %v1387
        %v1404 = vmax.f32 %v1334, %v1388
        %v1405 = vmax.f32 %v1339, %v1389
        %v1406 = vmax.f32 %v1344, %v1390
        %v1407 = vmax.f32 %v1349, %v1391
        %v1408 = vmax.f32 %v1354, %v1392
        %v1409 = vmax.f32 %v1359, %v1393
        %v1410 = vmax.f32 %v1364, %v1394
        %v1411 = vmax.f32 %v1369, %v1395
        %v1412 = vmax.f32 %v1374, %v1396
        %v1413 = vmax.f32 %v1379, %v1397
        %s1414 = scalar_lea.vmem [#allocation5], 768
        %v1415 = vld [vmem:[%s1414] sm:$0xff]
        %v1416 = vld [vmem:[%s1414 + $0x8] sm:$0xff]
        %v1417 = vld [vmem:[%s1414 + $0x10] sm:$0xff]
        %v1418 = vld [vmem:[%s1414 + $0x18] sm:$0xff]
        %v1419 = vld [vmem:[%s1414 + $0x20] sm:$0xff]
        %v1420 = vld [vmem:[%s1414 + $0x28] sm:$0xff]
        %v1421 = vld [vmem:[%s1414 + $0x30] sm:$0xff]
        %v1422 = vld [vmem:[%s1414 + $0x38] sm:$0xff]
        %v1423 = vld [vmem:[%s1414 + $0x40] sm:$0xff]
        %v1424 = vld [vmem:[%s1414 + $0x48] sm:$0xff]
        %v1425 = vld [vmem:[%s1414 + $0x50] sm:$0xff]
        %v1426 = vld [vmem:[%s1414 + $0x58] sm:$0xff]
        %v1427 = vld [vmem:[%s1414 + $0x60] sm:$0xff]
        %v1428 = vld [vmem:[%s1414 + $0x68] sm:$0xff]
        %v1429 = vld [vmem:[%s1414 + $0x70] sm:$0xff]
        %v1430 = vld [vmem:[%s1414 + $0x78] sm:$0xff]
        %s1431 = scalar_lea.vmem [#allocation7], 6
        %v1432 = vld [vmem:[%s1431] sm:$0x1]
        %v1434 = vlaneseq
        %v1435 = vshrl.u32 %v1434, 7
        %v1436 = vsub.s32 0, %v1435
        %v1437 = vrot.slane %v1432, %v1436
        %1439 = vmatprep.subr.mxu0 0.0
        %1440 = vmatpush1.msra.mxu0 %v1430
        %1441 = vmatprep.subr.mxu0 0.0
        %1442 = vmatpush1.msra.mxu0 %v1429
        %1443 = vmatprep.subr.mxu0 0.0
        %1444 = vmatpush1.msra.mxu0 %v1428
        %1445 = vmatprep.subr.mxu0 0.0
        %1446 = vmatpush1.msra.mxu0 %v1427
        %1447 = vmatprep.subr.mxu0 0.0
        %1448 = vmatpush1.msra.mxu0 %v1426
        %1449 = vmatprep.subr.mxu0 0.0
        %1450 = vmatpush1.msra.mxu0 %v1425
        %1451 = vmatprep.subr.mxu0 0.0
        %1452 = vmatpush1.msra.mxu0 %v1424
        %1453 = vmatprep.subr.mxu0 0.0
        %1454 = vmatpush1.msra.mxu0 %v1423
        %1455 = vmatprep.subr.mxu0 0.0
        %1456 = vmatpush1.msra.mxu0 %v1422
        %1457 = vmatprep.subr.mxu0 0.0
        %1458 = vmatpush1.msra.mxu0 %v1421
        %1459 = vmatprep.subr.mxu0 0.0
        %1460 = vmatpush1.msra.mxu0 %v1420
        %1461 = vmatprep.subr.mxu0 0.0
        %1462 = vmatpush1.msra.mxu0 %v1419
        %1463 = vmatprep.subr.mxu0 0.0
        %1464 = vmatpush1.msra.mxu0 %v1418
        %1465 = vmatprep.subr.mxu0 0.0
        %1466 = vmatpush1.msra.mxu0 %v1417
        %1467 = vmatprep.subr.mxu0 0.0
        %1468 = vmatpush1.msra.mxu0 %v1416
        %1469 = vmatprep.subr.mxu0 0.0
        %1470 = vmatpush1.msra.mxu0 %v1415
        %1471 = vmatprep.subr.mxu0 0.0
        %1472 = vmatpush2.msra.mxu0 0.0
        %1473 = vmatprep.subr.mxu0 0.0
        %1474 = vmatpush2.msra.mxu0 0.0
        %1475 = vmatprep.subr.mxu0 0.0
        %1476 = vmatpush2.msra.mxu0 0.0
        %1477 = vmatprep.subr.mxu0 0.0
        %1478 = vmatpush2.msra.mxu0 0.0
        %1479 = vmatprep.subr.mxu0 0.0
        %1480 = vmatpush2.msra.mxu0 0.0
        %1481 = vmatprep.subr.mxu0 0.0
        %1482 = vmatpush2.msra.mxu0 0.0
        %1483 = vmatprep.subr.mxu0 0.0
        %1484 = vmatpush2.msra.mxu0 0.0
        %1485 = vmatprep.subr.mxu0 0.0
        %1486 = vmatpush2.msra.mxu0 0.0
        %1487 = vmatprep.subr.mxu0 0.0
        %1488 = vmatpush2.msra.mxu0 0.0
        %1489 = vmatprep.subr.mxu0 0.0
        %1490 = vmatpush2.msra.mxu0 0.0
        %1491 = vmatprep.subr.mxu0 0.0
        %1492 = vmatpush2.msra.mxu0 0.0
        %1493 = vmatprep.subr.mxu0 0.0
        %1494 = vmatpush2.msra.mxu0 0.0
        %1495 = vmatprep.subr.mxu0 0.0
        %1496 = vmatpush2.msra.mxu0 0.0
        %1497 = vmatprep.subr.mxu0 0.0
        %1498 = vmatpush2.msra.mxu0 0.0
        %1499 = vmatprep.subr.mxu0 0.0
        %1500 = vmatpush2.msra.mxu0 0.0
        %1501 = vmatprep.subr.mxu0 0.0
        %1502 = vmatpush2.msra.mxu0 0.0
        %1503 = vmatprep.mubr.f32.mxu0 0.0
        %1504 = vmatmul.mubr.f32.gmra.mxu0 %v1398
        %v1505 = vpop.f32.mrf.mxu0
        %v1506 = vadd.f32 %v1437, %v1505
        %v1507 = vpop.f32.mrf.mxu0
        %1508 = vmatprep.mubr.f32.mxu0 0.0
        %1509 = vmatmul.mubr.f32.gmra.mxu0 %v1399
        %v1510 = vpop.f32.mrf.mxu0
        %v1511 = vadd.f32 %v1437, %v1510
        %v1512 = vpop.f32.mrf.mxu0
        %1513 = vmatprep.mubr.f32.mxu0 0.0
        %1514 = vmatmul.mubr.f32.gmra.mxu0 %v1400
        %v1515 = vpop.f32.mrf.mxu0
        %v1516 = vadd.f32 %v1437, %v1515
        %v1517 = vpop.f32.mrf.mxu0
        %1518 = vmatprep.mubr.f32.mxu0 0.0
        %1519 = vmatmul.mubr.f32.gmra.mxu0 %v1401
        %v1520 = vpop.f32.mrf.mxu0
        %v1521 = vadd.f32 %v1437, %v1520
        %v1522 = vpop.f32.mrf.mxu0
        %1523 = vmatprep.mubr.f32.mxu0 0.0
        %1524 = vmatmul.mubr.f32.gmra.mxu0 %v1402
        %v1525 = vpop.f32.mrf.mxu0
        %v1526 = vadd.f32 %v1437, %v1525
        %v1527 = vpop.f32.mrf.mxu0
        %1528 = vmatprep.mubr.f32.mxu0 0.0
        %1529 = vmatmul.mubr.f32.gmra.mxu0 %v1403
        %v1530 = vpop.f32.mrf.mxu0
        %v1531 = vadd.f32 %v1437, %v1530
        %v1532 = vpop.f32.mrf.mxu0
        %1533 = vmatprep.mubr.f32.mxu0 0.0
        %1534 = vmatmul.mubr.f32.gmra.mxu0 %v1404
        %v1535 = vpop.f32.mrf.mxu0
        %v1536 = vadd.f32 %v1437, %v1535
        %v1537 = vpop.f32.mrf.mxu0
        %1538 = vmatprep.mubr.f32.mxu0 0.0
        %1539 = vmatmul.mubr.f32.gmra.mxu0 %v1405
        %v1540 = vpop.f32.mrf.mxu0
        %v1541 = vadd.f32 %v1437, %v1540
        %v1542 = vpop.f32.mrf.mxu0
        %1543 = vmatprep.mubr.f32.mxu0 0.0
        %1544 = vmatmul.mubr.f32.gmra.mxu0 %v1406
        %v1545 = vpop.f32.mrf.mxu0
        %v1546 = vadd.f32 %v1437, %v1545
        %v1547 = vpop.f32.mrf.mxu0
        %1548 = vmatprep.mubr.f32.mxu0 0.0
        %1549 = vmatmul.mubr.f32.gmra.mxu0 %v1407
        %v1550 = vpop.f32.mrf.mxu0
        %v1551 = vadd.f32 %v1437, %v1550
        %v1552 = vpop.f32.mrf.mxu0
        %1553 = vmatprep.mubr.f32.mxu0 0.0
        %1554 = vmatmul.mubr.f32.gmra.mxu0 %v1408
        %v1555 = vpop.f32.mrf.mxu0
        %v1556 = vadd.f32 %v1437, %v1555
        %v1557 = vpop.f32.mrf.mxu0
        %1558 = vmatprep.mubr.f32.mxu0 0.0
        %1559 = vmatmul.mubr.f32.gmra.mxu0 %v1409
        %v1560 = vpop.f32.mrf.mxu0
        %v1561 = vadd.f32 %v1437, %v1560
        %v1562 = vpop.f32.mrf.mxu0
        %1563 = vmatprep.mubr.f32.mxu0 0.0
        %1564 = vmatmul.mubr.f32.gmra.mxu0 %v1410
        %v1565 = vpop.f32.mrf.mxu0
        %v1566 = vadd.f32 %v1437, %v1565
        %v1567 = vpop.f32.mrf.mxu0
        %1568 = vmatprep.mubr.f32.mxu0 0.0
        %1569 = vmatmul.mubr.f32.gmra.mxu0 %v1411
        %v1570 = vpop.f32.mrf.mxu0
        %v1571 = vadd.f32 %v1437, %v1570
        %v1572 = vpop.f32.mrf.mxu0
        %1573 = vmatprep.mubr.f32.mxu0 0.0
        %1574 = vmatmul.mubr.f32.gmra.mxu0 %v1412
        %v1575 = vpop.f32.mrf.mxu0
        %v1576 = vadd.f32 %v1437, %v1575
        %v1577 = vpop.f32.mrf.mxu0
        %1578 = vmatprep.mubr.f32.mxu0 0.0
        %1579 = vmatmul.mubr.f32.gmra.mxu0 %v1413
        %v1580 = vpop.f32.mrf.mxu0
        %v1581 = vadd.f32 %v1437, %v1580
        %v1582 = vpop.f32.mrf.mxu0
        %1583 = vdwg.mxu0
        %v1584 = vmul.f32 %v1506, 0.01
        %v1585 = vmul.f32 %v1511, 0.01
        %v1586 = vmul.f32 %v1516, 0.01
        %v1587 = vmul.f32 %v1521, 0.01
        %v1588 = vmul.f32 %v1526, 0.01
        %v1589 = vmul.f32 %v1531, 0.01
        %v1590 = vmul.f32 %v1536, 0.01
        %v1591 = vmul.f32 %v1541, 0.01
        %v1592 = vmul.f32 %v1546, 0.01
        %v1593 = vmul.f32 %v1551, 0.01
        %v1594 = vmul.f32 %v1556, 0.01
        %v1595 = vmul.f32 %v1561, 0.01
        %v1596 = vmul.f32 %v1566, 0.01
        %v1597 = vmul.f32 %v1571, 0.01
        %v1598 = vmul.f32 %v1576, 0.01
        %v1599 = vmul.f32 %v1581, 0.01
        %v1600 = vmax.f32 %v1506, %v1584
        %v1601 = vmax.f32 %v1511, %v1585
        %v1602 = vmax.f32 %v1516, %v1586
        %v1603 = vmax.f32 %v1521, %v1587
        %v1604 = vmax.f32 %v1526, %v1588
        %v1605 = vmax.f32 %v1531, %v1589
        %v1606 = vmax.f32 %v1536, %v1590
        %v1607 = vmax.f32 %v1541, %v1591
        %v1608 = vmax.f32 %v1546, %v1592
        %v1609 = vmax.f32 %v1551, %v1593
        %v1610 = vmax.f32 %v1556, %v1594
        %v1611 = vmax.f32 %v1561, %v1595
        %v1612 = vmax.f32 %v1566, %v1596
        %v1613 = vmax.f32 %v1571, %v1597
        %v1614 = vmax.f32 %v1576, %v1598
        %v1615 = vmax.f32 %v1581, %v1599
        %s1616 = scalar_lea.vmem [#allocation5], 896
        %v1617 = vld [vmem:[%s1616] sm:$0xff]
        %v1618 = vld [vmem:[%s1616 + $0x8] sm:$0xff]
        %v1619 = vld [vmem:[%s1616 + $0x10] sm:$0xff]
        %v1620 = vld [vmem:[%s1616 + $0x18] sm:$0xff]
        %v1621 = vld [vmem:[%s1616 + $0x20] sm:$0xff]
        %v1622 = vld [vmem:[%s1616 + $0x28] sm:$0xff]
        %v1623 = vld [vmem:[%s1616 + $0x30] sm:$0xff]
        %v1624 = vld [vmem:[%s1616 + $0x38] sm:$0xff]
        %v1625 = vld [vmem:[%s1616 + $0x40] sm:$0xff]
        %v1626 = vld [vmem:[%s1616 + $0x48] sm:$0xff]
        %v1627 = vld [vmem:[%s1616 + $0x50] sm:$0xff]
        %v1628 = vld [vmem:[%s1616 + $0x58] sm:$0xff]
        %v1629 = vld [vmem:[%s1616 + $0x60] sm:$0xff]
        %v1630 = vld [vmem:[%s1616 + $0x68] sm:$0xff]
        %v1631 = vld [vmem:[%s1616 + $0x70] sm:$0xff]
        %v1632 = vld [vmem:[%s1616 + $0x78] sm:$0xff]
        %s1633 = scalar_lea.vmem [#allocation7], 7
        %v1634 = vld [vmem:[%s1633] sm:$0x1]
        %v1636 = vlaneseq
        %v1637 = vshrl.u32 %v1636, 7
        %v1638 = vsub.s32 0, %v1637
        %v1639 = vrot.slane %v1634, %v1638
        %1641 = vmatprep.subr.mxu0 0.0
        %1642 = vmatpush1.msra.mxu0 %v1632
        %1643 = vmatprep.subr.mxu0 0.0
        %1644 = vmatpush1.msra.mxu0 %v1631
        %1645 = vmatprep.subr.mxu0 0.0
        %1646 = vmatpush1.msra.mxu0 %v1630
        %1647 = vmatprep.subr.mxu0 0.0
        %1648 = vmatpush1.msra.mxu0 %v1629
        %1649 = vmatprep.subr.mxu0 0.0
        %1650 = vmatpush1.msra.mxu0 %v1628
        %1651 = vmatprep.subr.mxu0 0.0
        %1652 = vmatpush1.msra.mxu0 %v1627
        %1653 = vmatprep.subr.mxu0 0.0
        %1654 = vmatpush1.msra.mxu0 %v1626
        %1655 = vmatprep.subr.mxu0 0.0
        %1656 = vmatpush1.msra.mxu0 %v1625
        %1657 = vmatprep.subr.mxu0 0.0
        %1658 = vmatpush1.msra.mxu0 %v1624
        %1659 = vmatprep.subr.mxu0 0.0
        %1660 = vmatpush1.msra.mxu0 %v1623
        %1661 = vmatprep.subr.mxu0 0.0
        %1662 = vmatpush1.msra.mxu0 %v1622
        %1663 = vmatprep.subr.mxu0 0.0
        %1664 = vmatpush1.msra.mxu0 %v1621
        %1665 = vmatprep.subr.mxu0 0.0
        %1666 = vmatpush1.msra.mxu0 %v1620
        %1667 = vmatprep.subr.mxu0 0.0
        %1668 = vmatpush1.msra.mxu0 %v1619
        %1669 = vmatprep.subr.mxu0 0.0
        %1670 = vmatpush1.msra.mxu0 %v1618
        %1671 = vmatprep.subr.mxu0 0.0
        %1672 = vmatpush1.msra.mxu0 %v1617
        %1673 = vmatprep.subr.mxu0 0.0
        %1674 = vmatpush2.msra.mxu0 0.0
        %1675 = vmatprep.subr.mxu0 0.0
        %1676 = vmatpush2.msra.mxu0 0.0
        %1677 = vmatprep.subr.mxu0 0.0
        %1678 = vmatpush2.msra.mxu0 0.0
        %1679 = vmatprep.subr.mxu0 0.0
        %1680 = vmatpush2.msra.mxu0 0.0
        %1681 = vmatprep.subr.mxu0 0.0
        %1682 = vmatpush2.msra.mxu0 0.0
        %1683 = vmatprep.subr.mxu0 0.0
        %1684 = vmatpush2.msra.mxu0 0.0
        %1685 = vmatprep.subr.mxu0 0.0
        %1686 = vmatpush2.msra.mxu0 0.0
        %1687 = vmatprep.subr.mxu0 0.0
        %1688 = vmatpush2.msra.mxu0 0.0
        %1689 = vmatprep.subr.mxu0 0.0
        %1690 = vmatpush2.msra.mxu0 0.0
        %1691 = vmatprep.subr.mxu0 0.0
        %1692 = vmatpush2.msra.mxu0 0.0
        %1693 = vmatprep.subr.mxu0 0.0
        %1694 = vmatpush2.msra.mxu0 0.0
        %1695 = vmatprep.subr.mxu0 0.0
        %1696 = vmatpush2.msra.mxu0 0.0
        %1697 = vmatprep.subr.mxu0 0.0
        %1698 = vmatpush2.msra.mxu0 0.0
        %1699 = vmatprep.subr.mxu0 0.0
        %1700 = vmatpush2.msra.mxu0 0.0
        %1701 = vmatprep.subr.mxu0 0.0
        %1702 = vmatpush2.msra.mxu0 0.0
        %1703 = vmatprep.subr.mxu0 0.0
        %1704 = vmatpush2.msra.mxu0 0.0
        %1705 = vmatprep.mubr.f32.mxu0 0.0
        %1706 = vmatmul.mubr.f32.gmra.mxu0 %v1600
        %v1707 = vpop.f32.mrf.mxu0
        %v1708 = vadd.f32 %v1639, %v1707
        %v1709 = vpop.f32.mrf.mxu0
        %1710 = vmatprep.mubr.f32.mxu0 0.0
        %1711 = vmatmul.mubr.f32.gmra.mxu0 %v1601
        %v1712 = vpop.f32.mrf.mxu0
        %v1713 = vadd.f32 %v1639, %v1712
        %v1714 = vpop.f32.mrf.mxu0
        %1715 = vmatprep.mubr.f32.mxu0 0.0
        %1716 = vmatmul.mubr.f32.gmra.mxu0 %v1602
        %v1717 = vpop.f32.mrf.mxu0
        %v1718 = vadd.f32 %v1639, %v1717
        %v1719 = vpop.f32.mrf.mxu0
        %1720 = vmatprep.mubr.f32.mxu0 0.0
        %1721 = vmatmul.mubr.f32.gmra.mxu0 %v1603
        %v1722 = vpop.f32.mrf.mxu0
        %v1723 = vadd.f32 %v1639, %v1722
        %v1724 = vpop.f32.mrf.mxu0
        %1725 = vmatprep.mubr.f32.mxu0 0.0
        %1726 = vmatmul.mubr.f32.gmra.mxu0 %v1604
        %v1727 = vpop.f32.mrf.mxu0
        %v1728 = vadd.f32 %v1639, %v1727
        %v1729 = vpop.f32.mrf.mxu0
        %1730 = vmatprep.mubr.f32.mxu0 0.0
        %1731 = vmatmul.mubr.f32.gmra.mxu0 %v1605
        %v1732 = vpop.f32.mrf.mxu0
        %v1733 = vadd.f32 %v1639, %v1732
        %v1734 = vpop.f32.mrf.mxu0
        %1735 = vmatprep.mubr.f32.mxu0 0.0
        %1736 = vmatmul.mubr.f32.gmra.mxu0 %v1606
        %v1737 = vpop.f32.mrf.mxu0
        %v1738 = vadd.f32 %v1639, %v1737
        %v1739 = vpop.f32.mrf.mxu0
        %1740 = vmatprep.mubr.f32.mxu0 0.0
        %1741 = vmatmul.mubr.f32.gmra.mxu0 %v1607
        %v1742 = vpop.f32.mrf.mxu0
        %v1743 = vadd.f32 %v1639, %v1742
        %v1744 = vpop.f32.mrf.mxu0
        %1745 = vmatprep.mubr.f32.mxu0 0.0
        %1746 = vmatmul.mubr.f32.gmra.mxu0 %v1608
        %v1747 = vpop.f32.mrf.mxu0
        %v1748 = vadd.f32 %v1639, %v1747
        %v1749 = vpop.f32.mrf.mxu0
        %1750 = vmatprep.mubr.f32.mxu0 0.0
        %1751 = vmatmul.mubr.f32.gmra.mxu0 %v1609
        %v1752 = vpop.f32.mrf.mxu0
        %v1753 = vadd.f32 %v1639, %v1752
        %v1754 = vpop.f32.mrf.mxu0
        %1755 = vmatprep.mubr.f32.mxu0 0.0
        %1756 = vmatmul.mubr.f32.gmra.mxu0 %v1610
        %v1757 = vpop.f32.mrf.mxu0
        %v1758 = vadd.f32 %v1639, %v1757
        %v1759 = vpop.f32.mrf.mxu0
        %1760 = vmatprep.mubr.f32.mxu0 0.0
        %1761 = vmatmul.mubr.f32.gmra.mxu0 %v1611
        %v1762 = vpop.f32.mrf.mxu0
        %v1763 = vadd.f32 %v1639, %v1762
        %v1764 = vpop.f32.mrf.mxu0
        %1765 = vmatprep.mubr.f32.mxu0 0.0
        %1766 = vmatmul.mubr.f32.gmra.mxu0 %v1612
        %v1767 = vpop.f32.mrf.mxu0
        %v1768 = vadd.f32 %v1639, %v1767
        %v1769 = vpop.f32.mrf.mxu0
        %1770 = vmatprep.mubr.f32.mxu0 0.0
        %1771 = vmatmul.mubr.f32.gmra.mxu0 %v1613
        %v1772 = vpop.f32.mrf.mxu0
        %v1773 = vadd.f32 %v1639, %v1772
        %v1774 = vpop.f32.mrf.mxu0
        %1775 = vmatprep.mubr.f32.mxu0 0.0
        %1776 = vmatmul.mubr.f32.gmra.mxu0 %v1614
        %v1777 = vpop.f32.mrf.mxu0
        %v1778 = vadd.f32 %v1639, %v1777
        %v1779 = vpop.f32.mrf.mxu0
        %1780 = vmatprep.mubr.f32.mxu0 0.0
        %1781 = vmatmul.mubr.f32.gmra.mxu0 %v1615
        %v1782 = vpop.f32.mrf.mxu0
        %v1783 = vadd.f32 %v1639, %v1782
        %v1784 = vpop.f32.mrf.mxu0
        %1785 = vdwg.mxu0
        %v1786 = vmul.f32 %v1708, 0.01
        %v1787 = vmul.f32 %v1713, 0.01
        %v1788 = vmul.f32 %v1718, 0.01
        %v1789 = vmul.f32 %v1723, 0.01
        %v1790 = vmul.f32 %v1728, 0.01
        %v1791 = vmul.f32 %v1733, 0.01
        %v1792 = vmul.f32 %v1738, 0.01
        %v1793 = vmul.f32 %v1743, 0.01
        %v1794 = vmul.f32 %v1748, 0.01
        %v1795 = vmul.f32 %v1753, 0.01
        %v1796 = vmul.f32 %v1758, 0.01
        %v1797 = vmul.f32 %v1763, 0.01
        %v1798 = vmul.f32 %v1768, 0.01
        %v1799 = vmul.f32 %v1773, 0.01
        %v1800 = vmul.f32 %v1778, 0.01
        %v1801 = vmul.f32 %v1783, 0.01
        %v1802 = vmax.f32 %v1708, %v1786
        %v1803 = vmax.f32 %v1713, %v1787
        %v1804 = vmax.f32 %v1718, %v1788
        %v1805 = vmax.f32 %v1723, %v1789
        %v1806 = vmax.f32 %v1728, %v1790
        %v1807 = vmax.f32 %v1733, %v1791
        %v1808 = vmax.f32 %v1738, %v1792
        %v1809 = vmax.f32 %v1743, %v1793
        %v1810 = vmax.f32 %v1748, %v1794
        %v1811 = vmax.f32 %v1753, %v1795
        %v1812 = vmax.f32 %v1758, %v1796
        %v1813 = vmax.f32 %v1763, %v1797
        %v1814 = vmax.f32 %v1768, %v1798
        %v1815 = vmax.f32 %v1773, %v1799
        %v1816 = vmax.f32 %v1778, %v1800
        %v1817 = vmax.f32 %v1783, %v1801
        %s1818 = scalar_lea.vmem [#allocation5], 1024
        %v1819 = vld [vmem:[%s1818] sm:$0xff]
        %v1820 = vld [vmem:[%s1818 + $0x8] sm:$0xff]
        %v1821 = vld [vmem:[%s1818 + $0x10] sm:$0xff]
        %v1822 = vld [vmem:[%s1818 + $0x18] sm:$0xff]
        %v1823 = vld [vmem:[%s1818 + $0x20] sm:$0xff]
        %v1824 = vld [vmem:[%s1818 + $0x28] sm:$0xff]
        %v1825 = vld [vmem:[%s1818 + $0x30] sm:$0xff]
        %v1826 = vld [vmem:[%s1818 + $0x38] sm:$0xff]
        %v1827 = vld [vmem:[%s1818 + $0x40] sm:$0xff]
        %v1828 = vld [vmem:[%s1818 + $0x48] sm:$0xff]
        %v1829 = vld [vmem:[%s1818 + $0x50] sm:$0xff]
        %v1830 = vld [vmem:[%s1818 + $0x58] sm:$0xff]
        %v1831 = vld [vmem:[%s1818 + $0x60] sm:$0xff]
        %v1832 = vld [vmem:[%s1818 + $0x68] sm:$0xff]
        %v1833 = vld [vmem:[%s1818 + $0x70] sm:$0xff]
        %v1834 = vld [vmem:[%s1818 + $0x78] sm:$0xff]
        %s1835 = scalar_lea.vmem [#allocation7], 8
        %v1836 = vld [vmem:[%s1835] sm:$0x1]
        %v1838 = vlaneseq
        %v1839 = vshrl.u32 %v1838, 7
        %v1840 = vsub.s32 0, %v1839
        %v1841 = vrot.slane %v1836, %v1840
        %1843 = vmatprep.subr.mxu0 0.0
        %1844 = vmatpush1.msra.mxu0 %v1834
        %1845 = vmatprep.subr.mxu0 0.0
        %1846 = vmatpush1.msra.mxu0 %v1833
        %1847 = vmatprep.subr.mxu0 0.0
        %1848 = vmatpush1.msra.mxu0 %v1832
        %1849 = vmatprep.subr.mxu0 0.0
        %1850 = vmatpush1.msra.mxu0 %v1831
        %1851 = vmatprep.subr.mxu0 0.0
        %1852 = vmatpush1.msra.mxu0 %v1830
        %1853 = vmatprep.subr.mxu0 0.0
        %1854 = vmatpush1.msra.mxu0 %v1829
        %1855 = vmatprep.subr.mxu0 0.0
        %1856 = vmatpush1.msra.mxu0 %v1828
        %1857 = vmatprep.subr.mxu0 0.0
        %1858 = vmatpush1.msra.mxu0 %v1827
        %1859 = vmatprep.subr.mxu0 0.0
        %1860 = vmatpush1.msra.mxu0 %v1826
        %1861 = vmatprep.subr.mxu0 0.0
        %1862 = vmatpush1.msra.mxu0 %v1825
        %1863 = vmatprep.subr.mxu0 0.0
        %1864 = vmatpush1.msra.mxu0 %v1824
        %1865 = vmatprep.subr.mxu0 0.0
        %1866 = vmatpush1.msra.mxu0 %v1823
        %1867 = vmatprep.subr.mxu0 0.0
        %1868 = vmatpush1.msra.mxu0 %v1822
        %1869 = vmatprep.subr.mxu0 0.0
        %1870 = vmatpush1.msra.mxu0 %v1821
        %1871 = vmatprep.subr.mxu0 0.0
        %1872 = vmatpush1.msra.mxu0 %v1820
        %1873 = vmatprep.subr.mxu0 0.0
        %1874 = vmatpush1.msra.mxu0 %v1819
        %1875 = vmatprep.subr.mxu0 0.0
        %1876 = vmatpush2.msra.mxu0 0.0
        %1877 = vmatprep.subr.mxu0 0.0
        %1878 = vmatpush2.msra.mxu0 0.0
        %1879 = vmatprep.subr.mxu0 0.0
        %1880 = vmatpush2.msra.mxu0 0.0
        %1881 = vmatprep.subr.mxu0 0.0
        %1882 = vmatpush2.msra.mxu0 0.0
        %1883 = vmatprep.subr.mxu0 0.0
        %1884 = vmatpush2.msra.mxu0 0.0
        %1885 = vmatprep.subr.mxu0 0.0
        %1886 = vmatpush2.msra.mxu0 0.0
        %1887 = vmatprep.subr.mxu0 0.0
        %1888 = vmatpush2.msra.mxu0 0.0
        %1889 = vmatprep.subr.mxu0 0.0
        %1890 = vmatpush2.msra.mxu0 0.0
        %1891 = vmatprep.subr.mxu0 0.0
        %1892 = vmatpush2.msra.mxu0 0.0
        %1893 = vmatprep.subr.mxu0 0.0
        %1894 = vmatpush2.msra.mxu0 0.0
        %1895 = vmatprep.subr.mxu0 0.0
        %1896 = vmatpush2.msra.mxu0 0.0
        %1897 = vmatprep.subr.mxu0 0.0
        %1898 = vmatpush2.msra.mxu0 0.0
        %1899 = vmatprep.subr.mxu0 0.0
        %1900 = vmatpush2.msra.mxu0 0.0
        %1901 = vmatprep.subr.mxu0 0.0
        %1902 = vmatpush2.msra.mxu0 0.0
        %1903 = vmatprep.subr.mxu0 0.0
        %1904 = vmatpush2.msra.mxu0 0.0
        %1905 = vmatprep.subr.mxu0 0.0
        %1906 = vmatpush2.msra.mxu0 0.0
        %1907 = vmatprep.mubr.f32.mxu0 0.0
        %1908 = vmatmul.mubr.f32.gmra.mxu0 %v1802
        %v1909 = vpop.f32.mrf.mxu0
        %v1910 = vadd.f32 %v1841, %v1909
        %v1911 = vpop.f32.mrf.mxu0
        %1912 = vmatprep.mubr.f32.mxu0 0.0
        %1913 = vmatmul.mubr.f32.gmra.mxu0 %v1803
        %v1914 = vpop.f32.mrf.mxu0
        %v1915 = vadd.f32 %v1841, %v1914
        %v1916 = vpop.f32.mrf.mxu0
        %1917 = vmatprep.mubr.f32.mxu0 0.0
        %1918 = vmatmul.mubr.f32.gmra.mxu0 %v1804
        %v1919 = vpop.f32.mrf.mxu0
        %v1920 = vadd.f32 %v1841, %v1919
        %v1921 = vpop.f32.mrf.mxu0
        %1922 = vmatprep.mubr.f32.mxu0 0.0
        %1923 = vmatmul.mubr.f32.gmra.mxu0 %v1805
        %v1924 = vpop.f32.mrf.mxu0
        %v1925 = vadd.f32 %v1841, %v1924
        %v1926 = vpop.f32.mrf.mxu0
        %1927 = vmatprep.mubr.f32.mxu0 0.0
        %1928 = vmatmul.mubr.f32.gmra.mxu0 %v1806
        %v1929 = vpop.f32.mrf.mxu0
        %v1930 = vadd.f32 %v1841, %v1929
        %v1931 = vpop.f32.mrf.mxu0
        %1932 = vmatprep.mubr.f32.mxu0 0.0
        %1933 = vmatmul.mubr.f32.gmra.mxu0 %v1807
        %v1934 = vpop.f32.mrf.mxu0
        %v1935 = vadd.f32 %v1841, %v1934
        %v1936 = vpop.f32.mrf.mxu0
        %1937 = vmatprep.mubr.f32.mxu0 0.0
        %1938 = vmatmul.mubr.f32.gmra.mxu0 %v1808
        %v1939 = vpop.f32.mrf.mxu0
        %v1940 = vadd.f32 %v1841, %v1939
        %v1941 = vpop.f32.mrf.mxu0
        %1942 = vmatprep.mubr.f32.mxu0 0.0
        %1943 = vmatmul.mubr.f32.gmra.mxu0 %v1809
        %v1944 = vpop.f32.mrf.mxu0
        %v1945 = vadd.f32 %v1841, %v1944
        %v1946 = vpop.f32.mrf.mxu0
        %1947 = vmatprep.mubr.f32.mxu0 0.0
        %1948 = vmatmul.mubr.f32.gmra.mxu0 %v1810
        %v1949 = vpop.f32.mrf.mxu0
        %v1950 = vadd.f32 %v1841, %v1949
        %v1951 = vpop.f32.mrf.mxu0
        %1952 = vmatprep.mubr.f32.mxu0 0.0
        %1953 = vmatmul.mubr.f32.gmra.mxu0 %v1811
        %v1954 = vpop.f32.mrf.mxu0
        %v1955 = vadd.f32 %v1841, %v1954
        %v1956 = vpop.f32.mrf.mxu0
        %1957 = vmatprep.mubr.f32.mxu0 0.0
        %1958 = vmatmul.mubr.f32.gmra.mxu0 %v1812
        %v1959 = vpop.f32.mrf.mxu0
        %v1960 = vadd.f32 %v1841, %v1959
        %v1961 = vpop.f32.mrf.mxu0
        %1962 = vmatprep.mubr.f32.mxu0 0.0
        %1963 = vmatmul.mubr.f32.gmra.mxu0 %v1813
        %v1964 = vpop.f32.mrf.mxu0
        %v1965 = vadd.f32 %v1841, %v1964
        %v1966 = vpop.f32.mrf.mxu0
        %1967 = vmatprep.mubr.f32.mxu0 0.0
        %1968 = vmatmul.mubr.f32.gmra.mxu0 %v1814
        %v1969 = vpop.f32.mrf.mxu0
        %v1970 = vadd.f32 %v1841, %v1969
        %v1971 = vpop.f32.mrf.mxu0
        %1972 = vmatprep.mubr.f32.mxu0 0.0
        %1973 = vmatmul.mubr.f32.gmra.mxu0 %v1815
        %v1974 = vpop.f32.mrf.mxu0
        %v1975 = vadd.f32 %v1841, %v1974
        %v1976 = vpop.f32.mrf.mxu0
        %1977 = vmatprep.mubr.f32.mxu0 0.0
        %1978 = vmatmul.mubr.f32.gmra.mxu0 %v1816
        %v1979 = vpop.f32.mrf.mxu0
        %v1980 = vadd.f32 %v1841, %v1979
        %v1981 = vpop.f32.mrf.mxu0
        %1982 = vmatprep.mubr.f32.mxu0 0.0
        %1983 = vmatmul.mubr.f32.gmra.mxu0 %v1817
        %v1984 = vpop.f32.mrf.mxu0
        %v1985 = vadd.f32 %v1841, %v1984
        %v1986 = vpop.f32.mrf.mxu0
        %1987 = vdwg.mxu0
        %v1988 = vmul.f32 %v1910, 0.01
        %v1989 = vmul.f32 %v1915, 0.01
        %v1990 = vmul.f32 %v1920, 0.01
        %v1991 = vmul.f32 %v1925, 0.01
        %v1992 = vmul.f32 %v1930, 0.01
        %v1993 = vmul.f32 %v1935, 0.01
        %v1994 = vmul.f32 %v1940, 0.01
        %v1995 = vmul.f32 %v1945, 0.01
        %v1996 = vmul.f32 %v1950, 0.01
        %v1997 = vmul.f32 %v1955, 0.01
        %v1998 = vmul.f32 %v1960, 0.01
        %v1999 = vmul.f32 %v1965, 0.01
        %v2000 = vmul.f32 %v1970, 0.01
        %v2001 = vmul.f32 %v1975, 0.01
        %v2002 = vmul.f32 %v1980, 0.01
        %v2003 = vmul.f32 %v1985, 0.01
        %v2004 = vmax.f32 %v1910, %v1988
        %v2005 = vmax.f32 %v1915, %v1989
        %v2006 = vmax.f32 %v1920, %v1990
        %v2007 = vmax.f32 %v1925, %v1991
        %v2008 = vmax.f32 %v1930, %v1992
        %v2009 = vmax.f32 %v1935, %v1993
        %v2010 = vmax.f32 %v1940, %v1994
        %v2011 = vmax.f32 %v1945, %v1995
        %v2012 = vmax.f32 %v1950, %v1996
        %v2013 = vmax.f32 %v1955, %v1997
        %v2014 = vmax.f32 %v1960, %v1998
        %v2015 = vmax.f32 %v1965, %v1999
        %v2016 = vmax.f32 %v1970, %v2000
        %v2017 = vmax.f32 %v1975, %v2001
        %v2018 = vmax.f32 %v1980, %v2002
        %v2019 = vmax.f32 %v1985, %v2003
        %s2020 = scalar_lea.vmem [#allocation5], 1152
        %v2021 = vld [vmem:[%s2020] sm:$0xff]
        %v2022 = vld [vmem:[%s2020 + $0x8] sm:$0xff]
        %v2023 = vld [vmem:[%s2020 + $0x10] sm:$0xff]
        %v2024 = vld [vmem:[%s2020 + $0x18] sm:$0xff]
        %v2025 = vld [vmem:[%s2020 + $0x20] sm:$0xff]
        %v2026 = vld [vmem:[%s2020 + $0x28] sm:$0xff]
        %v2027 = vld [vmem:[%s2020 + $0x30] sm:$0xff]
        %v2028 = vld [vmem:[%s2020 + $0x38] sm:$0xff]
        %v2029 = vld [vmem:[%s2020 + $0x40] sm:$0xff]
        %v2030 = vld [vmem:[%s2020 + $0x48] sm:$0xff]
        %v2031 = vld [vmem:[%s2020 + $0x50] sm:$0xff]
        %v2032 = vld [vmem:[%s2020 + $0x58] sm:$0xff]
        %v2033 = vld [vmem:[%s2020 + $0x60] sm:$0xff]
        %v2034 = vld [vmem:[%s2020 + $0x68] sm:$0xff]
        %v2035 = vld [vmem:[%s2020 + $0x70] sm:$0xff]
        %v2036 = vld [vmem:[%s2020 + $0x78] sm:$0xff]
        %s2037 = scalar_lea.vmem [#allocation7], 9
        %v2038 = vld [vmem:[%s2037] sm:$0x1]
        %v2040 = vlaneseq
        %v2041 = vshrl.u32 %v2040, 7
        %v2042 = vsub.s32 0, %v2041
        %v2043 = vrot.slane %v2038, %v2042
        %2045 = vmatprep.subr.mxu0 0.0
        %2046 = vmatpush1.msra.mxu0 %v2036
        %2047 = vmatprep.subr.mxu0 0.0
        %2048 = vmatpush1.msra.mxu0 %v2035
        %2049 = vmatprep.subr.mxu0 0.0
        %2050 = vmatpush1.msra.mxu0 %v2034
        %2051 = vmatprep.subr.mxu0 0.0
        %2052 = vmatpush1.msra.mxu0 %v2033
        %2053 = vmatprep.subr.mxu0 0.0
        %2054 = vmatpush1.msra.mxu0 %v2032
        %2055 = vmatprep.subr.mxu0 0.0
        %2056 = vmatpush1.msra.mxu0 %v2031
        %2057 = vmatprep.subr.mxu0 0.0
        %2058 = vmatpush1.msra.mxu0 %v2030
        %2059 = vmatprep.subr.mxu0 0.0
        %2060 = vmatpush1.msra.mxu0 %v2029
        %2061 = vmatprep.subr.mxu0 0.0
        %2062 = vmatpush1.msra.mxu0 %v2028
        %2063 = vmatprep.subr.mxu0 0.0
        %2064 = vmatpush1.msra.mxu0 %v2027
        %2065 = vmatprep.subr.mxu0 0.0
        %2066 = vmatpush1.msra.mxu0 %v2026
        %2067 = vmatprep.subr.mxu0 0.0
        %2068 = vmatpush1.msra.mxu0 %v2025
        %2069 = vmatprep.subr.mxu0 0.0
        %2070 = vmatpush1.msra.mxu0 %v2024
        %2071 = vmatprep.subr.mxu0 0.0
        %2072 = vmatpush1.msra.mxu0 %v2023
        %2073 = vmatprep.subr.mxu0 0.0
        %2074 = vmatpush1.msra.mxu0 %v2022
        %2075 = vmatprep.subr.mxu0 0.0
        %2076 = vmatpush1.msra.mxu0 %v2021
        %2077 = vmatprep.subr.mxu0 0.0
        %2078 = vmatpush2.msra.mxu0 0.0
        %2079 = vmatprep.subr.mxu0 0.0
        %2080 = vmatpush2.msra.mxu0 0.0
        %2081 = vmatprep.subr.mxu0 0.0
        %2082 = vmatpush2.msra.mxu0 0.0
        %2083 = vmatprep.subr.mxu0 0.0
        %2084 = vmatpush2.msra.mxu0 0.0
        %2085 = vmatprep.subr.mxu0 0.0
        %2086 = vmatpush2.msra.mxu0 0.0
        %2087 = vmatprep.subr.mxu0 0.0
        %2088 = vmatpush2.msra.mxu0 0.0
        %2089 = vmatprep.subr.mxu0 0.0
        %2090 = vmatpush2.msra.mxu0 0.0
        %2091 = vmatprep.subr.mxu0 0.0
        %2092 = vmatpush2.msra.mxu0 0.0
        %2093 = vmatprep.subr.mxu0 0.0
        %2094 = vmatpush2.msra.mxu0 0.0
        %2095 = vmatprep.subr.mxu0 0.0
        %2096 = vmatpush2.msra.mxu0 0.0
        %2097 = vmatprep.subr.mxu0 0.0
        %2098 = vmatpush2.msra.mxu0 0.0
        %2099 = vmatprep.subr.mxu0 0.0
        %2100 = vmatpush2.msra.mxu0 0.0
        %2101 = vmatprep.subr.mxu0 0.0
        %2102 = vmatpush2.msra.mxu0 0.0
        %2103 = vmatprep.subr.mxu0 0.0
        %2104 = vmatpush2.msra.mxu0 0.0
        %2105 = vmatprep.subr.mxu0 0.0
        %2106 = vmatpush2.msra.mxu0 0.0
        %2107 = vmatprep.subr.mxu0 0.0
        %2108 = vmatpush2.msra.mxu0 0.0
        %2109 = vmatprep.mubr.f32.mxu0 0.0
        %2110 = vmatmul.mubr.f32.gmra.mxu0 %v2004
        %v2111 = vpop.f32.mrf.mxu0
        %v2112 = vadd.f32 %v2043, %v2111
        %v2113 = vpop.f32.mrf.mxu0
        %2114 = vmatprep.mubr.f32.mxu0 0.0
        %2115 = vmatmul.mubr.f32.gmra.mxu0 %v2005
        %v2116 = vpop.f32.mrf.mxu0
        %v2117 = vadd.f32 %v2043, %v2116
        %v2118 = vpop.f32.mrf.mxu0
        %2119 = vmatprep.mubr.f32.mxu0 0.0
        %2120 = vmatmul.mubr.f32.gmra.mxu0 %v2006
        %v2121 = vpop.f32.mrf.mxu0
        %v2122 = vadd.f32 %v2043, %v2121
        %v2123 = vpop.f32.mrf.mxu0
        %2124 = vmatprep.mubr.f32.mxu0 0.0
        %2125 = vmatmul.mubr.f32.gmra.mxu0 %v2007
        %v2126 = vpop.f32.mrf.mxu0
        %v2127 = vadd.f32 %v2043, %v2126
        %v2128 = vpop.f32.mrf.mxu0
        %2129 = vmatprep.mubr.f32.mxu0 0.0
        %2130 = vmatmul.mubr.f32.gmra.mxu0 %v2008
        %v2131 = vpop.f32.mrf.mxu0
        %v2132 = vadd.f32 %v2043, %v2131
        %v2133 = vpop.f32.mrf.mxu0
        %2134 = vmatprep.mubr.f32.mxu0 0.0
        %2135 = vmatmul.mubr.f32.gmra.mxu0 %v2009
        %v2136 = vpop.f32.mrf.mxu0
        %v2137 = vadd.f32 %v2043, %v2136
        %v2138 = vpop.f32.mrf.mxu0
        %2139 = vmatprep.mubr.f32.mxu0 0.0
        %2140 = vmatmul.mubr.f32.gmra.mxu0 %v2010
        %v2141 = vpop.f32.mrf.mxu0
        %v2142 = vadd.f32 %v2043, %v2141
        %v2143 = vpop.f32.mrf.mxu0
        %2144 = vmatprep.mubr.f32.mxu0 0.0
        %2145 = vmatmul.mubr.f32.gmra.mxu0 %v2011
        %v2146 = vpop.f32.mrf.mxu0
        %v2147 = vadd.f32 %v2043, %v2146
        %v2148 = vpop.f32.mrf.mxu0
        %2149 = vmatprep.mubr.f32.mxu0 0.0
        %2150 = vmatmul.mubr.f32.gmra.mxu0 %v2012
        %v2151 = vpop.f32.mrf.mxu0
        %v2152 = vadd.f32 %v2043, %v2151
        %v2153 = vpop.f32.mrf.mxu0
        %2154 = vmatprep.mubr.f32.mxu0 0.0
        %2155 = vmatmul.mubr.f32.gmra.mxu0 %v2013
        %v2156 = vpop.f32.mrf.mxu0
        %v2157 = vadd.f32 %v2043, %v2156
        %v2158 = vpop.f32.mrf.mxu0
        %2159 = vmatprep.mubr.f32.mxu0 0.0
        %2160 = vmatmul.mubr.f32.gmra.mxu0 %v2014
        %v2161 = vpop.f32.mrf.mxu0
        %v2162 = vadd.f32 %v2043, %v2161
        %v2163 = vpop.f32.mrf.mxu0
        %2164 = vmatprep.mubr.f32.mxu0 0.0
        %2165 = vmatmul.mubr.f32.gmra.mxu0 %v2015
        %v2166 = vpop.f32.mrf.mxu0
        %v2167 = vadd.f32 %v2043, %v2166
        %v2168 = vpop.f32.mrf.mxu0
        %2169 = vmatprep.mubr.f32.mxu0 0.0
        %2170 = vmatmul.mubr.f32.gmra.mxu0 %v2016
        %v2171 = vpop.f32.mrf.mxu0
        %v2172 = vadd.f32 %v2043, %v2171
        %v2173 = vpop.f32.mrf.mxu0
        %2174 = vmatprep.mubr.f32.mxu0 0.0
        %2175 = vmatmul.mubr.f32.gmra.mxu0 %v2017
        %v2176 = vpop.f32.mrf.mxu0
        %v2177 = vadd.f32 %v2043, %v2176
        %v2178 = vpop.f32.mrf.mxu0
        %2179 = vmatprep.mubr.f32.mxu0 0.0
        %2180 = vmatmul.mubr.f32.gmra.mxu0 %v2018
        %v2181 = vpop.f32.mrf.mxu0
        %v2182 = vadd.f32 %v2043, %v2181
        %v2183 = vpop.f32.mrf.mxu0
        %2184 = vmatprep.mubr.f32.mxu0 0.0
        %2185 = vmatmul.mubr.f32.gmra.mxu0 %v2019
        %v2186 = vpop.f32.mrf.mxu0
        %v2187 = vadd.f32 %v2043, %v2186
        %v2188 = vpop.f32.mrf.mxu0
        %2189 = vdwg.mxu0
        %v2190 = vmul.f32 %v2112, 0.01
        %v2191 = vmul.f32 %v2117, 0.01
        %v2192 = vmul.f32 %v2122, 0.01
        %v2193 = vmul.f32 %v2127, 0.01
        %v2194 = vmul.f32 %v2132, 0.01
        %v2195 = vmul.f32 %v2137, 0.01
        %v2196 = vmul.f32 %v2142, 0.01
        %v2197 = vmul.f32 %v2147, 0.01
        %v2198 = vmul.f32 %v2152, 0.01
        %v2199 = vmul.f32 %v2157, 0.01
        %v2200 = vmul.f32 %v2162, 0.01
        %v2201 = vmul.f32 %v2167, 0.01
        %v2202 = vmul.f32 %v2172, 0.01
        %v2203 = vmul.f32 %v2177, 0.01
        %v2204 = vmul.f32 %v2182, 0.01
        %v2205 = vmul.f32 %v2187, 0.01
        %v2206 = vmax.f32 %v2112, %v2190
        %v2207 = vmax.f32 %v2117, %v2191
        %v2208 = vmax.f32 %v2122, %v2192
        %v2209 = vmax.f32 %v2127, %v2193
        %v2210 = vmax.f32 %v2132, %v2194
        %v2211 = vmax.f32 %v2137, %v2195
        %v2212 = vmax.f32 %v2142, %v2196
        %v2213 = vmax.f32 %v2147, %v2197
        %v2214 = vmax.f32 %v2152, %v2198
        %v2215 = vmax.f32 %v2157, %v2199
        %v2216 = vmax.f32 %v2162, %v2200
        %v2217 = vmax.f32 %v2167, %v2201
        %v2218 = vmax.f32 %v2172, %v2202
        %v2219 = vmax.f32 %v2177, %v2203
        %v2220 = vmax.f32 %v2182, %v2204
        %v2221 = vmax.f32 %v2187, %v2205
        %s2222 = scalar_lea.vmem [#allocation5], 1280
        %v2223 = vld [vmem:[%s2222] sm:$0xff]
        %v2224 = vld [vmem:[%s2222 + $0x8] sm:$0xff]
        %v2225 = vld [vmem:[%s2222 + $0x10] sm:$0xff]
        %v2226 = vld [vmem:[%s2222 + $0x18] sm:$0xff]
        %v2227 = vld [vmem:[%s2222 + $0x20] sm:$0xff]
        %v2228 = vld [vmem:[%s2222 + $0x28] sm:$0xff]
        %v2229 = vld [vmem:[%s2222 + $0x30] sm:$0xff]
        %v2230 = vld [vmem:[%s2222 + $0x38] sm:$0xff]
        %v2231 = vld [vmem:[%s2222 + $0x40] sm:$0xff]
        %v2232 = vld [vmem:[%s2222 + $0x48] sm:$0xff]
        %v2233 = vld [vmem:[%s2222 + $0x50] sm:$0xff]
        %v2234 = vld [vmem:[%s2222 + $0x58] sm:$0xff]
        %v2235 = vld [vmem:[%s2222 + $0x60] sm:$0xff]
        %v2236 = vld [vmem:[%s2222 + $0x68] sm:$0xff]
        %v2237 = vld [vmem:[%s2222 + $0x70] sm:$0xff]
        %v2238 = vld [vmem:[%s2222 + $0x78] sm:$0xff]
        %s2239 = scalar_lea.vmem [#allocation7], 10
        %v2240 = vld [vmem:[%s2239] sm:$0x1]
        %v2242 = vlaneseq
        %v2243 = vshrl.u32 %v2242, 7
        %v2244 = vsub.s32 0, %v2243
        %v2245 = vrot.slane %v2240, %v2244
        %2247 = vmatprep.subr.mxu0 0.0
        %2248 = vmatpush1.msra.mxu0 %v2238
        %2249 = vmatprep.subr.mxu0 0.0
        %2250 = vmatpush1.msra.mxu0 %v2237
        %2251 = vmatprep.subr.mxu0 0.0
        %2252 = vmatpush1.msra.mxu0 %v2236
        %2253 = vmatprep.subr.mxu0 0.0
        %2254 = vmatpush1.msra.mxu0 %v2235
        %2255 = vmatprep.subr.mxu0 0.0
        %2256 = vmatpush1.msra.mxu0 %v2234
        %2257 = vmatprep.subr.mxu0 0.0
        %2258 = vmatpush1.msra.mxu0 %v2233
        %2259 = vmatprep.subr.mxu0 0.0
        %2260 = vmatpush1.msra.mxu0 %v2232
        %2261 = vmatprep.subr.mxu0 0.0
        %2262 = vmatpush1.msra.mxu0 %v2231
        %2263 = vmatprep.subr.mxu0 0.0
        %2264 = vmatpush1.msra.mxu0 %v2230
        %2265 = vmatprep.subr.mxu0 0.0
        %2266 = vmatpush1.msra.mxu0 %v2229
        %2267 = vmatprep.subr.mxu0 0.0
        %2268 = vmatpush1.msra.mxu0 %v2228
        %2269 = vmatprep.subr.mxu0 0.0
        %2270 = vmatpush1.msra.mxu0 %v2227
        %2271 = vmatprep.subr.mxu0 0.0
        %2272 = vmatpush1.msra.mxu0 %v2226
        %2273 = vmatprep.subr.mxu0 0.0
        %2274 = vmatpush1.msra.mxu0 %v2225
        %2275 = vmatprep.subr.mxu0 0.0
        %2276 = vmatpush1.msra.mxu0 %v2224
        %2277 = vmatprep.subr.mxu0 0.0
        %2278 = vmatpush1.msra.mxu0 %v2223
        %2279 = vmatprep.subr.mxu0 0.0
        %2280 = vmatpush2.msra.mxu0 0.0
        %2281 = vmatprep.subr.mxu0 0.0
        %2282 = vmatpush2.msra.mxu0 0.0
        %2283 = vmatprep.subr.mxu0 0.0
        %2284 = vmatpush2.msra.mxu0 0.0
        %2285 = vmatprep.subr.mxu0 0.0
        %2286 = vmatpush2.msra.mxu0 0.0
        %2287 = vmatprep.subr.mxu0 0.0
        %2288 = vmatpush2.msra.mxu0 0.0
        %2289 = vmatprep.subr.mxu0 0.0
        %2290 = vmatpush2.msra.mxu0 0.0
        %2291 = vmatprep.subr.mxu0 0.0
        %2292 = vmatpush2.msra.mxu0 0.0
        %2293 = vmatprep.subr.mxu0 0.0
        %2294 = vmatpush2.msra.mxu0 0.0
        %2295 = vmatprep.subr.mxu0 0.0
        %2296 = vmatpush2.msra.mxu0 0.0
        %2297 = vmatprep.subr.mxu0 0.0
        %2298 = vmatpush2.msra.mxu0 0.0
        %2299 = vmatprep.subr.mxu0 0.0
        %2300 = vmatpush2.msra.mxu0 0.0
        %2301 = vmatprep.subr.mxu0 0.0
        %2302 = vmatpush2.msra.mxu0 0.0
        %2303 = vmatprep.subr.mxu0 0.0
        %2304 = vmatpush2.msra.mxu0 0.0
        %2305 = vmatprep.subr.mxu0 0.0
        %2306 = vmatpush2.msra.mxu0 0.0
        %2307 = vmatprep.subr.mxu0 0.0
        %2308 = vmatpush2.msra.mxu0 0.0
        %2309 = vmatprep.subr.mxu0 0.0
        %2310 = vmatpush2.msra.mxu0 0.0
        %2311 = vmatprep.mubr.f32.mxu0 0.0
        %2312 = vmatmul.mubr.f32.gmra.mxu0 %v2206
        %v2313 = vpop.f32.mrf.mxu0
        %v2314 = vadd.f32 %v2245, %v2313
        %v2315 = vpop.f32.mrf.mxu0
        %2316 = vmatprep.mubr.f32.mxu0 0.0
        %2317 = vmatmul.mubr.f32.gmra.mxu0 %v2207
        %v2318 = vpop.f32.mrf.mxu0
        %v2319 = vadd.f32 %v2245, %v2318
        %v2320 = vpop.f32.mrf.mxu0
        %2321 = vmatprep.mubr.f32.mxu0 0.0
        %2322 = vmatmul.mubr.f32.gmra.mxu0 %v2208
        %v2323 = vpop.f32.mrf.mxu0
        %v2324 = vadd.f32 %v2245, %v2323
        %v2325 = vpop.f32.mrf.mxu0
        %2326 = vmatprep.mubr.f32.mxu0 0.0
        %2327 = vmatmul.mubr.f32.gmra.mxu0 %v2209
        %v2328 = vpop.f32.mrf.mxu0
        %v2329 = vadd.f32 %v2245, %v2328
        %v2330 = vpop.f32.mrf.mxu0
        %2331 = vmatprep.mubr.f32.mxu0 0.0
        %2332 = vmatmul.mubr.f32.gmra.mxu0 %v2210
        %v2333 = vpop.f32.mrf.mxu0
        %v2334 = vadd.f32 %v2245, %v2333
        %v2335 = vpop.f32.mrf.mxu0
        %2336 = vmatprep.mubr.f32.mxu0 0.0
        %2337 = vmatmul.mubr.f32.gmra.mxu0 %v2211
        %v2338 = vpop.f32.mrf.mxu0
        %v2339 = vadd.f32 %v2245, %v2338
        %v2340 = vpop.f32.mrf.mxu0
        %2341 = vmatprep.mubr.f32.mxu0 0.0
        %2342 = vmatmul.mubr.f32.gmra.mxu0 %v2212
        %v2343 = vpop.f32.mrf.mxu0
        %v2344 = vadd.f32 %v2245, %v2343
        %v2345 = vpop.f32.mrf.mxu0
        %2346 = vmatprep.mubr.f32.mxu0 0.0
        %2347 = vmatmul.mubr.f32.gmra.mxu0 %v2213
        %v2348 = vpop.f32.mrf.mxu0
        %v2349 = vadd.f32 %v2245, %v2348
        %v2350 = vpop.f32.mrf.mxu0
        %2351 = vmatprep.mubr.f32.mxu0 0.0
        %2352 = vmatmul.mubr.f32.gmra.mxu0 %v2214
        %v2353 = vpop.f32.mrf.mxu0
        %v2354 = vadd.f32 %v2245, %v2353
        %v2355 = vpop.f32.mrf.mxu0
        %2356 = vmatprep.mubr.f32.mxu0 0.0
        %2357 = vmatmul.mubr.f32.gmra.mxu0 %v2215
        %v2358 = vpop.f32.mrf.mxu0
        %v2359 = vadd.f32 %v2245, %v2358
        %v2360 = vpop.f32.mrf.mxu0
        %2361 = vmatprep.mubr.f32.mxu0 0.0
        %2362 = vmatmul.mubr.f32.gmra.mxu0 %v2216
        %v2363 = vpop.f32.mrf.mxu0
        %v2364 = vadd.f32 %v2245, %v2363
        %v2365 = vpop.f32.mrf.mxu0
        %2366 = vmatprep.mubr.f32.mxu0 0.0
        %2367 = vmatmul.mubr.f32.gmra.mxu0 %v2217
        %v2368 = vpop.f32.mrf.mxu0
        %v2369 = vadd.f32 %v2245, %v2368
        %v2370 = vpop.f32.mrf.mxu0
        %2371 = vmatprep.mubr.f32.mxu0 0.0
        %2372 = vmatmul.mubr.f32.gmra.mxu0 %v2218
        %v2373 = vpop.f32.mrf.mxu0
        %v2374 = vadd.f32 %v2245, %v2373
        %v2375 = vpop.f32.mrf.mxu0
        %2376 = vmatprep.mubr.f32.mxu0 0.0
        %2377 = vmatmul.mubr.f32.gmra.mxu0 %v2219
        %v2378 = vpop.f32.mrf.mxu0
        %v2379 = vadd.f32 %v2245, %v2378
        %v2380 = vpop.f32.mrf.mxu0
        %2381 = vmatprep.mubr.f32.mxu0 0.0
        %2382 = vmatmul.mubr.f32.gmra.mxu0 %v2220
        %v2383 = vpop.f32.mrf.mxu0
        %v2384 = vadd.f32 %v2245, %v2383
        %v2385 = vpop.f32.mrf.mxu0
        %2386 = vmatprep.mubr.f32.mxu0 0.0
        %2387 = vmatmul.mubr.f32.gmra.mxu0 %v2221
        %v2388 = vpop.f32.mrf.mxu0
        %v2389 = vadd.f32 %v2245, %v2388
        %v2390 = vpop.f32.mrf.mxu0
        %2391 = vdwg.mxu0
        %v2392 = vmul.f32 %v2314, 0.01
        %v2393 = vmul.f32 %v2319, 0.01
        %v2394 = vmul.f32 %v2324, 0.01
        %v2395 = vmul.f32 %v2329, 0.01
        %v2396 = vmul.f32 %v2334, 0.01
        %v2397 = vmul.f32 %v2339, 0.01
        %v2398 = vmul.f32 %v2344, 0.01
        %v2399 = vmul.f32 %v2349, 0.01
        %v2400 = vmul.f32 %v2354, 0.01
        %v2401 = vmul.f32 %v2359, 0.01
        %v2402 = vmul.f32 %v2364, 0.01
        %v2403 = vmul.f32 %v2369, 0.01
        %v2404 = vmul.f32 %v2374, 0.01
        %v2405 = vmul.f32 %v2379, 0.01
        %v2406 = vmul.f32 %v2384, 0.01
        %v2407 = vmul.f32 %v2389, 0.01
        %v2408 = vmax.f32 %v2314, %v2392
        %v2409 = vmax.f32 %v2319, %v2393
        %v2410 = vmax.f32 %v2324, %v2394
        %v2411 = vmax.f32 %v2329, %v2395
        %v2412 = vmax.f32 %v2334, %v2396
        %v2413 = vmax.f32 %v2339, %v2397
        %v2414 = vmax.f32 %v2344, %v2398
        %v2415 = vmax.f32 %v2349, %v2399
        %v2416 = vmax.f32 %v2354, %v2400
        %v2417 = vmax.f32 %v2359, %v2401
        %v2418 = vmax.f32 %v2364, %v2402
        %v2419 = vmax.f32 %v2369, %v2403
        %v2420 = vmax.f32 %v2374, %v2404
        %v2421 = vmax.f32 %v2379, %v2405
        %v2422 = vmax.f32 %v2384, %v2406
        %v2423 = vmax.f32 %v2389, %v2407
        %s2424 = scalar_lea.vmem [#allocation5], 1408
        %v2425 = vld [vmem:[%s2424] sm:$0xff]
        %v2426 = vld [vmem:[%s2424 + $0x8] sm:$0xff]
        %v2427 = vld [vmem:[%s2424 + $0x10] sm:$0xff]
        %v2428 = vld [vmem:[%s2424 + $0x18] sm:$0xff]
        %v2429 = vld [vmem:[%s2424 + $0x20] sm:$0xff]
        %v2430 = vld [vmem:[%s2424 + $0x28] sm:$0xff]
        %v2431 = vld [vmem:[%s2424 + $0x30] sm:$0xff]
        %v2432 = vld [vmem:[%s2424 + $0x38] sm:$0xff]
        %v2433 = vld [vmem:[%s2424 + $0x40] sm:$0xff]
        %v2434 = vld [vmem:[%s2424 + $0x48] sm:$0xff]
        %v2435 = vld [vmem:[%s2424 + $0x50] sm:$0xff]
        %v2436 = vld [vmem:[%s2424 + $0x58] sm:$0xff]
        %v2437 = vld [vmem:[%s2424 + $0x60] sm:$0xff]
        %v2438 = vld [vmem:[%s2424 + $0x68] sm:$0xff]
        %v2439 = vld [vmem:[%s2424 + $0x70] sm:$0xff]
        %v2440 = vld [vmem:[%s2424 + $0x78] sm:$0xff]
        %s2441 = scalar_lea.vmem [#allocation7], 11
        %v2442 = vld [vmem:[%s2441] sm:$0x1]
        %v2444 = vlaneseq
        %v2445 = vshrl.u32 %v2444, 7
        %v2446 = vsub.s32 0, %v2445
        %v2447 = vrot.slane %v2442, %v2446
        %2449 = vmatprep.subr.mxu0 0.0
        %2450 = vmatpush1.msra.mxu0 %v2440
        %2451 = vmatprep.subr.mxu0 0.0
        %2452 = vmatpush1.msra.mxu0 %v2439
        %2453 = vmatprep.subr.mxu0 0.0
        %2454 = vmatpush1.msra.mxu0 %v2438
        %2455 = vmatprep.subr.mxu0 0.0
        %2456 = vmatpush1.msra.mxu0 %v2437
        %2457 = vmatprep.subr.mxu0 0.0
        %2458 = vmatpush1.msra.mxu0 %v2436
        %2459 = vmatprep.subr.mxu0 0.0
        %2460 = vmatpush1.msra.mxu0 %v2435
        %2461 = vmatprep.subr.mxu0 0.0
        %2462 = vmatpush1.msra.mxu0 %v2434
        %2463 = vmatprep.subr.mxu0 0.0
        %2464 = vmatpush1.msra.mxu0 %v2433
        %2465 = vmatprep.subr.mxu0 0.0
        %2466 = vmatpush1.msra.mxu0 %v2432
        %2467 = vmatprep.subr.mxu0 0.0
        %2468 = vmatpush1.msra.mxu0 %v2431
        %2469 = vmatprep.subr.mxu0 0.0
        %2470 = vmatpush1.msra.mxu0 %v2430
        %2471 = vmatprep.subr.mxu0 0.0
        %2472 = vmatpush1.msra.mxu0 %v2429
        %2473 = vmatprep.subr.mxu0 0.0
        %2474 = vmatpush1.msra.mxu0 %v2428
        %2475 = vmatprep.subr.mxu0 0.0
        %2476 = vmatpush1.msra.mxu0 %v2427
        %2477 = vmatprep.subr.mxu0 0.0
        %2478 = vmatpush1.msra.mxu0 %v2426
        %2479 = vmatprep.subr.mxu0 0.0
        %2480 = vmatpush1.msra.mxu0 %v2425
        %2481 = vmatprep.subr.mxu0 0.0
        %2482 = vmatpush2.msra.mxu0 0.0
        %2483 = vmatprep.subr.mxu0 0.0
        %2484 = vmatpush2.msra.mxu0 0.0
        %2485 = vmatprep.subr.mxu0 0.0
        %2486 = vmatpush2.msra.mxu0 0.0
        %2487 = vmatprep.subr.mxu0 0.0
        %2488 = vmatpush2.msra.mxu0 0.0
        %2489 = vmatprep.subr.mxu0 0.0
        %2490 = vmatpush2.msra.mxu0 0.0
        %2491 = vmatprep.subr.mxu0 0.0
        %2492 = vmatpush2.msra.mxu0 0.0
        %2493 = vmatprep.subr.mxu0 0.0
        %2494 = vmatpush2.msra.mxu0 0.0
        %2495 = vmatprep.subr.mxu0 0.0
        %2496 = vmatpush2.msra.mxu0 0.0
        %2497 = vmatprep.subr.mxu0 0.0
        %2498 = vmatpush2.msra.mxu0 0.0
        %2499 = vmatprep.subr.mxu0 0.0
        %2500 = vmatpush2.msra.mxu0 0.0
        %2501 = vmatprep.subr.mxu0 0.0
        %2502 = vmatpush2.msra.mxu0 0.0
        %2503 = vmatprep.subr.mxu0 0.0
        %2504 = vmatpush2.msra.mxu0 0.0
        %2505 = vmatprep.subr.mxu0 0.0
        %2506 = vmatpush2.msra.mxu0 0.0
        %2507 = vmatprep.subr.mxu0 0.0
        %2508 = vmatpush2.msra.mxu0 0.0
        %2509 = vmatprep.subr.mxu0 0.0
        %2510 = vmatpush2.msra.mxu0 0.0
        %2511 = vmatprep.subr.mxu0 0.0
        %2512 = vmatpush2.msra.mxu0 0.0
        %2513 = vmatprep.mubr.f32.mxu0 0.0
        %2514 = vmatmul.mubr.f32.gmra.mxu0 %v2408
        %v2515 = vpop.f32.mrf.mxu0
        %v2516 = vadd.f32 %v2447, %v2515
        %v2517 = vpop.f32.mrf.mxu0
        %2518 = vmatprep.mubr.f32.mxu0 0.0
        %2519 = vmatmul.mubr.f32.gmra.mxu0 %v2409
        %v2520 = vpop.f32.mrf.mxu0
        %v2521 = vadd.f32 %v2447, %v2520
        %v2522 = vpop.f32.mrf.mxu0
        %2523 = vmatprep.mubr.f32.mxu0 0.0
        %2524 = vmatmul.mubr.f32.gmra.mxu0 %v2410
        %v2525 = vpop.f32.mrf.mxu0
        %v2526 = vadd.f32 %v2447, %v2525
        %v2527 = vpop.f32.mrf.mxu0
        %2528 = vmatprep.mubr.f32.mxu0 0.0
        %2529 = vmatmul.mubr.f32.gmra.mxu0 %v2411
        %v2530 = vpop.f32.mrf.mxu0
        %v2531 = vadd.f32 %v2447, %v2530
        %v2532 = vpop.f32.mrf.mxu0
        %2533 = vmatprep.mubr.f32.mxu0 0.0
        %2534 = vmatmul.mubr.f32.gmra.mxu0 %v2412
        %v2535 = vpop.f32.mrf.mxu0
        %v2536 = vadd.f32 %v2447, %v2535
        %v2537 = vpop.f32.mrf.mxu0
        %2538 = vmatprep.mubr.f32.mxu0 0.0
        %2539 = vmatmul.mubr.f32.gmra.mxu0 %v2413
        %v2540 = vpop.f32.mrf.mxu0
        %v2541 = vadd.f32 %v2447, %v2540
        %v2542 = vpop.f32.mrf.mxu0
        %2543 = vmatprep.mubr.f32.mxu0 0.0
        %2544 = vmatmul.mubr.f32.gmra.mxu0 %v2414
        %v2545 = vpop.f32.mrf.mxu0
        %v2546 = vadd.f32 %v2447, %v2545
        %v2547 = vpop.f32.mrf.mxu0
        %2548 = vmatprep.mubr.f32.mxu0 0.0
        %2549 = vmatmul.mubr.f32.gmra.mxu0 %v2415
        %v2550 = vpop.f32.mrf.mxu0
        %v2551 = vadd.f32 %v2447, %v2550
        %v2552 = vpop.f32.mrf.mxu0
        %2553 = vmatprep.mubr.f32.mxu0 0.0
        %2554 = vmatmul.mubr.f32.gmra.mxu0 %v2416
        %v2555 = vpop.f32.mrf.mxu0
        %v2556 = vadd.f32 %v2447, %v2555
        %v2557 = vpop.f32.mrf.mxu0
        %2558 = vmatprep.mubr.f32.mxu0 0.0
        %2559 = vmatmul.mubr.f32.gmra.mxu0 %v2417
        %v2560 = vpop.f32.mrf.mxu0
        %v2561 = vadd.f32 %v2447, %v2560
        %v2562 = vpop.f32.mrf.mxu0
        %2563 = vmatprep.mubr.f32.mxu0 0.0
        %2564 = vmatmul.mubr.f32.gmra.mxu0 %v2418
        %v2565 = vpop.f32.mrf.mxu0
        %v2566 = vadd.f32 %v2447, %v2565
        %v2567 = vpop.f32.mrf.mxu0
        %2568 = vmatprep.mubr.f32.mxu0 0.0
        %2569 = vmatmul.mubr.f32.gmra.mxu0 %v2419
        %v2570 = vpop.f32.mrf.mxu0
        %v2571 = vadd.f32 %v2447, %v2570
        %v2572 = vpop.f32.mrf.mxu0
        %2573 = vmatprep.mubr.f32.mxu0 0.0
        %2574 = vmatmul.mubr.f32.gmra.mxu0 %v2420
        %v2575 = vpop.f32.mrf.mxu0
        %v2576 = vadd.f32 %v2447, %v2575
        %v2577 = vpop.f32.mrf.mxu0
        %2578 = vmatprep.mubr.f32.mxu0 0.0
        %2579 = vmatmul.mubr.f32.gmra.mxu0 %v2421
        %v2580 = vpop.f32.mrf.mxu0
        %v2581 = vadd.f32 %v2447, %v2580
        %v2582 = vpop.f32.mrf.mxu0
        %2583 = vmatprep.mubr.f32.mxu0 0.0
        %2584 = vmatmul.mubr.f32.gmra.mxu0 %v2422
        %v2585 = vpop.f32.mrf.mxu0
        %v2586 = vadd.f32 %v2447, %v2585
        %v2587 = vpop.f32.mrf.mxu0
        %2588 = vmatprep.mubr.f32.mxu0 0.0
        %2589 = vmatmul.mubr.f32.gmra.mxu0 %v2423
        %v2590 = vpop.f32.mrf.mxu0
        %v2591 = vadd.f32 %v2447, %v2590
        %v2592 = vpop.f32.mrf.mxu0
        %2593 = vdwg.mxu0
        %v2594 = vmul.f32 %v2516, 0.01
        %v2595 = vmul.f32 %v2521, 0.01
        %v2596 = vmul.f32 %v2526, 0.01
        %v2597 = vmul.f32 %v2531, 0.01
        %v2598 = vmul.f32 %v2536, 0.01
        %v2599 = vmul.f32 %v2541, 0.01
        %v2600 = vmul.f32 %v2546, 0.01
        %v2601 = vmul.f32 %v2551, 0.01
        %v2602 = vmul.f32 %v2556, 0.01
        %v2603 = vmul.f32 %v2561, 0.01
        %v2604 = vmul.f32 %v2566, 0.01
        %v2605 = vmul.f32 %v2571, 0.01
        %v2606 = vmul.f32 %v2576, 0.01
        %v2607 = vmul.f32 %v2581, 0.01
        %v2608 = vmul.f32 %v2586, 0.01
        %v2609 = vmul.f32 %v2591, 0.01
        %v2610 = vmax.f32 %v2516, %v2594
        %v2611 = vmax.f32 %v2521, %v2595
        %v2612 = vmax.f32 %v2526, %v2596
        %v2613 = vmax.f32 %v2531, %v2597
        %v2614 = vmax.f32 %v2536, %v2598
        %v2615 = vmax.f32 %v2541, %v2599
        %v2616 = vmax.f32 %v2546, %v2600
        %v2617 = vmax.f32 %v2551, %v2601
        %v2618 = vmax.f32 %v2556, %v2602
        %v2619 = vmax.f32 %v2561, %v2603
        %v2620 = vmax.f32 %v2566, %v2604
        %v2621 = vmax.f32 %v2571, %v2605
        %v2622 = vmax.f32 %v2576, %v2606
        %v2623 = vmax.f32 %v2581, %v2607
        %v2624 = vmax.f32 %v2586, %v2608
        %v2625 = vmax.f32 %v2591, %v2609
        %s2626 = scalar_lea.vmem [#allocation5], 1536
        %v2627 = vld [vmem:[%s2626] sm:$0xff]
        %v2628 = vld [vmem:[%s2626 + $0x8] sm:$0xff]
        %v2629 = vld [vmem:[%s2626 + $0x10] sm:$0xff]
        %v2630 = vld [vmem:[%s2626 + $0x18] sm:$0xff]
        %v2631 = vld [vmem:[%s2626 + $0x20] sm:$0xff]
        %v2632 = vld [vmem:[%s2626 + $0x28] sm:$0xff]
        %v2633 = vld [vmem:[%s2626 + $0x30] sm:$0xff]
        %v2634 = vld [vmem:[%s2626 + $0x38] sm:$0xff]
        %v2635 = vld [vmem:[%s2626 + $0x40] sm:$0xff]
        %v2636 = vld [vmem:[%s2626 + $0x48] sm:$0xff]
        %v2637 = vld [vmem:[%s2626 + $0x50] sm:$0xff]
        %v2638 = vld [vmem:[%s2626 + $0x58] sm:$0xff]
        %v2639 = vld [vmem:[%s2626 + $0x60] sm:$0xff]
        %v2640 = vld [vmem:[%s2626 + $0x68] sm:$0xff]
        %v2641 = vld [vmem:[%s2626 + $0x70] sm:$0xff]
        %v2642 = vld [vmem:[%s2626 + $0x78] sm:$0xff]
        %s2643 = scalar_lea.vmem [#allocation7], 12
        %v2644 = vld [vmem:[%s2643] sm:$0x1]
        %v2646 = vlaneseq
        %v2647 = vshrl.u32 %v2646, 7
        %v2648 = vsub.s32 0, %v2647
        %v2649 = vrot.slane %v2644, %v2648
        %2651 = vmatprep.subr.mxu0 0.0
        %2652 = vmatpush1.msra.mxu0 %v2642
        %2653 = vmatprep.subr.mxu0 0.0
        %2654 = vmatpush1.msra.mxu0 %v2641
        %2655 = vmatprep.subr.mxu0 0.0
        %2656 = vmatpush1.msra.mxu0 %v2640
        %2657 = vmatprep.subr.mxu0 0.0
        %2658 = vmatpush1.msra.mxu0 %v2639
        %2659 = vmatprep.subr.mxu0 0.0
        %2660 = vmatpush1.msra.mxu0 %v2638
        %2661 = vmatprep.subr.mxu0 0.0
        %2662 = vmatpush1.msra.mxu0 %v2637
        %2663 = vmatprep.subr.mxu0 0.0
        %2664 = vmatpush1.msra.mxu0 %v2636
        %2665 = vmatprep.subr.mxu0 0.0
        %2666 = vmatpush1.msra.mxu0 %v2635
        %2667 = vmatprep.subr.mxu0 0.0
        %2668 = vmatpush1.msra.mxu0 %v2634
        %2669 = vmatprep.subr.mxu0 0.0
        %2670 = vmatpush1.msra.mxu0 %v2633
        %2671 = vmatprep.subr.mxu0 0.0
        %2672 = vmatpush1.msra.mxu0 %v2632
        %2673 = vmatprep.subr.mxu0 0.0
        %2674 = vmatpush1.msra.mxu0 %v2631
        %2675 = vmatprep.subr.mxu0 0.0
        %2676 = vmatpush1.msra.mxu0 %v2630
        %2677 = vmatprep.subr.mxu0 0.0
        %2678 = vmatpush1.msra.mxu0 %v2629
        %2679 = vmatprep.subr.mxu0 0.0
        %2680 = vmatpush1.msra.mxu0 %v2628
        %2681 = vmatprep.subr.mxu0 0.0
        %2682 = vmatpush1.msra.mxu0 %v2627
        %2683 = vmatprep.subr.mxu0 0.0
        %2684 = vmatpush2.msra.mxu0 0.0
        %2685 = vmatprep.subr.mxu0 0.0
        %2686 = vmatpush2.msra.mxu0 0.0
        %2687 = vmatprep.subr.mxu0 0.0
        %2688 = vmatpush2.msra.mxu0 0.0
        %2689 = vmatprep.subr.mxu0 0.0
        %2690 = vmatpush2.msra.mxu0 0.0
        %2691 = vmatprep.subr.mxu0 0.0
        %2692 = vmatpush2.msra.mxu0 0.0
        %2693 = vmatprep.subr.mxu0 0.0
        %2694 = vmatpush2.msra.mxu0 0.0
        %2695 = vmatprep.subr.mxu0 0.0
        %2696 = vmatpush2.msra.mxu0 0.0
        %2697 = vmatprep.subr.mxu0 0.0
        %2698 = vmatpush2.msra.mxu0 0.0
        %2699 = vmatprep.subr.mxu0 0.0
        %2700 = vmatpush2.msra.mxu0 0.0
        %2701 = vmatprep.subr.mxu0 0.0
        %2702 = vmatpush2.msra.mxu0 0.0
        %2703 = vmatprep.subr.mxu0 0.0
        %2704 = vmatpush2.msra.mxu0 0.0
        %2705 = vmatprep.subr.mxu0 0.0
        %2706 = vmatpush2.msra.mxu0 0.0
        %2707 = vmatprep.subr.mxu0 0.0
        %2708 = vmatpush2.msra.mxu0 0.0
        %2709 = vmatprep.subr.mxu0 0.0
        %2710 = vmatpush2.msra.mxu0 0.0
        %2711 = vmatprep.subr.mxu0 0.0
        %2712 = vmatpush2.msra.mxu0 0.0
        %2713 = vmatprep.subr.mxu0 0.0
        %2714 = vmatpush2.msra.mxu0 0.0
        %2715 = vmatprep.mubr.f32.mxu0 0.0
        %2716 = vmatmul.mubr.f32.gmra.mxu0 %v2610
        %v2717 = vpop.f32.mrf.mxu0
        %v2718 = vadd.f32 %v2649, %v2717
        %v2719 = vpop.f32.mrf.mxu0
        %2720 = vmatprep.mubr.f32.mxu0 0.0
        %2721 = vmatmul.mubr.f32.gmra.mxu0 %v2611
        %v2722 = vpop.f32.mrf.mxu0
        %v2723 = vadd.f32 %v2649, %v2722
        %v2724 = vpop.f32.mrf.mxu0
        %2725 = vmatprep.mubr.f32.mxu0 0.0
        %2726 = vmatmul.mubr.f32.gmra.mxu0 %v2612
        %v2727 = vpop.f32.mrf.mxu0
        %v2728 = vadd.f32 %v2649, %v2727
        %v2729 = vpop.f32.mrf.mxu0
        %2730 = vmatprep.mubr.f32.mxu0 0.0
        %2731 = vmatmul.mubr.f32.gmra.mxu0 %v2613
        %v2732 = vpop.f32.mrf.mxu0
        %v2733 = vadd.f32 %v2649, %v2732
        %v2734 = vpop.f32.mrf.mxu0
        %2735 = vmatprep.mubr.f32.mxu0 0.0
        %2736 = vmatmul.mubr.f32.gmra.mxu0 %v2614
        %v2737 = vpop.f32.mrf.mxu0
        %v2738 = vadd.f32 %v2649, %v2737
        %v2739 = vpop.f32.mrf.mxu0
        %2740 = vmatprep.mubr.f32.mxu0 0.0
        %2741 = vmatmul.mubr.f32.gmra.mxu0 %v2615
        %v2742 = vpop.f32.mrf.mxu0
        %v2743 = vadd.f32 %v2649, %v2742
        %v2744 = vpop.f32.mrf.mxu0
        %2745 = vmatprep.mubr.f32.mxu0 0.0
        %2746 = vmatmul.mubr.f32.gmra.mxu0 %v2616
        %v2747 = vpop.f32.mrf.mxu0
        %v2748 = vadd.f32 %v2649, %v2747
        %v2749 = vpop.f32.mrf.mxu0
        %2750 = vmatprep.mubr.f32.mxu0 0.0
        %2751 = vmatmul.mubr.f32.gmra.mxu0 %v2617
        %v2752 = vpop.f32.mrf.mxu0
        %v2753 = vadd.f32 %v2649, %v2752
        %v2754 = vpop.f32.mrf.mxu0
        %2755 = vmatprep.mubr.f32.mxu0 0.0
        %2756 = vmatmul.mubr.f32.gmra.mxu0 %v2618
        %v2757 = vpop.f32.mrf.mxu0
        %v2758 = vadd.f32 %v2649, %v2757
        %v2759 = vpop.f32.mrf.mxu0
        %2760 = vmatprep.mubr.f32.mxu0 0.0
        %2761 = vmatmul.mubr.f32.gmra.mxu0 %v2619
        %v2762 = vpop.f32.mrf.mxu0
        %v2763 = vadd.f32 %v2649, %v2762
        %v2764 = vpop.f32.mrf.mxu0
        %2765 = vmatprep.mubr.f32.mxu0 0.0
        %2766 = vmatmul.mubr.f32.gmra.mxu0 %v2620
        %v2767 = vpop.f32.mrf.mxu0
        %v2768 = vadd.f32 %v2649, %v2767
        %v2769 = vpop.f32.mrf.mxu0
        %2770 = vmatprep.mubr.f32.mxu0 0.0
        %2771 = vmatmul.mubr.f32.gmra.mxu0 %v2621
        %v2772 = vpop.f32.mrf.mxu0
        %v2773 = vadd.f32 %v2649, %v2772
        %v2774 = vpop.f32.mrf.mxu0
        %2775 = vmatprep.mubr.f32.mxu0 0.0
        %2776 = vmatmul.mubr.f32.gmra.mxu0 %v2622
        %v2777 = vpop.f32.mrf.mxu0
        %v2778 = vadd.f32 %v2649, %v2777
        %v2779 = vpop.f32.mrf.mxu0
        %2780 = vmatprep.mubr.f32.mxu0 0.0
        %2781 = vmatmul.mubr.f32.gmra.mxu0 %v2623
        %v2782 = vpop.f32.mrf.mxu0
        %v2783 = vadd.f32 %v2649, %v2782
        %v2784 = vpop.f32.mrf.mxu0
        %2785 = vmatprep.mubr.f32.mxu0 0.0
        %2786 = vmatmul.mubr.f32.gmra.mxu0 %v2624
        %v2787 = vpop.f32.mrf.mxu0
        %v2788 = vadd.f32 %v2649, %v2787
        %v2789 = vpop.f32.mrf.mxu0
        %2790 = vmatprep.mubr.f32.mxu0 0.0
        %2791 = vmatmul.mubr.f32.gmra.mxu0 %v2625
        %v2792 = vpop.f32.mrf.mxu0
        %v2793 = vadd.f32 %v2649, %v2792
        %v2794 = vpop.f32.mrf.mxu0
        %2795 = vdwg.mxu0
        %2796 = vst [vmem:[%s217] sm:$0xff] %v2718
        %2797 = vst [vmem:[%s217 + $0x8] sm:$0xff] %v2723
        %2798 = vst [vmem:[%s217 + $0x10] sm:$0xff] %v2728
        %2799 = vst [vmem:[%s217 + $0x18] sm:$0xff] %v2733
        %2800 = vst [vmem:[%s217 + $0x20] sm:$0xff] %v2738
        %2801 = vst [vmem:[%s217 + $0x28] sm:$0xff] %v2743
        %2802 = vst [vmem:[%s217 + $0x30] sm:$0xff] %v2748
        %2803 = vst [vmem:[%s217 + $0x38] sm:$0xff] %v2753
        %2804 = vst [vmem:[%s217 + $0x40] sm:$0xff] %v2758
        %2805 = vst [vmem:[%s217 + $0x48] sm:$0xff] %v2763
        %2806 = vst [vmem:[%s217 + $0x50] sm:$0xff] %v2768
        %2807 = vst [vmem:[%s217 + $0x58] sm:$0xff] %v2773
        %2808 = vst [vmem:[%s217 + $0x60] sm:$0xff] %v2778
        %2809 = vst [vmem:[%s217 + $0x68] sm:$0xff] %v2783
        %2810 = vst [vmem:[%s217 + $0x70] sm:$0xff] %v2788
        %2811 = vst [vmem:[%s217 + $0x78] sm:$0xff] %v2793
        %s2812 = sand.u32 %s97, 1
        %s2813 = scalar_lea.sflag [#allocation4], %s2812
        %s2814 = sand.u32 %s97, 1
        %s2815 = smul.addr %s2814, 128
        %s2816 = scalar_lea.vmem [#allocation8], %s2815
        // Predicated region
        $region45: #{tpu_custom_call.1} parent=31 // pred_check
          %p2817 = pneg %p107
        $region46: #{tpu_custom_call.1} parent=31 // pred_check_branch
          %2819 = sbr.rel (%p2817) target = $region48
        $region47: #{tpu_custom_call.1} parent=31 // pred_region
          %s2820 = smul.u32 16, %s21
          %s2822 = ssub.s32 2048, 2048
          %2823 = vsyncadd %s2813, %s2822
          %s2824 = smul.addr %s2820, 128
          %s2825 = scalar_lea.hbm %s3, %s2824
          %s2826 = sshll.u32 %s2816, 4
          %s2827 = int_to_ptr.vmem [resolvable:$true] %s2826
          %2832 = dma.vmem_to_hbm [thread:$0]  %s2827, 2048, %s2825, %s2813, 128, 128, 8
        $region48: #{tpu_custom_call.1} parent=31 // pred_fallthru
          _
      $region32: #{tpu_custom_call.1} parent=5 // pred_fallthru
        _
      %p2833 = scmp.le.s32.totalorder 2, %s16
      // Predicated region
      $region49: #{tpu_custom_call.1} parent=5 // pred_check
        %p2834 = pneg %p2833
      $region50: #{tpu_custom_call.1} parent=5 // pred_check_branch
        %2836 = sbr.rel (%p2834) target = $region52
      $region51: #{tpu_custom_call.1} parent=5 // pred_region
        %s2837 = ssub.s32 %s16, 2
        // Predicated region
        $region53: #{tpu_custom_call.1} parent=51 // pred_check
          %p2838 = pneg %p113
        $region54: #{tpu_custom_call.1} parent=51 // pred_check_branch
          %2840 = sbr.rel (%p2838) target = $region56
        $region55: #{tpu_custom_call.1} parent=51 // pred_region
          %s2841 = sand.u32 %s98, 1
          %s2842 = scalar_lea.sflag [#allocation4], %s2841
          %s2843 = sand.u32 %s98, 1
          %s2844 = smul.addr %s2843, 128
          %s2845 = scalar_lea.vmem [#allocation8], %s2844
          %2846 = dma.done %s2842, 2048
        $region56: #{tpu_custom_call.1} parent=51 // pred_fallthru
          _
      $region52: #{tpu_custom_call.1} parent=5 // pred_fallthru
        _
    $region6: #{tpu_custom_call.1} parent=1 // loop_footer
      %s20 = sadd.s32 1, %s16
    $region7: #{tpu_custom_call.1} parent=1 // loop_footer_branch
      %15 = sbr.rel target = $region3
    $region8: #{tpu_custom_call.1} parent=1 // loop_exit
      _
    %2847 = vsyncpa [#allocation3], 1
    %s2848 = scalar_lea.sflag [#allocation3], 1
    %2849 = vsyncpa %s2848, 1
    %2850 = vsyncpa [#allocation6], 1
    %2851 = vsyncpa [#allocation4], 1
    %s2852 = scalar_lea.sflag [#allocation4], 1
    %2853 = vsyncpa %s2852, 1

</llo_original>
